<compile_context>
chip_gen: v7x
topology: tpu7x:2x2x1
jax: 0.10.0
libtpu: 0.0.40
codegen_flags: <defaults>
</compile_context>

<pallas_src>
import functools

import jax
import jax.numpy as jnp
import numpy as np
from jax import lax
from jax.experimental import pallas as pl
from jax.experimental.pallas import tpu as pltpu

EPS = 1e-5
LANE = 128

_CPARAMS = pltpu.CompilerParams(
    dimension_semantics=("parallel",),          # shard grid across TCs (v7x)
    vmem_limit_bytes=48 * 1024 * 1024,          # headroom under v7x's 64 MiB
)


def _round_up(n, m):
    return ((n + m - 1) // m) * m


def _pick_row_tile(rows, cap):
    """Largest candidate row tile (multiple of 8) <= cap that divides rows."""
    for t in (1024, 512, 256, 128, 64, 32, 16, 8):
        if t <= cap and rows % t == 0:
            return t
    return rows  # fall back to a single whole-array block


def _store_partial_stats(st_ref, y):
    """Write per-channel [sum, sum-of-squares] of a (rows, C) f32 block."""
    c = y.shape[-1]
    st_ref[:, 0:1, :] = jnp.sum(y, axis=0, keepdims=True).reshape(1, 1, c)
    st_ref[:, 1:2, :] = jnp.sum(y * y, axis=0, keepdims=True).reshape(1, 1, c)


# ------------------------------ kernels -------------------------------------

def _conv1_kernel(x_ref, w_ref, y_ref, st_ref):
    """Row tile: 1x1 conv == bf16 matmul over channels + BN1 partial stats."""
    y = jnp.dot(x_ref[...].astype(jnp.bfloat16), w_ref[...],
                preferred_element_type=jnp.float32)
    y_ref[...] = y
    _store_partial_stats(st_ref, y)


def _bn_conv1_kernel(x_ref, scale_ref, shift_ref, w_ref, y_ref, st_ref):
    """Row tile: fused BN(scale,shift)+ReLU, then 1x1 conv + partial stats."""
    a = jnp.maximum(x_ref[...] * scale_ref[...] + shift_ref[...], 0.0)
    y = jnp.dot(a.astype(jnp.bfloat16), w_ref[...],
                preferred_element_type=jnp.float32)
    y_ref[...] = y
    _store_partial_stats(st_ref, y)


def _bn_conv3x3_kernel(x_ref, scale_ref, shift_ref, w_ref, y_ref, st_ref,
                       pad_ref):
    """Per image: BN1+ReLU, 3x3 conv (pad=1) as 3 big-K matmuls, BN2 stats."""
    _, H, W, C = x_ref.shape
    a = jnp.maximum(x_ref[...].reshape(H, W, C) * scale_ref[...]
                    + shift_ref[...], 0.0)

    # Zero only the 1-pixel halo (every step -> no cross-step scratch deps,
    # safe when the batch axis is split across cores), then store the interior.
    pad_ref[0:1, :, :] = jnp.zeros((1, W + 2, C), jnp.float32)
    pad_ref[H + 1:H + 2, :, :] = jnp.zeros((1, W + 2, C), jnp.float32)
    pad_ref[:, 0:1, :] = jnp.zeros((H + 2, 1, C), jnp.float32)
    pad_ref[:, W + 1:W + 2, :] = jnp.zeros((H + 2, 1, C), jnp.float32)
    pad_ref[1:H + 1, 1:W + 1, :] = a

    acc = jnp.zeros((H * W, C), jnp.float32)
    for dh in range(3):
        # Concatenate the 3 dw taps along channels -> one K=3C matmul per dh.
        taps = jnp.concatenate(
            [pad_ref[dh:dh + H, dw:dw + W, :] for dw in range(3)], axis=-1)
        acc = acc + jnp.dot(
            taps.reshape(H * W, 3 * C).astype(jnp.bfloat16), w_ref[dh],
            preferred_element_type=jnp.float32)

    y_ref[...] = acc.reshape(1, H, W, C)
    _store_partial_stats(st_ref, acc)


def _bn_residual_kernel(y_ref, x_ref, scale_ref, shift_ref, o_ref):
    """Row tile: BN3 (folded scale/shift) + residual add + final ReLU."""
    y = y_ref[...] * scale_ref[...] + shift_ref[...]
    o_ref[...] = jnp.maximum(y + x_ref[...], 0.0)


# ------------------------------ wrapper -------------------------------------

def _finalize_bn(partial_stats, count, gamma, beta):
    """Global BN stats from per-tile [sum, sumsq]; fold into scale/shift."""
    s = jnp.sum(partial_stats[:, 0, :], axis=0)
    ss = jnp.sum(partial_stats[:, 1, :], axis=0)
    mu = s / count
    var = jnp.maximum(ss / count - mu * mu, 0.0)   # clamp: E[y^2]-E[y]^2 >= 0
    scale = gamma * lax.rsqrt(var + EPS)
    shift = beta - mu * scale
    return scale.reshape(1, -1), shift.reshape(1, -1)


def bottleneck_pallas(x_nchw, params, *, row_tile=1024):
    """Bottleneck forward. x_nchw: (N, C, H, W) f32, C == planes*4.

    params = (w1, g1, b1, w2, g2, b2, w3, g3, b3) with
      w1 (Cin, width), w2 (3, 3, width, width) [HWIO], w3 (width, Cout),
      g*/b* 1-D per-channel BatchNorm affine parameters.
    """
    w1, g1, b1, w2, g2, b2, w3, g3, b3 = params
    N, Cin, H, W = x_nchw.shape
    width = w1.shape[1]
    Cout = w3.shape[1]
    assert Cin == Cout, "downsample=None requires inplanes == planes*expansion"

    # Pad channel axes to the 128-lane width (lane-dense matmuls / stores).
    Cin_p = _round_up(Cin, LANE)
    Cw = _round_up(width, LANE)
    Cout_p = _round_up(Cout, LANE)

    x = jnp.transpose(x_nchw, (0, 2, 3, 1)).astype(jnp.float32)       # NHWC
    x = jnp.pad(x, ((0, 0), (0, 0), (0, 0), (0, Cin_p - Cin)))
    rows = N * H * W
    x2 = x.reshape(rows, Cin_p)

    # Weights: zero-pad, pre-cast to bf16 for the MXU (accumulate in f32).
    w1p = jnp.pad(w1, ((0, Cin_p - Cin), (0, Cw - width))).astype(jnp.bfloat16)
    w3p = jnp.pad(w3, ((0, Cw - width), (0, Cout_p - Cout))).astype(jnp.bfloat16)
    w2p = jnp.pad(w2, ((0, 0), (0, 0), (0, Cw - width), (0, Cw - width)))
    # (3, 3, Ci, Co) -> (3, 3*Ci, Co): stack the 3 dw taps along K per dh.
    w2col = jnp.concatenate([w2p[:, dw] for dw in range(3)],
                            axis=1).astype(jnp.bfloat16)

    g1p = jnp.pad(jnp.ravel(g1), (0, Cw - width))
    b1p = jnp.pad(jnp.ravel(b1), (0, Cw - width))
    g2p = jnp.pad(jnp.ravel(g2), (0, Cw - width))
    b2p = jnp.pad(jnp.ravel(b2), (0, Cw - width))
    g3p = jnp.pad(jnp.ravel(g3), (0, Cout_p - Cout))
    b3p = jnp.pad(jnp.ravel(b3), (0, Cout_p - Cout))

    tr = _pick_row_tile(rows, row_tile)
    n_t = rows // tr

    # ---- stage 1: conv1 (1x1) + BN1 partial stats (row-tiled grid) --------
    y1, st1 = pl.pallas_call(
        _conv1_kernel,
        grid=(n_t,),
        in_specs=[
            pl.BlockSpec((tr, Cin_p), lambda i: (i, 0)),
            pl.BlockSpec((Cin_p, Cw), lambda i: (0, 0)),
        ],
        out_specs=(
            pl.BlockSpec((tr, Cw), lambda i: (i, 0)),
            pl.BlockSpec((1, 2, Cw), lambda i: (i, 0, 0)),
        ),
        out_shape=(
            jax.ShapeDtypeStruct((rows, Cw), jnp.float32),
            jax.ShapeDtypeStruct((n_t, 2, Cw), jnp.float32),
        ),
        compiler_params=_CPARAMS,
    )(x2, w1p)
    scale1, shift1 = _finalize_bn(st1, rows, g1p, b1p)

    # ---- stage 2: BN1+ReLU -> conv2 (3x3, pad=1) + BN2 stats (per image) ---
    y2, st2 = pl.pallas_call(
        _bn_conv3x3_kernel,
        grid=(N,),
        in_specs=[
            pl.BlockSpec((1, H, W, Cw), lambda b: (b, 0, 0, 0)),
            pl.BlockSpec((1, Cw), lambda b: (0, 0)),
            pl.BlockSpec((1, Cw), lambda b: (0, 0)),
            pl.BlockSpec((3, 3 * Cw, Cw), lambda b: (0, 0, 0)),
        ],
        out_specs=(
            pl.BlockSpec((1, H, W, Cw), lambda b: (b, 0, 0, 0)),
            pl.BlockSpec((1, 2, Cw), lambda b: (b, 0, 0)),
        ),
        out_shape=(
            jax.ShapeDtypeStruct((N, H, W, Cw), jnp.float32),
            jax.ShapeDtypeStruct((N, 2, Cw), jnp.float32),
        ),
        scratch_shapes=[pltpu.VMEM((H + 2, W + 2, Cw), jnp.float32)],
        compiler_params=_CPARAMS,
    )(y1.reshape(N, H, W, Cw), scale1, shift1, w2col)
    scale2, shift2 = _finalize_bn(st2, rows, g2p, b2p)

    # ---- stage 3: BN2+ReLU -> conv3 (1x1) + BN3 partial stats --------------
    y3, st3 = pl.pallas_call(
        _bn_conv1_kernel,
        grid=(n_t,),
        in_specs=[
            pl.BlockSpec((tr, Cw), lambda i: (i, 0)),
            pl.BlockSpec((1, Cw), lambda i: (0, 0)),
            pl.BlockSpec((1, Cw), lambda i: (0, 0)),
            pl.BlockSpec((Cw, Cout_p), lambda i: (0, 0)),
        ],
        out_specs=(
            pl.BlockSpec((tr, Cout_p), lambda i: (i, 0)),
            pl.BlockSpec((1, 2, Cout_p), lambda i: (i, 0, 0)),
        ),
        out_shape=(
            jax.ShapeDtypeStruct((rows, Cout_p), jnp.float32),
            jax.ShapeDtypeStruct((n_t, 2, Cout_p), jnp.float32),
        ),
        compiler_params=_CPARAMS,
    )(y2.reshape(rows, Cw), scale2, shift2, w3p)
    scale3, shift3 = _finalize_bn(st3, rows, g3p, b3p)

    # ---- stage 4: BN3 + residual add + final ReLU --------------------------
    out2 = pl.pallas_call(
        _bn_residual_kernel,
        grid=(n_t,),
        in_specs=[
            pl.BlockSpec((tr, Cout_p), lambda i: (i, 0)),
            pl.BlockSpec((tr, Cout_p), lambda i: (i, 0)),   # identity (Cin_p==Cout_p)
            pl.BlockSpec((1, Cout_p), lambda i: (0, 0)),
            pl.BlockSpec((1, Cout_p), lambda i: (0, 0)),
        ],
        out_specs=pl.BlockSpec((tr, Cout_p), lambda i: (i, 0)),
        out_shape=jax.ShapeDtypeStruct((rows, Cout_p), jnp.float32),
        compiler_params=_CPARAMS,
    )(y3, x2, scale3, shift3)

    out = out2.reshape(N, H, W, Cout_p)[..., :Cout]
    return jnp.transpose(out, (0, 3, 1, 2))                 # NHWC -> NCHW


# --------------------------- plain-JAX reference -----------------------------
def bottleneck_ref(x_nchw, params):
    """Reference at the same precision (bf16 conv operands, f32 accumulation)."""
    w1, g1, b1, w2, g2, b2, w3, g3, b3 = params
    x = jnp.transpose(x_nchw, (0, 2, 3, 1)).astype(jnp.float32)
    dn = ("NHWC", "HWIO", "NHWC")

    def conv(a, w, pad):
        return lax.conv_general_dilated(
            a.astype(jnp.bfloat16), w.astype(jnp.bfloat16), (1, 1), pad,
            dimension_numbers=dn, preferred_element_type=jnp.float32)

    def bn(y, g, bta):
        mu = jnp.mean(y, axis=(0, 1, 2))
        var = jnp.maximum(jnp.mean(y * y, axis=(0, 1, 2)) - mu * mu, 0.0)
        return (y - mu) * lax.rsqrt(var + EPS) * g + bta

    y = jnp.maximum(bn(conv(x, w1[None, None], "VALID"), g1, b1), 0.0)
    y = jnp.maximum(bn(conv(y, w2, ((1, 1), (1, 1))), g2, b2), 0.0)
    y = bn(conv(y, w3[None, None], "VALID"), g3, b3)
    return jnp.transpose(jnp.maximum(y + x, 0.0), (0, 3, 1, 2))


if __name__ == "__main__":
    # Bottleneck(inplanes=16, planes=4): width=4, planes*expansion=16, so the
    # residual add works with downsample=None (base_width=64, groups=1).
    N, planes, H, W = 2, 4, 16, 16
    inplanes = planes * 4
    width = planes
    cout = planes * 4

    key = jax.random.PRNGKey(0)
    kx, k1, k2, k3 = jax.random.split(key, 4)

    x = jax.random.normal(kx, (N, inplanes, H, W), jnp.float32)

    # Conv weights stored pre-transposed for NHWC matmuls:
    #   w1 (Cin, width)          <-> torch conv1.weight (width, Cin, 1, 1)
    #   w2 (3, 3, width, width)  [HWIO] <-> torch conv2.weight (O, I, 3, 3)
    #   w3 (width, Cout)         <-> torch conv3.weight (Cout, width, 1, 1)
    w1 = 0.1 * jax.random.normal(k1, (inplanes, width), jnp.float32)
    w2 = 0.1 * jax.random.normal(k2, (3, 3, width, width), jnp.float32)
    w3 = 0.1 * jax.random.normal(k3, (width, cout), jnp.float32)

    # BatchNorm affine params at PyTorch defaults (weight=1, bias=0).
    g1 = jnp.ones((width,), jnp.float32); b1 = jnp.zeros((width,), jnp.float32)
    g2 = jnp.ones((width,), jnp.float32); b2 = jnp.zeros((width,), jnp.float32)
    g3 = jnp.ones((cout,), jnp.float32);  b3 = jnp.zeros((cout,), jnp.float32)
    params = (w1, g1, b1, w2, g2, b2, w3, g3, b3)

    # row_tile=128 forces a multi-tile grid (4 row tiles) to exercise the
    # cross-tile BatchNorm statistics path even at these small shapes.
    fwd = jax.jit(functools.partial(bottleneck_pallas, row_tile=128))
    out = jax.block_until_ready(fwd(x, params))
    ref = jax.block_until_ready(bottleneck_ref(x, params))

    assert out.shape == (N, inplanes, H, W)
    # Tolerance reflects deliberate bf16 MXU operands (f32 accumulation).
    np.testing.assert_allclose(np.asarray(out), np.asarray(ref),
                               rtol=1e-2, atol=1e-2)
    print("KERNEL_OK")
</pallas_src>

<mosaic_0001>
module attributes {stable_mosaic.version = 11 : i64} {
  func.func @_conv1_kernel(%arg0: i32, %arg1: memref<128x128xf32, #tpu.memory_space<vmem>>, %arg2: memref<128x128xbf16, #tpu.memory_space<vmem>>, %arg3: memref<128x128xf32, #tpu.memory_space<vmem>>, %arg4: memref<1x2x128xf32, #tpu.memory_space<vmem>>) attributes {dimension_semantics = [#tpu.dimension_semantics<parallel>], iteration_bounds = array<i64: 4>, scalar_prefetch = 0 : i64, scratch_operands = 0 : i64, tpu.core_type = #tpu.core_type<tc>, window_params = [{transform_indices = @transform_0, window_bounds = array<i64: 128, 128>}, {pipeline_mode = #tpu.pipeline_mode<synchronous>, transform_indices = @transform_1, window_bounds = array<i64: 128, 128>}, {transform_indices = @transform_2, window_bounds = array<i64: 128, 128>}, {transform_indices = @transform_3, window_bounds = array<i64: 1, 2, 128>}]} {
    %c0 = arith.constant 0 : index
    %c0_0 = arith.constant 0 : index
    %0 = vector.load %arg1[%c0, %c0_0] : memref<128x128xf32, #tpu.memory_space<vmem>>, vector<128x128xf32>
    %1 = arith.truncf %0 : vector<128x128xf32> to vector<128x128xbf16>
    %c0_1 = arith.constant 0 : index
    %c0_2 = arith.constant 0 : index
    %2 = vector.load %arg2[%c0_1, %c0_2] : memref<128x128xbf16, #tpu.memory_space<vmem>>, vector<128x128xbf16>
    %cst = arith.constant dense<0.000000e+00> : vector<128x128xf32>
    %3 = tpu.matmul %1, %2, %cst {dimension_numbers = #tpu.dot_dimension_numbers<[1], [0], [0], [1], [0, 0, 1, 1], [], []>} : vector<128x128xbf16>, vector<128x128xbf16>, vector<128x128xf32> -> vector<128x128xf32>
    %c0_3 = arith.constant 0 : index
    %c0_4 = arith.constant 0 : index
    %4 = vector.load %arg3[%c0_3, %c0_4] : memref<128x128xf32, #tpu.memory_space<vmem>>, vector<128x128xf32>
    tpu.vector_store %arg3[%c0_3, %c0_4], %3 {strides = array<i32>} : memref<128x128xf32, #tpu.memory_space<vmem>>, vector<128x128xf32>,
    %cst_5 = arith.constant dense<0.000000e+00> : vector<128xf32>
    %5 = vector.multi_reduction <add>, %3, %cst_5 [0] : vector<128x128xf32> to vector<128xf32>
    %6 = vector.shape_cast %5 : vector<128xf32> to vector<1x128xf32>
    %7 = vector.shape_cast %6 : vector<1x128xf32> to vector<1x1x128xf32>
    %c0_6 = arith.constant 0 : index
    %c0_7 = arith.constant 0 : index
    %c0_8 = arith.constant 0 : index
    %8 = vector.load %arg4[%c0_6, %c0_7, %c0_8] : memref<1x2x128xf32, #tpu.memory_space<vmem>>, vector<1x1x128xf32>
    tpu.vector_store %arg4[%c0_6, %c0_7, %c0_8], %7 {strides = array<i32>} : memref<1x2x128xf32, #tpu.memory_space<vmem>>, vector<1x1x128xf32>,
    %9 = arith.mulf %3, %3 : vector<128x128xf32>
    %cst_9 = arith.constant dense<0.000000e+00> : vector<128xf32>
    %10 = vector.multi_reduction <add>, %9, %cst_9 [0] : vector<128x128xf32> to vector<128xf32>
    %11 = vector.shape_cast %10 : vector<128xf32> to vector<1x128xf32>
    %12 = vector.shape_cast %11 : vector<1x128xf32> to vector<1x1x128xf32>
    %c0_10 = arith.constant 0 : index
    %c1 = arith.constant 1 : index
    %c0_11 = arith.constant 0 : index
    %13 = vector.load %arg4[%c0_10, %c1, %c0_11] : memref<1x2x128xf32, #tpu.memory_space<vmem>>, vector<1x1x128xf32>
    tpu.vector_store %arg4[%c0_10, %c1, %c0_11], %12 {strides = array<i32>} : memref<1x2x128xf32, #tpu.memory_space<vmem>>, vector<1x1x128xf32>,
    return
  }
  func.func @transform_0(%arg0: i32) -> (i32, i32) {
    %c0_i32 = arith.constant 0 : i32
    %c0_i32_0 = arith.constant 0 : i32
    return %arg0, %c0_i32 : i32, i32
  }
  func.func @transform_1(%arg0: i32) -> (i32, i32) {
    %c0_i32 = arith.constant 0 : i32
    %c0_i32_0 = arith.constant 0 : i32
    %c0_i32_1 = arith.constant 0 : i32
    return %c0_i32, %c0_i32_0 : i32, i32
  }
  func.func @transform_2(%arg0: i32) -> (i32, i32) {
    %c0_i32 = arith.constant 0 : i32
    %c0_i32_0 = arith.constant 0 : i32
    return %arg0, %c0_i32 : i32, i32
  }
  func.func @transform_3(%arg0: i32) -> (i32, i32, i32) {
    %c0_i32 = arith.constant 0 : i32
    %c0_i32_0 = arith.constant 0 : i32
    %c0_i32_1 = arith.constant 0 : i32
    return %arg0, %c0_i32, %c0_i32_0 : i32, i32, i32
  }
}

module attributes {stable_mosaic.version = 11 : i64} {
  func.func @_bn_conv3x3_kernel(%arg0: i32, %arg1: memref<1x16x16x128xf32, #tpu.memory_space<vmem>>, %arg2: memref<1x128xf32, #tpu.memory_space<vmem>>, %arg3: memref<1x128xf32, #tpu.memory_space<vmem>>, %arg4: memref<3x384x128xbf16, #tpu.memory_space<vmem>>, %arg5: memref<1x16x16x128xf32, #tpu.memory_space<vmem>>, %arg6: memref<1x2x128xf32, #tpu.memory_space<vmem>>, %arg7: memref<18x18x128xf32, #tpu.memory_space<vmem>>) attributes {dimension_semantics = [#tpu.dimension_semantics<parallel>], iteration_bounds = array<i64: 2>, scalar_prefetch = 0 : i64, scratch_operands = 1 : i64, tpu.core_type = #tpu.core_type<tc>, window_params = [{transform_indices = @transform_0, window_bounds = array<i64: 1, 16, 16, 128>}, {pipeline_mode = #tpu.pipeline_mode<synchronous>, transform_indices = @transform_1, window_bounds = array<i64: 1, 128>}, {pipeline_mode = #tpu.pipeline_mode<synchronous>, transform_indices = @transform_2, window_bounds = array<i64: 1, 128>}, {pipeline_mode = #tpu.pipeline_mode<synchronous>, transform_indices = @transform_3, window_bounds = array<i64: 3, 384, 128>}, {transform_indices = @transform_4, window_bounds = array<i64: 1, 16, 16, 128>}, {transform_indices = @transform_5, window_bounds = array<i64: 1, 2, 128>}]} {
    %c0 = arith.constant 0 : index
    %c0_0 = arith.constant 0 : index
    %c0_1 = arith.constant 0 : index
    %c0_2 = arith.constant 0 : index
    %0 = vector.load %arg1[%c0, %c0_0, %c0_1, %c0_2] : memref<1x16x16x128xf32, #tpu.memory_space<vmem>>, vector<1x16x16x128xf32>
    %1 = vector.shape_cast %0 : vector<1x16x16x128xf32> to vector<16x16x128xf32>
    %c0_3 = arith.constant 0 : index
    %c0_4 = arith.constant 0 : index
    %2 = vector.load %arg2[%c0_3, %c0_4] : memref<1x128xf32, #tpu.memory_space<vmem>>, vector<1x128xf32>
    %3 = vector.shape_cast %2 : vector<1x128xf32> to vector<1x1x128xf32>
    %4 = vector.broadcast %3 : vector<1x1x128xf32> to vector<16x16x128xf32>
    %5 = arith.mulf %1, %4 : vector<16x16x128xf32>
    %c0_5 = arith.constant 0 : index
    %c0_6 = arith.constant 0 : index
    %6 = vector.load %arg3[%c0_5, %c0_6] : memref<1x128xf32, #tpu.memory_space<vmem>>, vector<1x128xf32>
    %7 = vector.shape_cast %6 : vector<1x128xf32> to vector<1x1x128xf32>
    %8 = vector.broadcast %7 : vector<1x1x128xf32> to vector<16x16x128xf32>
    %9 = arith.addf %5, %8 : vector<16x16x128xf32>
    %cst = arith.constant 0.000000e+00 : f32
    %10 = vector.broadcast %cst : f32 to vector<16x16x128xf32>
    %11 = arith.maximumf %9, %10 : vector<16x16x128xf32>
    %cst_7 = arith.constant 0.000000e+00 : f32
    %12 = vector.broadcast %cst_7 : f32 to vector<1x18x128xf32>
    %c0_8 = arith.constant 0 : index
    %c0_9 = arith.constant 0 : index
    %c0_10 = arith.constant 0 : index
    %13 = vector.load %arg7[%c0_8, %c0_9, %c0_10] : memref<18x18x128xf32, #tpu.memory_space<vmem>>, vector<1x18x128xf32>
    tpu.vector_store %arg7[%c0_8, %c0_9, %c0_10], %12 {strides = array<i32>} : memref<18x18x128xf32, #tpu.memory_space<vmem>>, vector<1x18x128xf32>,
    %cst_11 = arith.constant 0.000000e+00 : f32
    %14 = vector.broadcast %cst_11 : f32 to vector<1x18x128xf32>
    %c17 = arith.constant 17 : index
    %c0_12 = arith.constant 0 : index
    %c0_13 = arith.constant 0 : index
    %15 = vector.load %arg7[%c17, %c0_12, %c0_13] : memref<18x18x128xf32, #tpu.memory_space<vmem>>, vector<1x18x128xf32>
    tpu.vector_store %arg7[%c17, %c0_12, %c0_13], %14 {strides = array<i32>} : memref<18x18x128xf32, #tpu.memory_space<vmem>>, vector<1x18x128xf32>,
    %cst_14 = arith.constant 0.000000e+00 : f32
    %16 = vector.broadcast %cst_14 : f32 to vector<18x1x128xf32>
    %c0_15 = arith.constant 0 : index
    %c0_16 = arith.constant 0 : index
    %c0_17 = arith.constant 0 : index
    %17 = vector.load %arg7[%c0_15, %c0_16, %c0_17] : memref<18x18x128xf32, #tpu.memory_space<vmem>>, vector<18x1x128xf32>
    tpu.vector_store %arg7[%c0_15, %c0_16, %c0_17], %16 {strides = array<i32>} : memref<18x18x128xf32, #tpu.memory_space<vmem>>, vector<18x1x128xf32>,
    %cst_18 = arith.constant 0.000000e+00 : f32
    %18 = vector.broadcast %cst_18 : f32 to vector<18x1x128xf32>
    %c0_19 = arith.constant 0 : index
    %c17_20 = arith.constant 17 : index
    %c0_21 = arith.constant 0 : index
    %19 = vector.load %arg7[%c0_19, %c17_20, %c0_21] : memref<18x18x128xf32, #tpu.memory_space<vmem>>, vector<18x1x128xf32>
    tpu.vector_store %arg7[%c0_19, %c17_20, %c0_21], %18 {strides = array<i32>} : memref<18x18x128xf32, #tpu.memory_space<vmem>>, vector<18x1x128xf32>,
    %c1 = arith.constant 1 : index
    %c1_22 = arith.constant 1 : index
    %c0_23 = arith.constant 0 : index
    %20 = vector.load %arg7[%c1, %c1_22, %c0_23] : memref<18x18x128xf32, #tpu.memory_space<vmem>>, vector<16x16x128xf32>
    tpu.vector_store %arg7[%c1, %c1_22, %c0_23], %11 {strides = array<i32>} : memref<18x18x128xf32, #tpu.memory_space<vmem>>, vector<16x16x128xf32>,
    %cst_24 = arith.constant 0.000000e+00 : f32
    %21 = vector.broadcast %cst_24 : f32 to vector<256x128xf32>
    %c0_25 = arith.constant 0 : index
    %c0_26 = arith.constant 0 : index
    %c0_27 = arith.constant 0 : index
    %22 = vector.load %arg7[%c0_25, %c0_26, %c0_27] : memref<18x18x128xf32, #tpu.memory_space<vmem>>, vector<16x16x128xf32>
    %c0_28 = arith.constant 0 : index
    %c1_29 = arith.constant 1 : index
    %c0_30 = arith.constant 0 : index
    %23 = vector.load %arg7[%c0_28, %c1_29, %c0_30] : memref<18x18x128xf32, #tpu.memory_space<vmem>>, vector<16x16x128xf32>
    %c0_31 = arith.constant 0 : index
    %c2 = arith.constant 2 : index
    %c0_32 = arith.constant 0 : index
    %24 = vector.load %arg7[%c0_31, %c2, %c0_32] : memref<18x18x128xf32, #tpu.memory_space<vmem>>, vector<16x16x128xf32>
    %25 = tpu.concatenate %22, %23, %24 in 2 : vector<16x16x128xf32>, vector<16x16x128xf32>, vector<16x16x128xf32> -> vector<16x16x384xf32>
    %26 = vector.shape_cast %25 : vector<16x16x384xf32> to vector<256x384xf32>
    %27 = arith.truncf %26 : vector<256x384xf32> to vector<256x384xbf16>
    %c0_33 = arith.constant 0 : index
    %c0_34 = arith.constant 0 : index
    %c0_35 = arith.constant 0 : index
    %28 = vector.load %arg4[%c0_33, %c0_34, %c0_35] : memref<3x384x128xbf16, #tpu.memory_space<vmem>>, vector<1x384x128xbf16>
    %29 = vector.shape_cast %28 : vector<1x384x128xbf16> to vector<384x128xbf16>
    %cst_36 = arith.constant dense<0.000000e+00> : vector<256x128xf32>
    %30 = tpu.matmul %27, %29, %cst_36 {dimension_numbers = #tpu.dot_dimension_numbers<[1], [0], [0], [1], [0, 0, 1, 1], [], []>} : vector<256x384xbf16>, vector<384x128xbf16>, vector<256x128xf32> -> vector<256x128xf32>
    %31 = arith.addf %21, %30 : vector<256x128xf32>
    %c1_37 = arith.constant 1 : index
    %c0_38 = arith.constant 0 : index
    %c0_39 = arith.constant 0 : index
    %32 = vector.load %arg7[%c1_37, %c0_38, %c0_39] : memref<18x18x128xf32, #tpu.memory_space<vmem>>, vector<16x16x128xf32>
    %c1_40 = arith.constant 1 : index
    %c1_41 = arith.constant 1 : index
    %c0_42 = arith.constant 0 : index
    %33 = vector.load %arg7[%c1_40, %c1_41, %c0_42] : memref<18x18x128xf32, #tpu.memory_space<vmem>>, vector<16x16x128xf32>
    %c1_43 = arith.constant 1 : index
    %c2_44 = arith.constant 2 : index
    %c0_45 = arith.constant 0 : index
    %34 = vector.load %arg7[%c1_43, %c2_44, %c0_45] : memref<18x18x128xf32, #tpu.memory_space<vmem>>, vector<16x16x128xf32>
    %35 = tpu.concatenate %32, %33, %34 in 2 : vector<16x16x128xf32>, vector<16x16x128xf32>, vector<16x16x128xf32> -> vector<16x16x384xf32>
    %36 = vector.shape_cast %35 : vector<16x16x384xf32> to vector<256x384xf32>
    %37 = arith.truncf %36 : vector<256x384xf32> to vector<256x384xbf16>
    %c1_46 = arith.constant 1 : index
    %c0_47 = arith.constant 0 : index
    %c0_48 = arith.constant 0 : index
    %38 = vector.load %arg4[%c1_46, %c0_47, %c0_48] : memref<3x384x128xbf16, #tpu.memory_space<vmem>>, vector<1x384x128xbf16>
    %39 = vector.shape_cast %38 : vector<1x384x128xbf16> to vector<384x128xbf16>
    %cst_49 = arith.constant dense<0.000000e+00> : vector<256x128xf32>
    %40 = tpu.matmul %37, %39, %cst_49 {dimension_numbers = #tpu.dot_dimension_numbers<[1], [0], [0], [1], [0, 0, 1, 1], [], []>} : vector<256x384xbf16>, vector<384x128xbf16>, vector<256x128xf32> -> vector<256x128xf32>
    %41 = arith.addf %31, %40 : vector<256x128xf32>
    %c2_50 = arith.constant 2 : index
    %c0_51 = arith.constant 0 : index
    %c0_52 = arith.constant 0 : index
    %42 = vector.load %arg7[%c2_50, %c0_51, %c0_52] : memref<18x18x128xf32, #tpu.memory_space<vmem>>, vector<16x16x128xf32>
    %c2_53 = arith.constant 2 : index
    %c1_54 = arith.constant 1 : index
    %c0_55 = arith.constant 0 : index
    %43 = vector.load %arg7[%c2_53, %c1_54, %c0_55] : memref<18x18x128xf32, #tpu.memory_space<vmem>>, vector<16x16x128xf32>
    %c2_56 = arith.constant 2 : index
    %c2_57 = arith.constant 2 : index
    %c0_58 = arith.constant 0 : index
    %44 = vector.load %arg7[%c2_56, %c2_57, %c0_58] : memref<18x18x128xf32, #tpu.memory_space<vmem>>, vector<16x16x128xf32>
    %45 = tpu.concatenate %42, %43, %44 in 2 : vector<16x16x128xf32>, vector<16x16x128xf32>, vector<16x16x128xf32> -> vector<16x16x384xf32>
    %46 = vector.shape_cast %45 : vector<16x16x384xf32> to vector<256x384xf32>
    %47 = arith.truncf %46 : vector<256x384xf32> to vector<256x384xbf16>
    %c2_59 = arith.constant 2 : index
    %c0_60 = arith.constant 0 : index
    %c0_61 = arith.constant 0 : index
    %48 = vector.load %arg4[%c2_59, %c0_60, %c0_61] : memref<3x384x128xbf16, #tpu.memory_space<vmem>>, vector<1x384x128xbf16>
    %49 = vector.shape_cast %48 : vector<1x384x128xbf16> to vector<384x128xbf16>
    %cst_62 = arith.constant dense<0.000000e+00> : vector<256x128xf32>
    %50 = tpu.matmul %47, %49, %cst_62 {dimension_numbers = #tpu.dot_dimension_numbers<[1], [0], [0], [1], [0, 0, 1, 1], [], []>} : vector<256x384xbf16>, vector<384x128xbf16>, vector<256x128xf32> -> vector<256x128xf32>
    %51 = arith.addf %41, %50 : vector<256x128xf32>
    %52 = vector.shape_cast %51 : vector<256x128xf32> to vector<1x16x16x128xf32>
    %c0_63 = arith.constant 0 : index
    %c0_64 = arith.constant 0 : index
    %c0_65 = arith.constant 0 : index
    %c0_66 = arith.constant 0 : index
    %53 = vector.load %arg5[%c0_63, %c0_64, %c0_65, %c0_66] : memref<1x16x16x128xf32, #tpu.memory_space<vmem>>, vector<1x16x16x128xf32>
    tpu.vector_store %arg5[%c0_63, %c0_64, %c0_65, %c0_66], %52 {strides = array<i32>} : memref<1x16x16x128xf32, #tpu.memory_space<vmem>>, vector<1x16x16x128xf32>,
    %cst_67 = arith.constant dense<0.000000e+00> : vector<128xf32>
    %54 = vector.multi_reduction <add>, %51, %cst_67 [0] : vector<256x128xf32> to vector<128xf32>
    %55 = vector.shape_cast %54 : vector<128xf32> to vector<1x128xf32>
    %56 = vector.shape_cast %55 : vector<1x128xf32> to vector<1x1x128xf32>
    %c0_68 = arith.constant 0 : index
    %c0_69 = arith.constant 0 : index
    %c0_70 = arith.constant 0 : index
    %57 = vector.load %arg6[%c0_68, %c0_69, %c0_70] : memref<1x2x128xf32, #tpu.memory_space<vmem>>, vector<1x1x128xf32>
    tpu.vector_store %arg6[%c0_68, %c0_69, %c0_70], %56 {strides = array<i32>} : memref<1x2x128xf32, #tpu.memory_space<vmem>>, vector<1x1x128xf32>,
    %58 = arith.mulf %51, %51 : vector<256x128xf32>
    %cst_71 = arith.constant dense<0.000000e+00> : vector<128xf32>
    %59 = vector.multi_reduction <add>, %58, %cst_71 [0] : vector<256x128xf32> to vector<128xf32>
    %60 = vector.shape_cast %59 : vector<128xf32> to vector<1x128xf32>
    %61 = vector.shape_cast %60 : vector<1x128xf32> to vector<1x1x128xf32>
    %c0_72 = arith.constant 0 : index
    %c1_73 = arith.constant 1 : index
    %c0_74 = arith.constant 0 : index
    %62 = vector.load %arg6[%c0_72, %c1_73, %c0_74] : memref<1x2x128xf32, #tpu.memory_space<vmem>>, vector<1x1x128xf32>
    tpu.vector_store %arg6[%c0_72, %c1_73, %c0_74], %61 {strides = array<i32>} : memref<1x2x128xf32, #tpu.memory_space<vmem>>, vector<1x1x128xf32>,
    return
  }
  func.func @transform_0(%arg0: i32) -> (i32, i32, i32, i32) {
    %c0_i32 = arith.constant 0 : i32
    %c0_i32_0 = arith.constant 0 : i32
    %c0_i32_1 = arith.constant 0 : i32
    %c0_i32_2 = arith.constant 0 : i32
    return %arg0, %c0_i32, %c0_i32_0, %c0_i32_1 : i32, i32, i32, i32
  }
  func.func @transform_1(%arg0: i32) -> (i32, i32) {
    %c0_i32 = arith.constant 0 : i32
    %c0_i32_0 = arith.constant 0 : i32
    %c0_i32_1 = arith.constant 0 : i32
    return %c0_i32, %c0_i32_0 : i32, i32
  }
  func.func @transform_2(%arg0: i32) -> (i32, i32) {
    %c0_i32 = arith.constant 0 : i32
    %c0_i32_0 = arith.constant 0 : i32
    %c0_i32_1 = arith.constant 0 : i32
    return %c0_i32, %c0_i32_0 : i32, i32
  }
  func.func @transform_3(%arg0: i32) -> (i32, i32, i32) {
    %c0_i32 = arith.constant 0 : i32
    %c0_i32_0 = arith.constant 0 : i32
    %c0_i32_1 = arith.constant 0 : i32
    %c0_i32_2 = arith.constant 0 : i32
    return %c0_i32, %c0_i32_0, %c0_i32_1 : i32, i32, i32
  }
  func.func @transform_4(%arg0: i32) -> (i32, i32, i32, i32) {
    %c0_i32 = arith.constant 0 : i32
    %c0_i32_0 = arith.constant 0 : i32
    %c0_i32_1 = arith.constant 0 : i32
    %c0_i32_2 = arith.constant 0 : i32
    return %arg0, %c0_i32, %c0_i32_0, %c0_i32_1 : i32, i32, i32, i32
  }
  func.func @transform_5(%arg0: i32) -> (i32, i32, i32) {
    %c0_i32 = arith.constant 0 : i32
    %c0_i32_0 = arith.constant 0 : i32
    %c0_i32_1 = arith.constant 0 : i32
    return %arg0, %c0_i32, %c0_i32_0 : i32, i32, i32
  }
}

module attributes {stable_mosaic.version = 11 : i64} {
  func.func @_bn_residual_kernel(%arg0: i32, %arg1: memref<128x128xf32, #tpu.memory_space<vmem>>, %arg2: memref<128x128xf32, #tpu.memory_space<vmem>>, %arg3: memref<1x128xf32, #tpu.memory_space<vmem>>, %arg4: memref<1x128xf32, #tpu.memory_space<vmem>>, %arg5: memref<128x128xf32, #tpu.memory_space<vmem>>) attributes {dimension_semantics = [#tpu.dimension_semantics<parallel>], iteration_bounds = array<i64: 4>, scalar_prefetch = 0 : i64, scratch_operands = 0 : i64, tpu.core_type = #tpu.core_type<tc>, window_params = [{transform_indices = @transform_0, window_bounds = array<i64: 128, 128>}, {transform_indices = @transform_1, window_bounds = array<i64: 128, 128>}, {pipeline_mode = #tpu.pipeline_mode<synchronous>, transform_indices = @transform_2, window_bounds = array<i64: 1, 128>}, {pipeline_mode = #tpu.pipeline_mode<synchronous>, transform_indices = @transform_3, window_bounds = array<i64: 1, 128>}, {transform_indices = @transform_4, window_bounds = array<i64: 128, 128>}]} {
    %c0 = arith.constant 0 : index
    %c0_0 = arith.constant 0 : index
    %0 = vector.load %arg1[%c0, %c0_0] : memref<128x128xf32, #tpu.memory_space<vmem>>, vector<128x128xf32>
    %c0_1 = arith.constant 0 : index
    %c0_2 = arith.constant 0 : index
    %1 = vector.load %arg3[%c0_1, %c0_2] : memref<1x128xf32, #tpu.memory_space<vmem>>, vector<1x128xf32>
    %2 = vector.broadcast %1 : vector<1x128xf32> to vector<128x128xf32>
    %3 = arith.mulf %0, %2 : vector<128x128xf32>
    %c0_3 = arith.constant 0 : index
    %c0_4 = arith.constant 0 : index
    %4 = vector.load %arg4[%c0_3, %c0_4] : memref<1x128xf32, #tpu.memory_space<vmem>>, vector<1x128xf32>
    %5 = vector.broadcast %4 : vector<1x128xf32> to vector<128x128xf32>
    %6 = arith.addf %3, %5 : vector<128x128xf32>
    %c0_5 = arith.constant 0 : index
    %c0_6 = arith.constant 0 : index
    %7 = vector.load %arg2[%c0_5, %c0_6] : memref<128x128xf32, #tpu.memory_space<vmem>>, vector<128x128xf32>
    %8 = arith.addf %6, %7 : vector<128x128xf32>
    %cst = arith.constant 0.000000e+00 : f32
    %9 = vector.broadcast %cst : f32 to vector<128x128xf32>
    %10 = arith.maximumf %8, %9 : vector<128x128xf32>
    %c0_7 = arith.constant 0 : index
    %c0_8 = arith.constant 0 : index
    %11 = vector.load %arg5[%c0_7, %c0_8] : memref<128x128xf32, #tpu.memory_space<vmem>>, vector<128x128xf32>
    tpu.vector_store %arg5[%c0_7, %c0_8], %10 {strides = array<i32>} : memref<128x128xf32, #tpu.memory_space<vmem>>, vector<128x128xf32>,
    return
  }
  func.func @transform_0(%arg0: i32) -> (i32, i32) {
    %c0_i32 = arith.constant 0 : i32
    %c0_i32_0 = arith.constant 0 : i32
    return %arg0, %c0_i32 : i32, i32
  }
  func.func @transform_1(%arg0: i32) -> (i32, i32) {
    %c0_i32 = arith.constant 0 : i32
    %c0_i32_0 = arith.constant 0 : i32
    return %arg0, %c0_i32 : i32, i32
  }
  func.func @transform_2(%arg0: i32) -> (i32, i32) {
    %c0_i32 = arith.constant 0 : i32
    %c0_i32_0 = arith.constant 0 : i32
    %c0_i32_1 = arith.constant 0 : i32
    return %c0_i32, %c0_i32_0 : i32, i32
  }
  func.func @transform_3(%arg0: i32) -> (i32, i32) {
    %c0_i32 = arith.constant 0 : i32
    %c0_i32_0 = arith.constant 0 : i32
    %c0_i32_1 = arith.constant 0 : i32
    return %c0_i32, %c0_i32_0 : i32, i32
  }
  func.func @transform_4(%arg0: i32) -> (i32, i32) {
    %c0_i32 = arith.constant 0 : i32
    %c0_i32_0 = arith.constant 0 : i32
    return %arg0, %c0_i32 : i32, i32
  }
}

module attributes {stable_mosaic.version = 11 : i64} {
  func.func @_bn_conv1_kernel(%arg0: i32, %arg1: memref<128x128xf32, #tpu.memory_space<vmem>>, %arg2: memref<1x128xf32, #tpu.memory_space<vmem>>, %arg3: memref<1x128xf32, #tpu.memory_space<vmem>>, %arg4: memref<128x128xbf16, #tpu.memory_space<vmem>>, %arg5: memref<128x128xf32, #tpu.memory_space<vmem>>, %arg6: memref<1x2x128xf32, #tpu.memory_space<vmem>>) attributes {dimension_semantics = [#tpu.dimension_semantics<parallel>], iteration_bounds = array<i64: 4>, scalar_prefetch = 0 : i64, scratch_operands = 0 : i64, tpu.core_type = #tpu.core_type<tc>, window_params = [{transform_indices = @transform_0, window_bounds = array<i64: 128, 128>}, {pipeline_mode = #tpu.pipeline_mode<synchronous>, transform_indices = @transform_1, window_bounds = array<i64: 1, 128>}, {pipeline_mode = #tpu.pipeline_mode<synchronous>, transform_indices = @transform_2, window_bounds = array<i64: 1, 128>}, {pipeline_mode = #tpu.pipeline_mode<synchronous>, transform_indices = @transform_3, window_bounds = array<i64: 128, 128>}, {transform_indices = @transform_4, window_bounds = array<i64: 128, 128>}, {transform_indices = @transform_5, window_bounds = array<i64: 1, 2, 128>}]} {
    %c0 = arith.constant 0 : index
    %c0_0 = arith.constant 0 : index
    %0 = vector.load %arg1[%c0, %c0_0] : memref<128x128xf32, #tpu.memory_space<vmem>>, vector<128x128xf32>
    %c0_1 = arith.constant 0 : index
    %c0_2 = arith.constant 0 : index
    %1 = vector.load %arg2[%c0_1, %c0_2] : memref<1x128xf32, #tpu.memory_space<vmem>>, vector<1x128xf32>
    %2 = vector.broadcast %1 : vector<1x128xf32> to vector<128x128xf32>
    %3 = arith.mulf %0, %2 : vector<128x128xf32>
    %c0_3 = arith.constant 0 : index
    %c0_4 = arith.constant 0 : index
    %4 = vector.load %arg3[%c0_3, %c0_4] : memref<1x128xf32, #tpu.memory_space<vmem>>, vector<1x128xf32>
    %5 = vector.broadcast %4 : vector<1x128xf32> to vector<128x128xf32>
    %6 = arith.addf %3, %5 : vector<128x128xf32>
    %cst = arith.constant 0.000000e+00 : f32
    %7 = vector.broadcast %cst : f32 to vector<128x128xf32>
    %8 = arith.maximumf %6, %7 : vector<128x128xf32>
    %9 = arith.truncf %8 : vector<128x128xf32> to vector<128x128xbf16>
    %c0_5 = arith.constant 0 : index
    %c0_6 = arith.constant 0 : index
    %10 = vector.load %arg4[%c0_5, %c0_6] : memref<128x128xbf16, #tpu.memory_space<vmem>>, vector<128x128xbf16>
    %cst_7 = arith.constant dense<0.000000e+00> : vector<128x128xf32>
    %11 = tpu.matmul %9, %10, %cst_7 {dimension_numbers = #tpu.dot_dimension_numbers<[1], [0], [0], [1], [0, 0, 1, 1], [], []>} : vector<128x128xbf16>, vector<128x128xbf16>, vector<128x128xf32> -> vector<128x128xf32>
    %c0_8 = arith.constant 0 : index
    %c0_9 = arith.constant 0 : index
    %12 = vector.load %arg5[%c0_8, %c0_9] : memref<128x128xf32, #tpu.memory_space<vmem>>, vector<128x128xf32>
    tpu.vector_store %arg5[%c0_8, %c0_9], %11 {strides = array<i32>} : memref<128x128xf32, #tpu.memory_space<vmem>>, vector<128x128xf32>,
    %cst_10 = arith.constant dense<0.000000e+00> : vector<128xf32>
    %13 = vector.multi_reduction <add>, %11, %cst_10 [0] : vector<128x128xf32> to vector<128xf32>
    %14 = vector.shape_cast %13 : vector<128xf32> to vector<1x128xf32>
    %15 = vector.shape_cast %14 : vector<1x128xf32> to vector<1x1x128xf32>
    %c0_11 = arith.constant 0 : index
    %c0_12 = arith.constant 0 : index
    %c0_13 = arith.constant 0 : index
    %16 = vector.load %arg6[%c0_11, %c0_12, %c0_13] : memref<1x2x128xf32, #tpu.memory_space<vmem>>, vector<1x1x128xf32>
    tpu.vector_store %arg6[%c0_11, %c0_12, %c0_13], %15 {strides = array<i32>} : memref<1x2x128xf32, #tpu.memory_space<vmem>>, vector<1x1x128xf32>,
    %17 = arith.mulf %11, %11 : vector<128x128xf32>
    %cst_14 = arith.constant dense<0.000000e+00> : vector<128xf32>
    %18 = vector.multi_reduction <add>, %17, %cst_14 [0] : vector<128x128xf32> to vector<128xf32>
    %19 = vector.shape_cast %18 : vector<128xf32> to vector<1x128xf32>
    %20 = vector.shape_cast %19 : vector<1x128xf32> to vector<1x1x128xf32>
    %c0_15 = arith.constant 0 : index
    %c1 = arith.constant 1 : index
    %c0_16 = arith.constant 0 : index
    %21 = vector.load %arg6[%c0_15, %c1, %c0_16] : memref<1x2x128xf32, #tpu.memory_space<vmem>>, vector<1x1x128xf32>
    tpu.vector_store %arg6[%c0_15, %c1, %c0_16], %20 {strides = array<i32>} : memref<1x2x128xf32, #tpu.memory_space<vmem>>, vector<1x1x128xf32>,
    return
  }
  func.func @transform_0(%arg0: i32) -> (i32, i32) {
    %c0_i32 = arith.constant 0 : i32
    %c0_i32_0 = arith.constant 0 : i32
    return %arg0, %c0_i32 : i32, i32
  }
  func.func @transform_1(%arg0: i32) -> (i32, i32) {
    %c0_i32 = arith.constant 0 : i32
    %c0_i32_0 = arith.constant 0 : i32
    %c0_i32_1 = arith.constant 0 : i32
    return %c0_i32, %c0_i32_0 : i32, i32
  }
  func.func @transform_2(%arg0: i32) -> (i32, i32) {
    %c0_i32 = arith.constant 0 : i32
    %c0_i32_0 = arith.constant 0 : i32
    %c0_i32_1 = arith.constant 0 : i32
    return %c0_i32, %c0_i32_0 : i32, i32
  }
  func.func @transform_3(%arg0: i32) -> (i32, i32) {
    %c0_i32 = arith.constant 0 : i32
    %c0_i32_0 = arith.constant 0 : i32
    %c0_i32_1 = arith.constant 0 : i32
    return %c0_i32, %c0_i32_0 : i32, i32
  }
  func.func @transform_4(%arg0: i32) -> (i32, i32) {
    %c0_i32 = arith.constant 0 : i32
    %c0_i32_0 = arith.constant 0 : i32
    return %arg0, %c0_i32 : i32, i32
  }
  func.func @transform_5(%arg0: i32) -> (i32, i32, i32) {
    %c0_i32 = arith.constant 0 : i32
    %c0_i32_0 = arith.constant 0 : i32
    %c0_i32_1 = arith.constant 0 : i32
    return %arg0, %c0_i32, %c0_i32_0 : i32, i32, i32
  }
}

</mosaic_0001>

<llo_original>
// kernel: bottleneck_pallas.4
$region0: #{bottleneck_pallas.4}
  #allocation0 [shape = 'u32[]', space=smem, size = 0x4, offset = 0x4, fixed_abs, tag = 'smem constant byte address 0x4 - core index']
  #allocation1 [shape = 'u32[144,128]{1,0:T(1,128)}', space=vmem, size = 0x12000, scoped, tag = 'internal scratch']
  %s0 = inlined_call_operand.vmem [shape: f32[512,128], index: 0, kind: input, shape index: {}]
  %s1 = inlined_call_operand.vmem [shape: bf16[128,128], index: 1, kind: input, shape index: {}]
  %s2 = inlined_call_operand.vmem [shape: f32[512,128], index: 2, kind: output, shape index: {0}]
  %s3 = inlined_call_operand.vmem [shape: f32[4,2,128], index: 3, kind: output, shape index: {1}]
  %4 = xla_tuple %s2, %s3
  %s5 = sld [smem:[#allocation0]]
  $region49: #{bottleneck_pallas.4} parent=0
    _
  %s7 = ssub.s32 1, %s5
  %s8 = scalar_select 0, %s7, %s5
  loop: start=0, step=1, limit=6
  $region2: #{bottleneck_pallas.4} parent=0 // loop_pre_header
    _
  $region3: #{bottleneck_pallas.4} parent=0 // loop_header
    %s10 = sphi 0, %s14
    %p11 = scmp.ge.s32.totalorder %s10, 6
    %s20 = sphi 0, %s22
    %s23 = sphi 0, %s20
    %s24 = sphi 0, %s23
    %s40 = sphi 0, %s24
    %s44 = sphi 0, %s44
    %s46 = sphi 0, %s44
    %s47 = sphi 0, %s46
    %s61 = sphi 0, %s47
    %s67 = sphi 0, %s69
    %s70 = sphi 0, %s67
    %s71 = sphi 0, %s70
    %s87 = sphi 0, %s71
    %s93 = sphi 0, %s95
    %s96 = sphi 0, %s93
    %s97 = sphi 0, %s96
    %s113 = sphi 0, %s97
  $region4: #{bottleneck_pallas.4} parent=0 // loop_header_branch
    %13 = sbr.rel (%p11) target = $region8
  $region5: #{bottleneck_pallas.4} parent=0 // loop_body
    %s15 = ssub.s32 %s10, 1
    %s16 = ssub.s32 %s10, 2
    %s17 = sadd.s32 %s10, 1
    %s18 = ssub.s32 %s10, %s17
    %p19 = scmp.eq.s32.totalorder %s18, 0
    %s21 = sadd.s32 %s20, 1
    %s22 = scalar_select %p19, %s20, %s21
    %p25 = pneg %p19
    %p26 = scmp.eq.s32.totalorder %s10, 3
    %p27 = por %p25, %p26
    %p28 = scmp.ne.s32.totalorder %s20, %s23
    %p29 = scmp.eq.s32.totalorder %s10, 0
    %p30 = por %p28, %p29
    %p31 = scmp.ne.s32.totalorder %s20, %s23
    %p32 = scmp.eq.s32.totalorder %s15, 3
    %p33 = por %p31, %p32
    %p34 = scmp.ne.s32.totalorder %s23, %s24
    %p35 = scmp.eq.s32.totalorder %s15, 0
    %p36 = por %p34, %p35
    %p37 = scmp.ne.s32.totalorder %s23, %s24
    %p38 = scmp.eq.s32.totalorder %s16, 3
    %p39 = por %p37, %p38
    %p41 = scmp.ne.s32.totalorder %s24, %s40
    %p42 = scmp.eq.s32.totalorder %s16, 0
    %p43 = por %p41, %p42
    %s45 = sadd.s32 %s44, 1
    %p48 = scmp.eq.s32.totalorder %s10, 3
    %p49 = scmp.ne.s32.totalorder %s44, %s46
    %p50 = scmp.eq.s32.totalorder %s10, 0
    %p51 = por %p49, %p50
    %p52 = scmp.ne.s32.totalorder %s44, %s46
    %p53 = scmp.eq.s32.totalorder %s15, 3
    %p54 = por %p52, %p53
    %p55 = scmp.ne.s32.totalorder %s46, %s47
    %p56 = scmp.eq.s32.totalorder %s15, 0
    %p57 = por %p55, %p56
    %p58 = scmp.ne.s32.totalorder %s46, %s47
    %p59 = scmp.eq.s32.totalorder %s16, 3
    %p60 = por %p58, %p59
    %p62 = scmp.ne.s32.totalorder %s47, %s61
    %p63 = scmp.eq.s32.totalorder %s16, 0
    %p64 = por %p62, %p63
    %s65 = ssub.s32 %s10, %s17
    %p66 = scmp.eq.s32.totalorder %s65, 0
    %s68 = sadd.s32 %s67, 1
    %s69 = scalar_select %p66, %s67, %s68
    %p72 = pneg %p66
    %p73 = scmp.eq.s32.totalorder %s10, 3
    %p74 = por %p72, %p73
    %p75 = scmp.ne.s32.totalorder %s67, %s70
    %p76 = scmp.eq.s32.totalorder %s10, 0
    %p77 = por %p75, %p76
    %p78 = scmp.ne.s32.totalorder %s67, %s70
    %p79 = scmp.eq.s32.totalorder %s15, 3
    %p80 = por %p78, %p79
    %p81 = scmp.ne.s32.totalorder %s70, %s71
    %p82 = scmp.eq.s32.totalorder %s15, 0
    %p83 = por %p81, %p82
    %p84 = scmp.ne.s32.totalorder %s70, %s71
    %p85 = scmp.eq.s32.totalorder %s16, 3
    %p86 = por %p84, %p85
    %p88 = scmp.ne.s32.totalorder %s71, %s87
    %p89 = scmp.eq.s32.totalorder %s16, 0
    %p90 = por %p88, %p89
    %s91 = ssub.s32 %s10, %s17
    %p92 = scmp.eq.s32.totalorder %s91, 0
    %s94 = sadd.s32 %s93, 1
    %s95 = scalar_select %p92, %s93, %s94
    %p98 = pneg %p92
    %p99 = scmp.eq.s32.totalorder %s10, 3
    %p100 = por %p98, %p99
    %p101 = scmp.ne.s32.totalorder %s93, %s96
    %p102 = scmp.eq.s32.totalorder %s10, 0
    %p103 = por %p101, %p102
    %p104 = scmp.ne.s32.totalorder %s93, %s96
    %p105 = scmp.eq.s32.totalorder %s15, 3
    %p106 = por %p104, %p105
    %p107 = scmp.ne.s32.totalorder %s96, %s97
    %p108 = scmp.eq.s32.totalorder %s15, 0
    %p109 = por %p107, %p108
    %p110 = scmp.ne.s32.totalorder %s96, %s97
    %p111 = scmp.eq.s32.totalorder %s16, 3
    %p112 = por %p110, %p111
    %p114 = scmp.ne.s32.totalorder %s97, %s113
    %p115 = scmp.eq.s32.totalorder %s16, 0
    %p116 = por %p114, %p115
    %p117 = scmp.le.s32.totalorder 1, %s10
    %p118 = scmp.lt.s32.totalorder %s10, 5
    %p119 = pnand %p117, %p118
    %p120 = pneg %p119
    // Predicated region
    $region9: #{bottleneck_pallas.4} parent=5 // pred_check
      _
    $region10: #{bottleneck_pallas.4} parent=5 // pred_check_branch
      %122 = sbr.rel (%p119) target = $region12
    $region11: #{bottleneck_pallas.4} parent=5 // pred_region
      %s123 = ssub.s32 %s10, 1
      // Predicated region
      $region13: #{bottleneck_pallas.4} parent=11 // pred_check
        %p124 = pneg %p57
      $region14: #{bottleneck_pallas.4} parent=11 // pred_check_branch
        %126 = sbr.rel (%p124) target = $region16
      $region15: #{bottleneck_pallas.4} parent=11 // pred_region
        _
      $region16: #{bottleneck_pallas.4} parent=11 // pred_fallthru
        _
    $region12: #{bottleneck_pallas.4} parent=5 // pred_fallthru
      _
    %p127 = scmp.lt.s32.totalorder %s10, 4
    // Predicated region
    $region17: #{bottleneck_pallas.4} parent=5 // pred_check
      %p128 = pneg %p127
    $region18: #{bottleneck_pallas.4} parent=5 // pred_check_branch
      %130 = sbr.rel (%p128) target = $region20
    $region19: #{bottleneck_pallas.4} parent=5 // pred_region
      // Predicated region
      $region21: #{bottleneck_pallas.4} parent=19 // pred_check
        %p131 = pneg %p30
      $region22: #{bottleneck_pallas.4} parent=19 // pred_check_branch
        %133 = sbr.rel (%p131) target = $region24
      $region23: #{bottleneck_pallas.4} parent=19 // pred_region
        %s134 = smul.u32 16, %s10
        %p135 = scmp.lt.s32.totalorder %s134, 63
        %s136 = scalar_select %p135, %s134, 63
        %s137 = smul.addr %s136, 8
        %s138 = scalar_lea.vmem %s0, %s137
        %s139 = smul.u32 16, %s10
      $region24: #{bottleneck_pallas.4} parent=19 // pred_fallthru
        _
    $region20: #{bottleneck_pallas.4} parent=5 // pred_fallthru
      _
    %p140 = scmp.le.s32.totalorder 1, %s10
    %p141 = scmp.lt.s32.totalorder %s10, 5
    %p142 = pnand %p140, %p141
    %p143 = pneg %p142
    // Predicated region
    $region25: #{bottleneck_pallas.4} parent=5 // pred_check
      _
    $region26: #{bottleneck_pallas.4} parent=5 // pred_check_branch
      %145 = sbr.rel (%p142) target = $region28
    $region27: #{bottleneck_pallas.4} parent=5 // pred_region
      %s146 = ssub.s32 %s10, 1
      %s147 = smul.u32 16, %s15
      %p148 = scmp.lt.s32.totalorder %s147, 63
      %s149 = scalar_select %p148, %s147, 63
      %s150 = smul.addr %s149, 8
      %s151 = scalar_lea.vmem %s0, %s150
      %p152 = pneg %p36
      %p153 = pneg %p33
      %p154 = pneg %p57
      %p155 = pneg %p54
      %p156 = pneg %p83
      %p157 = pneg %p80
      %s158 = smul.u32 16, %s15
      %p159 = scmp.lt.s32.totalorder %s158, 63
      %s160 = scalar_select %p159, %s158, 63
      %s161 = smul.addr %s160, 8
      %s162 = scalar_lea.vmem %s2, %s161
      %p163 = pneg %p109
      %p164 = pneg %p106
      %p165 = scmp.lt.s32.totalorder %s15, 3
      %s166 = scalar_select %p165, %s15, 3
      %s167 = smul.addr %s166, 2
      %s168 = scalar_lea.vmem %s3, %s167
      %s169 = smul.u32 16, %s15
      %p170 = scmp.lt.s32.totalorder %s169, 63
      %s171 = scalar_select %p170, %s169, 63
      %s172 = smul.addr %s171, 8
      %s173 = scalar_lea.vmem %s0, %s172
      %s174 = smul.u32 16, %s15
      %s175 = smul.u32 16, %s15
      %p176 = scmp.lt.s32.totalorder %s175, 63
      %s177 = scalar_select %p176, %s175, 63
      %s178 = smul.addr %s177, 8
      %s179 = scalar_lea.vmem %s2, %s178
      %s180 = smul.u32 16, %s15
      %p181 = scmp.lt.s32.totalorder %s15, 3
      %s182 = scalar_select %p181, %s15, 3
      %s183 = smul.addr %s182, 2
      %s184 = scalar_lea.vmem %s3, %s183
      %v186 = vld [vmem:[%s173] sm:$0xff]
      %v187 = vld [vmem:[%s173 + $0x8] sm:$0xff]
      %v188 = vld [vmem:[%s173 + $0x10] sm:$0xff]
      %v189 = vld [vmem:[%s173 + $0x18] sm:$0xff]
      %v190 = vld [vmem:[%s173 + $0x20] sm:$0xff]
      %v191 = vld [vmem:[%s173 + $0x28] sm:$0xff]
      %v192 = vld [vmem:[%s173 + $0x30] sm:$0xff]
      %v193 = vld [vmem:[%s173 + $0x38] sm:$0xff]
      %v194 = vld [vmem:[%s173 + $0x40] sm:$0xff]
      %v195 = vld [vmem:[%s173 + $0x48] sm:$0xff]
      %v196 = vld [vmem:[%s173 + $0x50] sm:$0xff]
      %v197 = vld [vmem:[%s173 + $0x58] sm:$0xff]
      %v198 = vld [vmem:[%s173 + $0x60] sm:$0xff]
      %v199 = vld [vmem:[%s173 + $0x68] sm:$0xff]
      %v200 = vld [vmem:[%s173 + $0x70] sm:$0xff]
      %v201 = vld [vmem:[%s173 + $0x78] sm:$0xff]
      %v202 = vpack.c.bf16 %v187, %v186
      %v203 = vpack.c.bf16 %v189, %v188
      %v204 = vpack.c.bf16 %v191, %v190
      %v205 = vpack.c.bf16 %v193, %v192
      %v206 = vpack.c.bf16 %v195, %v194
      %v207 = vpack.c.bf16 %v197, %v196
      %v208 = vpack.c.bf16 %v199, %v198
      %v209 = vpack.c.bf16 %v201, %v200
      %v210 = vld [vmem:[%s1] sm:$0xf]
      %v211 = vld [vmem:[%s1 + $0x4] sm:$0xf]
      %v212 = vld [vmem:[%s1 + $0x8] sm:$0xf]
      %v213 = vld [vmem:[%s1 + $0xc] sm:$0xf]
      %v214 = vld [vmem:[%s1 + $0x10] sm:$0xf]
      %v215 = vld [vmem:[%s1 + $0x14] sm:$0xf]
      %v216 = vld [vmem:[%s1 + $0x18] sm:$0xf]
      %v217 = vld [vmem:[%s1 + $0x1c] sm:$0xf]
      %v218 = vld [vmem:[%s1 + $0x20] sm:$0xf]
      %v219 = vld [vmem:[%s1 + $0x24] sm:$0xf]
      %v220 = vld [vmem:[%s1 + $0x28] sm:$0xf]
      %v221 = vld [vmem:[%s1 + $0x2c] sm:$0xf]
      %v222 = vld [vmem:[%s1 + $0x30] sm:$0xf]
      %v223 = vld [vmem:[%s1 + $0x34] sm:$0xf]
      %v224 = vld [vmem:[%s1 + $0x38] sm:$0xf]
      %v225 = vld [vmem:[%s1 + $0x3c] sm:$0xf]
      %v242 = vunpack.c.l.b16 %v210
      %v243 = vunpack.c.l.b16 %v211
      %v244 = vunpack.c.l.b16 %v212
      %v245 = vunpack.c.l.b16 %v213
      %v246 = vunpack.c.l.b16 %v214
      %v247 = vunpack.c.l.b16 %v215
      %v248 = vunpack.c.l.b16 %v216
      %v249 = vunpack.c.l.b16 %v217
      %v250 = vunpack.c.l.b16 %v218
      %v251 = vunpack.c.l.b16 %v219
      %v252 = vunpack.c.l.b16 %v220
      %v253 = vunpack.c.l.b16 %v221
      %v254 = vunpack.c.l.b16 %v222
      %v255 = vunpack.c.l.b16 %v223
      %v256 = vunpack.c.l.b16 %v224
      %v257 = vunpack.c.l.b16 %v225
      %v258 = vpack.c.b16 %v243, %v242
      %v259 = vpack.c.b16 %v245, %v244
      %v260 = vpack.c.b16 %v247, %v246
      %v261 = vpack.c.b16 %v249, %v248
      %v262 = vpack.c.b16 %v251, %v250
      %v263 = vpack.c.b16 %v253, %v252
      %v264 = vpack.c.b16 %v255, %v254
      %v265 = vpack.c.b16 %v257, %v256
      %274 = vmatprep.subr.bf16.mxu0 0
      %275 = vmatpush1.bf16.msra.mxu0 %v258
      %276 = vmatprep.subr.bf16.mxu0 0
      %277 = vmatpush1.bf16.msra.mxu0 %v259
      %278 = vmatprep.subr.bf16.mxu0 0
      %279 = vmatpush1.bf16.msra.mxu0 %v260
      %280 = vmatprep.subr.bf16.mxu0 0
      %281 = vmatpush1.bf16.msra.mxu0 %v261
      %282 = vmatprep.subr.bf16.mxu0 0
      %283 = vmatpush1.bf16.msra.mxu0 %v262
      %284 = vmatprep.subr.bf16.mxu0 0
      %285 = vmatpush1.bf16.msra.mxu0 %v263
      %286 = vmatprep.subr.bf16.mxu0 0
      %287 = vmatpush1.bf16.msra.mxu0 %v264
      %288 = vmatprep.subr.bf16.mxu0 0
      %289 = vmatpush1.bf16.msra.mxu0 %v265
      %290 = vmatprep.subr.bf16.mxu0 0
      %291 = vmatpush1.bf16.msra.mxu0 0
      %292 = vmatprep.subr.bf16.mxu0 0
      %293 = vmatpush1.bf16.msra.mxu0 0
      %294 = vmatprep.subr.bf16.mxu0 0
      %295 = vmatpush1.bf16.msra.mxu0 0
      %296 = vmatprep.subr.bf16.mxu0 0
      %297 = vmatpush1.bf16.msra.mxu0 0
      %298 = vmatprep.subr.bf16.mxu0 0
      %299 = vmatpush1.bf16.msra.mxu0 0
      %300 = vmatprep.subr.bf16.mxu0 0
      %301 = vmatpush1.bf16.msra.mxu0 0
      %302 = vmatprep.subr.bf16.mxu0 0
      %303 = vmatpush1.bf16.msra.mxu0 0
      %304 = vmatprep.subr.bf16.mxu0 0
      %305 = vmatpush1.bf16.msra.mxu0 0
      %306 = vmatprep.mubr.bf16.mxu0 0
      %307 = vmatmul.mubr.bf16.gmra.mrb[0].mxu0 %v202
      %v308 = vpop.f32.mrb[0].mxu0
      %v309 = vadd.f32 0.0, %v308
      %v310 = vpop.f32.mrb[0].mxu0
      %v311 = vpop.f32.mrb[0].mxu0
      %v312 = vadd.f32 0.0, %v311
      %v313 = vpop.f32.mrb[0].mxu0
      %314 = vmatprep.mubr.bf16.mxu0 0
      %315 = vmatmul.mubr.bf16.gmra.mrb[0].mxu0 %v203
      %v316 = vpop.f32.mrb[0].mxu0
      %v317 = vadd.f32 0.0, %v316
      %v318 = vpop.f32.mrb[0].mxu0
      %v319 = vpop.f32.mrb[0].mxu0
      %v320 = vadd.f32 0.0, %v319
      %v321 = vpop.f32.mrb[0].mxu0
      %322 = vmatprep.mubr.bf16.mxu0 0
      %323 = vmatmul.mubr.bf16.gmra.mrb[0].mxu0 %v204
      %v324 = vpop.f32.mrb[0].mxu0
      %v325 = vadd.f32 0.0, %v324
      %v326 = vpop.f32.mrb[0].mxu0
      %v327 = vpop.f32.mrb[0].mxu0
      %v328 = vadd.f32 0.0, %v327
      %v329 = vpop.f32.mrb[0].mxu0
      %330 = vmatprep.mubr.bf16.mxu0 0
      %331 = vmatmul.mubr.bf16.gmra.mrb[0].mxu0 %v205
      %v332 = vpop.f32.mrb[0].mxu0
      %v333 = vadd.f32 0.0, %v332
      %v334 = vpop.f32.mrb[0].mxu0
      %v335 = vpop.f32.mrb[0].mxu0
      %v336 = vadd.f32 0.0, %v335
      %v337 = vpop.f32.mrb[0].mxu0
      %338 = vmatprep.mubr.bf16.mxu0 0
      %339 = vmatmul.mubr.bf16.gmra.mrb[0].mxu0 %v206
      %v340 = vpop.f32.mrb[0].mxu0
      %v341 = vadd.f32 0.0, %v340
      %v342 = vpop.f32.mrb[0].mxu0
      %v343 = vpop.f32.mrb[0].mxu0
      %v344 = vadd.f32 0.0, %v343
      %v345 = vpop.f32.mrb[0].mxu0
      %346 = vmatprep.mubr.bf16.mxu0 0
      %347 = vmatmul.mubr.bf16.gmra.mrb[0].mxu0 %v207
      %v348 = vpop.f32.mrb[0].mxu0
      %v349 = vadd.f32 0.0, %v348
      %v350 = vpop.f32.mrb[0].mxu0
      %v351 = vpop.f32.mrb[0].mxu0
      %v352 = vadd.f32 0.0, %v351
      %v353 = vpop.f32.mrb[0].mxu0
      %354 = vmatprep.mubr.bf16.mxu0 0
      %355 = vmatmul.mubr.bf16.gmra.mrb[0].mxu0 %v208
      %v356 = vpop.f32.mrb[0].mxu0
      %v357 = vadd.f32 0.0, %v356
      %v358 = vpop.f32.mrb[0].mxu0
      %v359 = vpop.f32.mrb[0].mxu0
      %v360 = vadd.f32 0.0, %v359
      %v361 = vpop.f32.mrb[0].mxu0
      %362 = vmatprep.mubr.bf16.mxu0 0
      %363 = vmatmul.mubr.bf16.gmra.mrb[0].mxu0 %v209
      %v364 = vpop.f32.mrb[0].mxu0
      %v365 = vadd.f32 0.0, %v364
      %v366 = vpop.f32.mrb[0].mxu0
      %v367 = vpop.f32.mrb[0].mxu0
      %v368 = vadd.f32 0.0, %v367
      %v369 = vpop.f32.mrb[0].mxu0
      %370 = vdwg.mxu0
      %371 = vst [vmem:[%s179] sm:$0xff] %v309
      %372 = vst [vmem:[%s179 + $0x8] sm:$0xff] %v312
      %373 = vst [vmem:[%s179 + $0x10] sm:$0xff] %v317
      %374 = vst [vmem:[%s179 + $0x18] sm:$0xff] %v320
      %375 = vst [vmem:[%s179 + $0x20] sm:$0xff] %v325
      %376 = vst [vmem:[%s179 + $0x28] sm:$0xff] %v328
      %377 = vst [vmem:[%s179 + $0x30] sm:$0xff] %v333
      %378 = vst [vmem:[%s179 + $0x38] sm:$0xff] %v336
      %379 = vst [vmem:[%s179 + $0x40] sm:$0xff] %v341
      %380 = vst [vmem:[%s179 + $0x48] sm:$0xff] %v344
      %381 = vst [vmem:[%s179 + $0x50] sm:$0xff] %v349
      %382 = vst [vmem:[%s179 + $0x58] sm:$0xff] %v352
      %383 = vst [vmem:[%s179 + $0x60] sm:$0xff] %v357
      %384 = vst [vmem:[%s179 + $0x68] sm:$0xff] %v360
      %385 = vst [vmem:[%s179 + $0x70] sm:$0xff] %v365
      %386 = vst [vmem:[%s179 + $0x78] sm:$0xff] %v368
      %v387 = vadd.f32 %v309, %v312
      %v388 = vadd.f32 %v387, %v317
      %v389 = vadd.f32 %v388, %v320
      %v390 = vadd.f32 %v389, %v325
      %v391 = vadd.f32 %v390, %v328
      %v392 = vadd.f32 %v391, %v333
      %v393 = vadd.f32 %v392, %v336
      %v394 = vadd.f32 %v393, %v341
      %v395 = vadd.f32 %v394, %v344
      %v396 = vadd.f32 %v395, %v349
      %v397 = vadd.f32 %v396, %v352
      %v398 = vadd.f32 %v397, %v357
      %v399 = vadd.f32 %v398, %v360
      %v400 = vadd.f32 %v399, %v365
      %v401 = vadd.f32 %v400, %v368
      %v402 = vrot.slane %v401, 4
      %v403 = vadd.f32 %v401, %v402
      %v404 = vrot.slane %v403, 2
      %v405 = vadd.f32 %v403, %v404
      %v406 = vrot.slane %v405, 1
      %v407 = vadd.f32 %v405, %v406
      %408 = vst [vmem:[%s184] sm:$0x1] %v407
      %v409 = vmul.f32 %v309, %v309
      %v410 = vmul.f32 %v312, %v312
      %v411 = vmul.f32 %v317, %v317
      %v412 = vmul.f32 %v320, %v320
      %v413 = vmul.f32 %v325, %v325
      %v414 = vmul.f32 %v328, %v328
      %v415 = vmul.f32 %v333, %v333
      %v416 = vmul.f32 %v336, %v336
      %v417 = vmul.f32 %v341, %v341
      %v418 = vmul.f32 %v344, %v344
      %v419 = vmul.f32 %v349, %v349
      %v420 = vmul.f32 %v352, %v352
      %v421 = vmul.f32 %v357, %v357
      %v422 = vmul.f32 %v360, %v360
      %v423 = vmul.f32 %v365, %v365
      %v424 = vmul.f32 %v368, %v368
      %v425 = vadd.f32 %v409, %v410
      %v426 = vadd.f32 %v425, %v411
      %v427 = vadd.f32 %v426, %v412
      %v428 = vadd.f32 %v427, %v413
      %v429 = vadd.f32 %v428, %v414
      %v430 = vadd.f32 %v429, %v415
      %v431 = vadd.f32 %v430, %v416
      %v432 = vadd.f32 %v431, %v417
      %v433 = vadd.f32 %v432, %v418
      %v434 = vadd.f32 %v433, %v419
      %v435 = vadd.f32 %v434, %v420
      %v436 = vadd.f32 %v435, %v421
      %v437 = vadd.f32 %v436, %v422
      %v438 = vadd.f32 %v437, %v423
      %v439 = vadd.f32 %v438, %v424
      %v440 = vrot.slane %v439, 4
      %v441 = vadd.f32 %v439, %v440
      %v442 = vrot.slane %v441, 2
      %v443 = vadd.f32 %v441, %v442
      %v444 = vrot.slane %v443, 1
      %v445 = vadd.f32 %v443, %v444
      %446 = vst [vmem:[%s184 + $0x1] sm:$0x1] %v445
      %s447 = smul.u32 16, %s15
      %p448 = scmp.lt.s32.totalorder %s447, 63
      %s449 = scalar_select %p448, %s447, 63
      %s450 = smul.addr %s449, 8
      %s451 = scalar_lea.vmem %s2, %s450
      %p452 = scmp.lt.s32.totalorder %s15, 3
      %s453 = scalar_select %p452, %s15, 3
      %s454 = smul.addr %s453, 2
      %s455 = scalar_lea.vmem %s3, %s454
      // Predicated region
      $region29: #{bottleneck_pallas.4} parent=27 // pred_check
        %p456 = pneg %p80
      $region30: #{bottleneck_pallas.4} parent=27 // pred_check_branch
        %458 = sbr.rel (%p456) target = $region32
      $region31: #{bottleneck_pallas.4} parent=27 // pred_region
        %s459 = smul.u32 16, %s15
      $region32: #{bottleneck_pallas.4} parent=27 // pred_fallthru
        _
      // Predicated region
      $region33: #{bottleneck_pallas.4} parent=27 // pred_check
        %p460 = pneg %p106
      $region34: #{bottleneck_pallas.4} parent=27 // pred_check_branch
        %462 = sbr.rel (%p460) target = $region36
      $region35: #{bottleneck_pallas.4} parent=27 // pred_region
        _
      $region36: #{bottleneck_pallas.4} parent=27 // pred_fallthru
        _
    $region28: #{bottleneck_pallas.4} parent=5 // pred_fallthru
      _
    %p463 = scmp.le.s32.totalorder 2, %s10
    // Predicated region
    $region37: #{bottleneck_pallas.4} parent=5 // pred_check
      %p464 = pneg %p463
    $region38: #{bottleneck_pallas.4} parent=5 // pred_check_branch
      %466 = sbr.rel (%p464) target = $region40
    $region39: #{bottleneck_pallas.4} parent=5 // pred_region
      %s467 = ssub.s32 %s10, 2
      // Predicated region
      $region41: #{bottleneck_pallas.4} parent=39 // pred_check
        %p468 = pneg %p86
      $region42: #{bottleneck_pallas.4} parent=39 // pred_check_branch
        %470 = sbr.rel (%p468) target = $region44
      $region43: #{bottleneck_pallas.4} parent=39 // pred_region
        %s471 = smul.u32 16, %s16
        %p472 = scmp.lt.s32.totalorder %s471, 63
        %s473 = scalar_select %p472, %s471, 63
        %s474 = smul.addr %s473, 8
        %s475 = scalar_lea.vmem %s2, %s474
      $region44: #{bottleneck_pallas.4} parent=39 // pred_fallthru
        _
      // Predicated region
      $region45: #{bottleneck_pallas.4} parent=39 // pred_check
        %p476 = pneg %p112
      $region46: #{bottleneck_pallas.4} parent=39 // pred_check_branch
        %478 = sbr.rel (%p476) target = $region48
      $region47: #{bottleneck_pallas.4} parent=39 // pred_region
        %p479 = scmp.lt.s32.totalorder %s16, 3
        %s480 = scalar_select %p479, %s16, 3
        %s481 = smul.addr %s480, 2
        %s482 = scalar_lea.vmem %s3, %s481
      $region48: #{bottleneck_pallas.4} parent=39 // pred_fallthru
        _
    $region40: #{bottleneck_pallas.4} parent=5 // pred_fallthru
      _
  $region6: #{bottleneck_pallas.4} parent=0 // loop_footer
    %s14 = sadd.s32 1, %s10
  $region7: #{bottleneck_pallas.4} parent=0 // loop_footer_branch
    %9 = sbr.rel target = $region3
  $region8: #{bottleneck_pallas.4} parent=0 // loop_exit
    _

// kernel: bottleneck_pallas.7
$region0: #{bottleneck_pallas.7}
  #allocation0 [shape = 'u32[]', space=smem, size = 0x4, offset = 0x4, fixed_abs, tag = 'smem constant byte address 0x4 - core index']
  #allocation1 [shape = 'u32[144,128]{1,0:T(1,128)}', space=vmem, size = 0x12000, scoped, tag = 'internal scratch']
  %s0 = inlined_call_operand.vmem [shape: f32[512,128], index: 0, kind: input, shape index: {}]
  %s1 = inlined_call_operand.vmem [shape: f32[512,128], index: 1, kind: input, shape index: {}]
  %s2 = inlined_call_operand.vmem [shape: f32[1,128], index: 2, kind: input, shape index: {}]
  %s3 = inlined_call_operand.vmem [shape: f32[1,128], index: 3, kind: input, shape index: {}]
  %s4 = inlined_call_operand.vmem [shape: f32[512,128], index: 4, kind: output, shape index: {}]
  %s5 = sld [smem:[#allocation0]]
  $region49: #{bottleneck_pallas.7} parent=0
    _
  %s7 = ssub.s32 1, %s5
  %s8 = scalar_select 0, %s7, %s5
  loop: start=0, step=1, limit=6
  $region2: #{bottleneck_pallas.7} parent=0 // loop_pre_header
    _
  $region3: #{bottleneck_pallas.7} parent=0 // loop_header
    %s10 = sphi 0, %s14
    %p11 = scmp.ge.s32.totalorder %s10, 6
    %s20 = sphi 0, %s22
    %s23 = sphi 0, %s20
    %s24 = sphi 0, %s23
    %s40 = sphi 0, %s24
    %s46 = sphi 0, %s48
    %s49 = sphi 0, %s46
    %s50 = sphi 0, %s49
    %s66 = sphi 0, %s50
    %s70 = sphi 0, %s70
    %s72 = sphi 0, %s70
    %s73 = sphi 0, %s72
    %s87 = sphi 0, %s73
    %s91 = sphi 0, %s91
    %s93 = sphi 0, %s91
    %s94 = sphi 0, %s93
    %s108 = sphi 0, %s94
    %s114 = sphi 0, %s116
    %s117 = sphi 0, %s114
    %s118 = sphi 0, %s117
    %s134 = sphi 0, %s118
  $region4: #{bottleneck_pallas.7} parent=0 // loop_header_branch
    %13 = sbr.rel (%p11) target = $region8
  $region5: #{bottleneck_pallas.7} parent=0 // loop_body
    %s15 = ssub.s32 %s10, 1
    %s16 = ssub.s32 %s10, 2
    %s17 = sadd.s32 %s10, 1
    %s18 = ssub.s32 %s10, %s17
    %p19 = scmp.eq.s32.totalorder %s18, 0
    %s21 = sadd.s32 %s20, 1
    %s22 = scalar_select %p19, %s20, %s21
    %p25 = pneg %p19
    %p26 = scmp.eq.s32.totalorder %s10, 3
    %p27 = por %p25, %p26
    %p28 = scmp.ne.s32.totalorder %s20, %s23
    %p29 = scmp.eq.s32.totalorder %s10, 0
    %p30 = por %p28, %p29
    %p31 = scmp.ne.s32.totalorder %s20, %s23
    %p32 = scmp.eq.s32.totalorder %s15, 3
    %p33 = por %p31, %p32
    %p34 = scmp.ne.s32.totalorder %s23, %s24
    %p35 = scmp.eq.s32.totalorder %s15, 0
    %p36 = por %p34, %p35
    %p37 = scmp.ne.s32.totalorder %s23, %s24
    %p38 = scmp.eq.s32.totalorder %s16, 3
    %p39 = por %p37, %p38
    %p41 = scmp.ne.s32.totalorder %s24, %s40
    %p42 = scmp.eq.s32.totalorder %s16, 0
    %p43 = por %p41, %p42
    %s44 = ssub.s32 %s10, %s17
    %p45 = scmp.eq.s32.totalorder %s44, 0
    %s47 = sadd.s32 %s46, 1
    %s48 = scalar_select %p45, %s46, %s47
    %p51 = pneg %p45
    %p52 = scmp.eq.s32.totalorder %s10, 3
    %p53 = por %p51, %p52
    %p54 = scmp.ne.s32.totalorder %s46, %s49
    %p55 = scmp.eq.s32.totalorder %s10, 0
    %p56 = por %p54, %p55
    %p57 = scmp.ne.s32.totalorder %s46, %s49
    %p58 = scmp.eq.s32.totalorder %s15, 3
    %p59 = por %p57, %p58
    %p60 = scmp.ne.s32.totalorder %s49, %s50
    %p61 = scmp.eq.s32.totalorder %s15, 0
    %p62 = por %p60, %p61
    %p63 = scmp.ne.s32.totalorder %s49, %s50
    %p64 = scmp.eq.s32.totalorder %s16, 3
    %p65 = por %p63, %p64
    %p67 = scmp.ne.s32.totalorder %s50, %s66
    %p68 = scmp.eq.s32.totalorder %s16, 0
    %p69 = por %p67, %p68
    %s71 = sadd.s32 %s70, 1
    %p74 = scmp.eq.s32.totalorder %s10, 3
    %p75 = scmp.ne.s32.totalorder %s70, %s72
    %p76 = scmp.eq.s32.totalorder %s10, 0
    %p77 = por %p75, %p76
    %p78 = scmp.ne.s32.totalorder %s70, %s72
    %p79 = scmp.eq.s32.totalorder %s15, 3
    %p80 = por %p78, %p79
    %p81 = scmp.ne.s32.totalorder %s72, %s73
    %p82 = scmp.eq.s32.totalorder %s15, 0
    %p83 = por %p81, %p82
    %p84 = scmp.ne.s32.totalorder %s72, %s73
    %p85 = scmp.eq.s32.totalorder %s16, 3
    %p86 = por %p84, %p85
    %p88 = scmp.ne.s32.totalorder %s73, %s87
    %p89 = scmp.eq.s32.totalorder %s16, 0
    %p90 = por %p88, %p89
    %s92 = sadd.s32 %s91, 1
    %p95 = scmp.eq.s32.totalorder %s10, 3
    %p96 = scmp.ne.s32.totalorder %s91, %s93
    %p97 = scmp.eq.s32.totalorder %s10, 0
    %p98 = por %p96, %p97
    %p99 = scmp.ne.s32.totalorder %s91, %s93
    %p100 = scmp.eq.s32.totalorder %s15, 3
    %p101 = por %p99, %p100
    %p102 = scmp.ne.s32.totalorder %s93, %s94
    %p103 = scmp.eq.s32.totalorder %s15, 0
    %p104 = por %p102, %p103
    %p105 = scmp.ne.s32.totalorder %s93, %s94
    %p106 = scmp.eq.s32.totalorder %s16, 3
    %p107 = por %p105, %p106
    %p109 = scmp.ne.s32.totalorder %s94, %s108
    %p110 = scmp.eq.s32.totalorder %s16, 0
    %p111 = por %p109, %p110
    %s112 = ssub.s32 %s10, %s17
    %p113 = scmp.eq.s32.totalorder %s112, 0
    %s115 = sadd.s32 %s114, 1
    %s116 = scalar_select %p113, %s114, %s115
    %p119 = pneg %p113
    %p120 = scmp.eq.s32.totalorder %s10, 3
    %p121 = por %p119, %p120
    %p122 = scmp.ne.s32.totalorder %s114, %s117
    %p123 = scmp.eq.s32.totalorder %s10, 0
    %p124 = por %p122, %p123
    %p125 = scmp.ne.s32.totalorder %s114, %s117
    %p126 = scmp.eq.s32.totalorder %s15, 3
    %p127 = por %p125, %p126
    %p128 = scmp.ne.s32.totalorder %s117, %s118
    %p129 = scmp.eq.s32.totalorder %s15, 0
    %p130 = por %p128, %p129
    %p131 = scmp.ne.s32.totalorder %s117, %s118
    %p132 = scmp.eq.s32.totalorder %s16, 3
    %p133 = por %p131, %p132
    %p135 = scmp.ne.s32.totalorder %s118, %s134
    %p136 = scmp.eq.s32.totalorder %s16, 0
    %p137 = por %p135, %p136
    %p138 = scmp.le.s32.totalorder 1, %s10
    %p139 = scmp.lt.s32.totalorder %s10, 5
    %p140 = pnand %p138, %p139
    %p141 = pneg %p140
    // Predicated region
    $region9: #{bottleneck_pallas.7} parent=5 // pred_check
      _
    $region10: #{bottleneck_pallas.7} parent=5 // pred_check_branch
      %143 = sbr.rel (%p140) target = $region12
    $region11: #{bottleneck_pallas.7} parent=5 // pred_region
      %s144 = ssub.s32 %s10, 1
      // Predicated region
      $region13: #{bottleneck_pallas.7} parent=11 // pred_check
        %p145 = pneg %p83
      $region14: #{bottleneck_pallas.7} parent=11 // pred_check_branch
        %147 = sbr.rel (%p145) target = $region16
      $region15: #{bottleneck_pallas.7} parent=11 // pred_region
        _
      $region16: #{bottleneck_pallas.7} parent=11 // pred_fallthru
        _
      // Predicated region
      $region17: #{bottleneck_pallas.7} parent=11 // pred_check
        %p148 = pneg %p104
      $region18: #{bottleneck_pallas.7} parent=11 // pred_check_branch
        %150 = sbr.rel (%p148) target = $region20
      $region19: #{bottleneck_pallas.7} parent=11 // pred_region
        _
      $region20: #{bottleneck_pallas.7} parent=11 // pred_fallthru
        _
    $region12: #{bottleneck_pallas.7} parent=5 // pred_fallthru
      _
    %p151 = scmp.lt.s32.totalorder %s10, 4
    // Predicated region
    $region21: #{bottleneck_pallas.7} parent=5 // pred_check
      %p152 = pneg %p151
    $region22: #{bottleneck_pallas.7} parent=5 // pred_check_branch
      %154 = sbr.rel (%p152) target = $region24
    $region23: #{bottleneck_pallas.7} parent=5 // pred_region
      // Predicated region
      $region25: #{bottleneck_pallas.7} parent=23 // pred_check
        %p155 = pneg %p30
      $region26: #{bottleneck_pallas.7} parent=23 // pred_check_branch
        %157 = sbr.rel (%p155) target = $region28
      $region27: #{bottleneck_pallas.7} parent=23 // pred_region
        %s158 = smul.u32 16, %s10
        %p159 = scmp.lt.s32.totalorder %s158, 63
        %s160 = scalar_select %p159, %s158, 63
        %s161 = smul.addr %s160, 8
        %s162 = scalar_lea.vmem %s0, %s161
        %s163 = smul.u32 16, %s10
      $region28: #{bottleneck_pallas.7} parent=23 // pred_fallthru
        _
      // Predicated region
      $region29: #{bottleneck_pallas.7} parent=23 // pred_check
        %p164 = pneg %p56
      $region30: #{bottleneck_pallas.7} parent=23 // pred_check_branch
        %166 = sbr.rel (%p164) target = $region32
      $region31: #{bottleneck_pallas.7} parent=23 // pred_region
        %s167 = smul.u32 16, %s10
        %p168 = scmp.lt.s32.totalorder %s167, 63
        %s169 = scalar_select %p168, %s167, 63
        %s170 = smul.addr %s169, 8
        %s171 = scalar_lea.vmem %s1, %s170
        %s172 = smul.u32 16, %s10
      $region32: #{bottleneck_pallas.7} parent=23 // pred_fallthru
        _
    $region24: #{bottleneck_pallas.7} parent=5 // pred_fallthru
      _
    %p173 = scmp.le.s32.totalorder 1, %s10
    %p174 = scmp.lt.s32.totalorder %s10, 5
    %p175 = pnand %p173, %p174
    %p176 = pneg %p175
    // Predicated region
    $region33: #{bottleneck_pallas.7} parent=5 // pred_check
      _
    $region34: #{bottleneck_pallas.7} parent=5 // pred_check_branch
      %178 = sbr.rel (%p175) target = $region36
    $region35: #{bottleneck_pallas.7} parent=5 // pred_region
      %s179 = ssub.s32 %s10, 1
      %s180 = smul.u32 16, %s15
      %p181 = scmp.lt.s32.totalorder %s180, 63
      %s182 = scalar_select %p181, %s180, 63
      %s183 = smul.addr %s182, 8
      %s184 = scalar_lea.vmem %s0, %s183
      %p185 = pneg %p36
      %p186 = pneg %p33
      %s187 = smul.u32 16, %s15
      %p188 = scmp.lt.s32.totalorder %s187, 63
      %s189 = scalar_select %p188, %s187, 63
      %s190 = smul.addr %s189, 8
      %s191 = scalar_lea.vmem %s1, %s190
      %p192 = pneg %p62
      %p193 = pneg %p59
      %p194 = pneg %p83
      %p195 = pneg %p80
      %p196 = pneg %p104
      %p197 = pneg %p101
      %p198 = pneg %p130
      %p199 = pneg %p127
      %s200 = smul.u32 16, %s15
      %p201 = scmp.lt.s32.totalorder %s200, 63
      %s202 = scalar_select %p201, %s200, 63
      %s203 = smul.addr %s202, 8
      %s204 = scalar_lea.vmem %s4, %s203
      %s205 = smul.u32 16, %s15
      %p206 = scmp.lt.s32.totalorder %s205, 63
      %s207 = scalar_select %p206, %s205, 63
      %s208 = smul.addr %s207, 8
      %s209 = scalar_lea.vmem %s0, %s208
      %s210 = smul.u32 16, %s15
      %s211 = smul.u32 16, %s15
      %p212 = scmp.lt.s32.totalorder %s211, 63
      %s213 = scalar_select %p212, %s211, 63
      %s214 = smul.addr %s213, 8
      %s215 = scalar_lea.vmem %s1, %s214
      %s216 = smul.u32 16, %s15
      %s217 = smul.u32 16, %s15
      %p218 = scmp.lt.s32.totalorder %s217, 63
      %s219 = scalar_select %p218, %s217, 63
      %s220 = smul.addr %s219, 8
      %s221 = scalar_lea.vmem %s4, %s220
      %s222 = smul.u32 16, %s15
      %v223 = vld [vmem:[%s209] sm:$0xff]
      %v224 = vld [vmem:[%s209 + $0x8] sm:$0xff]
      %v225 = vld [vmem:[%s209 + $0x10] sm:$0xff]
      %v226 = vld [vmem:[%s209 + $0x18] sm:$0xff]
      %v227 = vld [vmem:[%s209 + $0x20] sm:$0xff]
      %v228 = vld [vmem:[%s209 + $0x28] sm:$0xff]
      %v229 = vld [vmem:[%s209 + $0x30] sm:$0xff]
      %v230 = vld [vmem:[%s209 + $0x38] sm:$0xff]
      %v231 = vld [vmem:[%s209 + $0x40] sm:$0xff]
      %v232 = vld [vmem:[%s209 + $0x48] sm:$0xff]
      %v233 = vld [vmem:[%s209 + $0x50] sm:$0xff]
      %v234 = vld [vmem:[%s209 + $0x58] sm:$0xff]
      %v235 = vld [vmem:[%s209 + $0x60] sm:$0xff]
      %v236 = vld [vmem:[%s209 + $0x68] sm:$0xff]
      %v237 = vld [vmem:[%s209 + $0x70] sm:$0xff]
      %v238 = vld [vmem:[%s209 + $0x78] sm:$0xff]
      %v239 = vld [vmem:[%s2] sm:$0x1]
      %v241 = vlaneseq
      %v242 = vshrl.u32 %v241, 7
      %v243 = vsub.s32 0, %v242
      %v244 = vrot.slane %v239, %v243
      %v246 = vmul.f32 %v223, %v244
      %v247 = vmul.f32 %v224, %v244
      %v248 = vmul.f32 %v225, %v244
      %v249 = vmul.f32 %v226, %v244
      %v250 = vmul.f32 %v227, %v244
      %v251 = vmul.f32 %v228, %v244
      %v252 = vmul.f32 %v229, %v244
      %v253 = vmul.f32 %v230, %v244
      %v254 = vmul.f32 %v231, %v244
      %v255 = vmul.f32 %v232, %v244
      %v256 = vmul.f32 %v233, %v244
      %v257 = vmul.f32 %v234, %v244
      %v258 = vmul.f32 %v235, %v244
      %v259 = vmul.f32 %v236, %v244
      %v260 = vmul.f32 %v237, %v244
      %v261 = vmul.f32 %v238, %v244
      %v262 = vld [vmem:[%s3] sm:$0x1]
      %v264 = vlaneseq
      %v265 = vshrl.u32 %v264, 7
      %v266 = vsub.s32 0, %v265
      %v267 = vrot.slane %v262, %v266
      %v269 = vadd.f32 %v246, %v267
      %v270 = vadd.f32 %v247, %v267
      %v271 = vadd.f32 %v248, %v267
      %v272 = vadd.f32 %v249, %v267
      %v273 = vadd.f32 %v250, %v267
      %v274 = vadd.f32 %v251, %v267
      %v275 = vadd.f32 %v252, %v267
      %v276 = vadd.f32 %v253, %v267
      %v277 = vadd.f32 %v254, %v267
      %v278 = vadd.f32 %v255, %v267
      %v279 = vadd.f32 %v256, %v267
      %v280 = vadd.f32 %v257, %v267
      %v281 = vadd.f32 %v258, %v267
      %v282 = vadd.f32 %v259, %v267
      %v283 = vadd.f32 %v260, %v267
      %v284 = vadd.f32 %v261, %v267
      %v285 = vld [vmem:[%s215] sm:$0xff]
      %v286 = vld [vmem:[%s215 + $0x8] sm:$0xff]
      %v287 = vld [vmem:[%s215 + $0x10] sm:$0xff]
      %v288 = vld [vmem:[%s215 + $0x18] sm:$0xff]
      %v289 = vld [vmem:[%s215 + $0x20] sm:$0xff]
      %v290 = vld [vmem:[%s215 + $0x28] sm:$0xff]
      %v291 = vld [vmem:[%s215 + $0x30] sm:$0xff]
      %v292 = vld [vmem:[%s215 + $0x38] sm:$0xff]
      %v293 = vld [vmem:[%s215 + $0x40] sm:$0xff]
      %v294 = vld [vmem:[%s215 + $0x48] sm:$0xff]
      %v295 = vld [vmem:[%s215 + $0x50] sm:$0xff]
      %v296 = vld [vmem:[%s215 + $0x58] sm:$0xff]
      %v297 = vld [vmem:[%s215 + $0x60] sm:$0xff]
      %v298 = vld [vmem:[%s215 + $0x68] sm:$0xff]
      %v299 = vld [vmem:[%s215 + $0x70] sm:$0xff]
      %v300 = vld [vmem:[%s215 + $0x78] sm:$0xff]
      %v301 = vadd.f32 %v269, %v285
      %v302 = vadd.f32 %v270, %v286
      %v303 = vadd.f32 %v271, %v287
      %v304 = vadd.f32 %v272, %v288
      %v305 = vadd.f32 %v273, %v289
      %v306 = vadd.f32 %v274, %v290
      %v307 = vadd.f32 %v275, %v291
      %v308 = vadd.f32 %v276, %v292
      %v309 = vadd.f32 %v277, %v293
      %v310 = vadd.f32 %v278, %v294
      %v311 = vadd.f32 %v279, %v295
      %v312 = vadd.f32 %v280, %v296
      %v313 = vadd.f32 %v281, %v297
      %v314 = vadd.f32 %v282, %v298
      %v315 = vadd.f32 %v283, %v299
      %v316 = vadd.f32 %v284, %v300
      %v317 = vmax.f32 %v301, 0.0
      %v318 = vmax.f32 %v302, 0.0
      %v319 = vmax.f32 %v303, 0.0
      %v320 = vmax.f32 %v304, 0.0
      %v321 = vmax.f32 %v305, 0.0
      %v322 = vmax.f32 %v306, 0.0
      %v323 = vmax.f32 %v307, 0.0
      %v324 = vmax.f32 %v308, 0.0
      %v325 = vmax.f32 %v309, 0.0
      %v326 = vmax.f32 %v310, 0.0
      %v327 = vmax.f32 %v311, 0.0
      %v328 = vmax.f32 %v312, 0.0
      %v329 = vmax.f32 %v313, 0.0
      %v330 = vmax.f32 %v314, 0.0
      %v331 = vmax.f32 %v315, 0.0
      %v332 = vmax.f32 %v316, 0.0
      %333 = vst [vmem:[%s221] sm:$0xff] %v317
      %334 = vst [vmem:[%s221 + $0x8] sm:$0xff] %v318
      %335 = vst [vmem:[%s221 + $0x10] sm:$0xff] %v319
      %336 = vst [vmem:[%s221 + $0x18] sm:$0xff] %v320
      %337 = vst [vmem:[%s221 + $0x20] sm:$0xff] %v321
      %338 = vst [vmem:[%s221 + $0x28] sm:$0xff] %v322
      %339 = vst [vmem:[%s221 + $0x30] sm:$0xff] %v323
      %340 = vst [vmem:[%s221 + $0x38] sm:$0xff] %v324
      %341 = vst [vmem:[%s221 + $0x40] sm:$0xff] %v325
      %342 = vst [vmem:[%s221 + $0x48] sm:$0xff] %v326
      %343 = vst [vmem:[%s221 + $0x50] sm:$0xff] %v327
      %344 = vst [vmem:[%s221 + $0x58] sm:$0xff] %v328
      %345 = vst [vmem:[%s221 + $0x60] sm:$0xff] %v329
      %346 = vst [vmem:[%s221 + $0x68] sm:$0xff] %v330
      %347 = vst [vmem:[%s221 + $0x70] sm:$0xff] %v331
      %348 = vst [vmem:[%s221 + $0x78] sm:$0xff] %v332
      %s349 = smul.u32 16, %s15
      %p350 = scmp.lt.s32.totalorder %s349, 63
      %s351 = scalar_select %p350, %s349, 63
      %s352 = smul.addr %s351, 8
      %s353 = scalar_lea.vmem %s4, %s352
      // Predicated region
      $region37: #{bottleneck_pallas.7} parent=35 // pred_check
        %p354 = pneg %p127
      $region38: #{bottleneck_pallas.7} parent=35 // pred_check_branch
        %356 = sbr.rel (%p354) target = $region40
      $region39: #{bottleneck_pallas.7} parent=35 // pred_region
        %s357 = smul.u32 16, %s15
      $region40: #{bottleneck_pallas.7} parent=35 // pred_fallthru
        _
    $region36: #{bottleneck_pallas.7} parent=5 // pred_fallthru
      _
    %p358 = scmp.le.s32.totalorder 2, %s10
    // Predicated region
    $region41: #{bottleneck_pallas.7} parent=5 // pred_check
      %p359 = pneg %p358
    $region42: #{bottleneck_pallas.7} parent=5 // pred_check_branch
      %361 = sbr.rel (%p359) target = $region44
    $region43: #{bottleneck_pallas.7} parent=5 // pred_region
      %s362 = ssub.s32 %s10, 2
      // Predicated region
      $region45: #{bottleneck_pallas.7} parent=43 // pred_check
        %p363 = pneg %p133
      $region46: #{bottleneck_pallas.7} parent=43 // pred_check_branch
        %365 = sbr.rel (%p363) target = $region48
      $region47: #{bottleneck_pallas.7} parent=43 // pred_region
        %s366 = smul.u32 16, %s16
        %p367 = scmp.lt.s32.totalorder %s366, 63
        %s368 = scalar_select %p367, %s366, 63
        %s369 = smul.addr %s368, 8
        %s370 = scalar_lea.vmem %s4, %s369
      $region48: #{bottleneck_pallas.7} parent=43 // pred_fallthru
        _
    $region44: #{bottleneck_pallas.7} parent=5 // pred_fallthru
      _
  $region6: #{bottleneck_pallas.7} parent=0 // loop_footer
    %s14 = sadd.s32 1, %s10
  $region7: #{bottleneck_pallas.7} parent=0 // loop_footer_branch
    %9 = sbr.rel target = $region3
  $region8: #{bottleneck_pallas.7} parent=0 // loop_exit
    _

// kernel: bottleneck_pallas.6
$region0: #{bottleneck_pallas.6}
  #allocation0 [shape = 'u32[]', space=smem, size = 0x4, offset = 0x4, fixed_abs, tag = 'smem constant byte address 0x4 - core index']
  #allocation1 [shape = 'u32[144,128]{1,0:T(1,128)}', space=vmem, size = 0x12000, scoped, tag = 'internal scratch']
  %s0 = inlined_call_operand.vmem [shape: f32[512,128], index: 0, kind: input, shape index: {}]
  %s1 = inlined_call_operand.vmem [shape: f32[1,128], index: 1, kind: input, shape index: {}]
  %s2 = inlined_call_operand.vmem [shape: f32[1,128], index: 2, kind: input, shape index: {}]
  %s3 = inlined_call_operand.vmem [shape: bf16[128,128], index: 3, kind: input, shape index: {}]
  %s4 = inlined_call_operand.vmem [shape: f32[512,128], index: 4, kind: output, shape index: {0}]
  %s5 = inlined_call_operand.vmem [shape: f32[4,2,128], index: 5, kind: output, shape index: {1}]
  %6 = xla_tuple %s4, %s5
  %s7 = sld [smem:[#allocation0]]
  $region57: #{bottleneck_pallas.6} parent=0
    _
  %s9 = ssub.s32 1, %s7
  %s10 = scalar_select 0, %s9, %s7
  loop: start=0, step=1, limit=6
  $region2: #{bottleneck_pallas.6} parent=0 // loop_pre_header
    _
  $region3: #{bottleneck_pallas.6} parent=0 // loop_header
    %s12 = sphi 0, %s16
    %p13 = scmp.ge.s32.totalorder %s12, 6
    %s22 = sphi 0, %s24
    %s25 = sphi 0, %s22
    %s26 = sphi 0, %s25
    %s42 = sphi 0, %s26
    %s46 = sphi 0, %s46
    %s48 = sphi 0, %s46
    %s49 = sphi 0, %s48
    %s63 = sphi 0, %s49
    %s67 = sphi 0, %s67
    %s69 = sphi 0, %s67
    %s70 = sphi 0, %s69
    %s84 = sphi 0, %s70
    %s88 = sphi 0, %s88
    %s90 = sphi 0, %s88
    %s91 = sphi 0, %s90
    %s105 = sphi 0, %s91
    %s111 = sphi 0, %s113
    %s114 = sphi 0, %s111
    %s115 = sphi 0, %s114
    %s131 = sphi 0, %s115
    %s137 = sphi 0, %s139
    %s140 = sphi 0, %s137
    %s141 = sphi 0, %s140
    %s157 = sphi 0, %s141
  $region4: #{bottleneck_pallas.6} parent=0 // loop_header_branch
    %15 = sbr.rel (%p13) target = $region8
  $region5: #{bottleneck_pallas.6} parent=0 // loop_body
    %s17 = ssub.s32 %s12, 1
    %s18 = ssub.s32 %s12, 2
    %s19 = sadd.s32 %s12, 1
    %s20 = ssub.s32 %s12, %s19
    %p21 = scmp.eq.s32.totalorder %s20, 0
    %s23 = sadd.s32 %s22, 1
    %s24 = scalar_select %p21, %s22, %s23
    %p27 = pneg %p21
    %p28 = scmp.eq.s32.totalorder %s12, 3
    %p29 = por %p27, %p28
    %p30 = scmp.ne.s32.totalorder %s22, %s25
    %p31 = scmp.eq.s32.totalorder %s12, 0
    %p32 = por %p30, %p31
    %p33 = scmp.ne.s32.totalorder %s22, %s25
    %p34 = scmp.eq.s32.totalorder %s17, 3
    %p35 = por %p33, %p34
    %p36 = scmp.ne.s32.totalorder %s25, %s26
    %p37 = scmp.eq.s32.totalorder %s17, 0
    %p38 = por %p36, %p37
    %p39 = scmp.ne.s32.totalorder %s25, %s26
    %p40 = scmp.eq.s32.totalorder %s18, 3
    %p41 = por %p39, %p40
    %p43 = scmp.ne.s32.totalorder %s26, %s42
    %p44 = scmp.eq.s32.totalorder %s18, 0
    %p45 = por %p43, %p44
    %s47 = sadd.s32 %s46, 1
    %p50 = scmp.eq.s32.totalorder %s12, 3
    %p51 = scmp.ne.s32.totalorder %s46, %s48
    %p52 = scmp.eq.s32.totalorder %s12, 0
    %p53 = por %p51, %p52
    %p54 = scmp.ne.s32.totalorder %s46, %s48
    %p55 = scmp.eq.s32.totalorder %s17, 3
    %p56 = por %p54, %p55
    %p57 = scmp.ne.s32.totalorder %s48, %s49
    %p58 = scmp.eq.s32.totalorder %s17, 0
    %p59 = por %p57, %p58
    %p60 = scmp.ne.s32.totalorder %s48, %s49
    %p61 = scmp.eq.s32.totalorder %s18, 3
    %p62 = por %p60, %p61
    %p64 = scmp.ne.s32.totalorder %s49, %s63
    %p65 = scmp.eq.s32.totalorder %s18, 0
    %p66 = por %p64, %p65
    %s68 = sadd.s32 %s67, 1
    %p71 = scmp.eq.s32.totalorder %s12, 3
    %p72 = scmp.ne.s32.totalorder %s67, %s69
    %p73 = scmp.eq.s32.totalorder %s12, 0
    %p74 = por %p72, %p73
    %p75 = scmp.ne.s32.totalorder %s67, %s69
    %p76 = scmp.eq.s32.totalorder %s17, 3
    %p77 = por %p75, %p76
    %p78 = scmp.ne.s32.totalorder %s69, %s70
    %p79 = scmp.eq.s32.totalorder %s17, 0
    %p80 = por %p78, %p79
    %p81 = scmp.ne.s32.totalorder %s69, %s70
    %p82 = scmp.eq.s32.totalorder %s18, 3
    %p83 = por %p81, %p82
    %p85 = scmp.ne.s32.totalorder %s70, %s84
    %p86 = scmp.eq.s32.totalorder %s18, 0
    %p87 = por %p85, %p86
    %s89 = sadd.s32 %s88, 1
    %p92 = scmp.eq.s32.totalorder %s12, 3
    %p93 = scmp.ne.s32.totalorder %s88, %s90
    %p94 = scmp.eq.s32.totalorder %s12, 0
    %p95 = por %p93, %p94
    %p96 = scmp.ne.s32.totalorder %s88, %s90
    %p97 = scmp.eq.s32.totalorder %s17, 3
    %p98 = por %p96, %p97
    %p99 = scmp.ne.s32.totalorder %s90, %s91
    %p100 = scmp.eq.s32.totalorder %s17, 0
    %p101 = por %p99, %p100
    %p102 = scmp.ne.s32.totalorder %s90, %s91
    %p103 = scmp.eq.s32.totalorder %s18, 3
    %p104 = por %p102, %p103
    %p106 = scmp.ne.s32.totalorder %s91, %s105
    %p107 = scmp.eq.s32.totalorder %s18, 0
    %p108 = por %p106, %p107
    %s109 = ssub.s32 %s12, %s19
    %p110 = scmp.eq.s32.totalorder %s109, 0
    %s112 = sadd.s32 %s111, 1
    %s113 = scalar_select %p110, %s111, %s112
    %p116 = pneg %p110
    %p117 = scmp.eq.s32.totalorder %s12, 3
    %p118 = por %p116, %p117
    %p119 = scmp.ne.s32.totalorder %s111, %s114
    %p120 = scmp.eq.s32.totalorder %s12, 0
    %p121 = por %p119, %p120
    %p122 = scmp.ne.s32.totalorder %s111, %s114
    %p123 = scmp.eq.s32.totalorder %s17, 3
    %p124 = por %p122, %p123
    %p125 = scmp.ne.s32.totalorder %s114, %s115
    %p126 = scmp.eq.s32.totalorder %s17, 0
    %p127 = por %p125, %p126
    %p128 = scmp.ne.s32.totalorder %s114, %s115
    %p129 = scmp.eq.s32.totalorder %s18, 3
    %p130 = por %p128, %p129
    %p132 = scmp.ne.s32.totalorder %s115, %s131
    %p133 = scmp.eq.s32.totalorder %s18, 0
    %p134 = por %p132, %p133
    %s135 = ssub.s32 %s12, %s19
    %p136 = scmp.eq.s32.totalorder %s135, 0
    %s138 = sadd.s32 %s137, 1
    %s139 = scalar_select %p136, %s137, %s138
    %p142 = pneg %p136
    %p143 = scmp.eq.s32.totalorder %s12, 3
    %p144 = por %p142, %p143
    %p145 = scmp.ne.s32.totalorder %s137, %s140
    %p146 = scmp.eq.s32.totalorder %s12, 0
    %p147 = por %p145, %p146
    %p148 = scmp.ne.s32.totalorder %s137, %s140
    %p149 = scmp.eq.s32.totalorder %s17, 3
    %p150 = por %p148, %p149
    %p151 = scmp.ne.s32.totalorder %s140, %s141
    %p152 = scmp.eq.s32.totalorder %s17, 0
    %p153 = por %p151, %p152
    %p154 = scmp.ne.s32.totalorder %s140, %s141
    %p155 = scmp.eq.s32.totalorder %s18, 3
    %p156 = por %p154, %p155
    %p158 = scmp.ne.s32.totalorder %s141, %s157
    %p159 = scmp.eq.s32.totalorder %s18, 0
    %p160 = por %p158, %p159
    %p161 = scmp.le.s32.totalorder 1, %s12
    %p162 = scmp.lt.s32.totalorder %s12, 5
    %p163 = pnand %p161, %p162
    %p164 = pneg %p163
    // Predicated region
    $region9: #{bottleneck_pallas.6} parent=5 // pred_check
      _
    $region10: #{bottleneck_pallas.6} parent=5 // pred_check_branch
      %166 = sbr.rel (%p163) target = $region12
    $region11: #{bottleneck_pallas.6} parent=5 // pred_region
      %s167 = ssub.s32 %s12, 1
      // Predicated region
      $region13: #{bottleneck_pallas.6} parent=11 // pred_check
        %p168 = pneg %p59
      $region14: #{bottleneck_pallas.6} parent=11 // pred_check_branch
        %170 = sbr.rel (%p168) target = $region16
      $region15: #{bottleneck_pallas.6} parent=11 // pred_region
        _
      $region16: #{bottleneck_pallas.6} parent=11 // pred_fallthru
        _
      // Predicated region
      $region17: #{bottleneck_pallas.6} parent=11 // pred_check
        %p171 = pneg %p80
      $region18: #{bottleneck_pallas.6} parent=11 // pred_check_branch
        %173 = sbr.rel (%p171) target = $region20
      $region19: #{bottleneck_pallas.6} parent=11 // pred_region
        _
      $region20: #{bottleneck_pallas.6} parent=11 // pred_fallthru
        _
      // Predicated region
      $region21: #{bottleneck_pallas.6} parent=11 // pred_check
        %p174 = pneg %p101
      $region22: #{bottleneck_pallas.6} parent=11 // pred_check_branch
        %176 = sbr.rel (%p174) target = $region24
      $region23: #{bottleneck_pallas.6} parent=11 // pred_region
        _
      $region24: #{bottleneck_pallas.6} parent=11 // pred_fallthru
        _
    $region12: #{bottleneck_pallas.6} parent=5 // pred_fallthru
      _
    %p177 = scmp.lt.s32.totalorder %s12, 4
    // Predicated region
    $region25: #{bottleneck_pallas.6} parent=5 // pred_check
      %p178 = pneg %p177
    $region26: #{bottleneck_pallas.6} parent=5 // pred_check_branch
      %180 = sbr.rel (%p178) target = $region28
    $region27: #{bottleneck_pallas.6} parent=5 // pred_region
      // Predicated region
      $region29: #{bottleneck_pallas.6} parent=27 // pred_check
        %p181 = pneg %p32
      $region30: #{bottleneck_pallas.6} parent=27 // pred_check_branch
        %183 = sbr.rel (%p181) target = $region32
      $region31: #{bottleneck_pallas.6} parent=27 // pred_region
        %s184 = smul.u32 16, %s12
        %p185 = scmp.lt.s32.totalorder %s184, 63
        %s186 = scalar_select %p185, %s184, 63
        %s187 = smul.addr %s186, 8
        %s188 = scalar_lea.vmem %s0, %s187
        %s189 = smul.u32 16, %s12
      $region32: #{bottleneck_pallas.6} parent=27 // pred_fallthru
        _
    $region28: #{bottleneck_pallas.6} parent=5 // pred_fallthru
      _
    %p190 = scmp.le.s32.totalorder 1, %s12
    %p191 = scmp.lt.s32.totalorder %s12, 5
    %p192 = pnand %p190, %p191
    %p193 = pneg %p192
    // Predicated region
    $region33: #{bottleneck_pallas.6} parent=5 // pred_check
      _
    $region34: #{bottleneck_pallas.6} parent=5 // pred_check_branch
      %195 = sbr.rel (%p192) target = $region36
    $region35: #{bottleneck_pallas.6} parent=5 // pred_region
      %s196 = ssub.s32 %s12, 1
      %s197 = smul.u32 16, %s17
      %p198 = scmp.lt.s32.totalorder %s197, 63
      %s199 = scalar_select %p198, %s197, 63
      %s200 = smul.addr %s199, 8
      %s201 = scalar_lea.vmem %s0, %s200
      %p202 = pneg %p38
      %p203 = pneg %p35
      %p204 = pneg %p59
      %p205 = pneg %p56
      %p206 = pneg %p80
      %p207 = pneg %p77
      %p208 = pneg %p101
      %p209 = pneg %p98
      %p210 = pneg %p127
      %p211 = pneg %p124
      %s212 = smul.u32 16, %s17
      %p213 = scmp.lt.s32.totalorder %s212, 63
      %s214 = scalar_select %p213, %s212, 63
      %s215 = smul.addr %s214, 8
      %s216 = scalar_lea.vmem %s4, %s215
      %p217 = pneg %p153
      %p218 = pneg %p150
      %p219 = scmp.lt.s32.totalorder %s17, 3
      %s220 = scalar_select %p219, %s17, 3
      %s221 = smul.addr %s220, 2
      %s222 = scalar_lea.vmem %s5, %s221
      %s223 = smul.u32 16, %s17
      %p224 = scmp.lt.s32.totalorder %s223, 63
      %s225 = scalar_select %p224, %s223, 63
      %s226 = smul.addr %s225, 8
      %s227 = scalar_lea.vmem %s0, %s226
      %s228 = smul.u32 16, %s17
      %s229 = smul.u32 16, %s17
      %p230 = scmp.lt.s32.totalorder %s229, 63
      %s231 = scalar_select %p230, %s229, 63
      %s232 = smul.addr %s231, 8
      %s233 = scalar_lea.vmem %s4, %s232
      %s234 = smul.u32 16, %s17
      %p235 = scmp.lt.s32.totalorder %s17, 3
      %s236 = scalar_select %p235, %s17, 3
      %s237 = smul.addr %s236, 2
      %s238 = scalar_lea.vmem %s5, %s237
      %v240 = vld [vmem:[%s227] sm:$0xff]
      %v241 = vld [vmem:[%s227 + $0x8] sm:$0xff]
      %v242 = vld [vmem:[%s227 + $0x10] sm:$0xff]
      %v243 = vld [vmem:[%s227 + $0x18] sm:$0xff]
      %v244 = vld [vmem:[%s227 + $0x20] sm:$0xff]
      %v245 = vld [vmem:[%s227 + $0x28] sm:$0xff]
      %v246 = vld [vmem:[%s227 + $0x30] sm:$0xff]
      %v247 = vld [vmem:[%s227 + $0x38] sm:$0xff]
      %v248 = vld [vmem:[%s227 + $0x40] sm:$0xff]
      %v249 = vld [vmem:[%s227 + $0x48] sm:$0xff]
      %v250 = vld [vmem:[%s227 + $0x50] sm:$0xff]
      %v251 = vld [vmem:[%s227 + $0x58] sm:$0xff]
      %v252 = vld [vmem:[%s227 + $0x60] sm:$0xff]
      %v253 = vld [vmem:[%s227 + $0x68] sm:$0xff]
      %v254 = vld [vmem:[%s227 + $0x70] sm:$0xff]
      %v255 = vld [vmem:[%s227 + $0x78] sm:$0xff]
      %v256 = vld [vmem:[%s1] sm:$0x1]
      %v258 = vlaneseq
      %v259 = vshrl.u32 %v258, 7
      %v260 = vsub.s32 0, %v259
      %v261 = vrot.slane %v256, %v260
      %v263 = vmul.f32 %v240, %v261
      %v264 = vmul.f32 %v241, %v261
      %v265 = vmul.f32 %v242, %v261
      %v266 = vmul.f32 %v243, %v261
      %v267 = vmul.f32 %v244, %v261
      %v268 = vmul.f32 %v245, %v261
      %v269 = vmul.f32 %v246, %v261
      %v270 = vmul.f32 %v247, %v261
      %v271 = vmul.f32 %v248, %v261
      %v272 = vmul.f32 %v249, %v261
      %v273 = vmul.f32 %v250, %v261
      %v274 = vmul.f32 %v251, %v261
      %v275 = vmul.f32 %v252, %v261
      %v276 = vmul.f32 %v253, %v261
      %v277 = vmul.f32 %v254, %v261
      %v278 = vmul.f32 %v255, %v261
      %v279 = vld [vmem:[%s2] sm:$0x1]
      %v281 = vlaneseq
      %v282 = vshrl.u32 %v281, 7
      %v283 = vsub.s32 0, %v282
      %v284 = vrot.slane %v279, %v283
      %v286 = vadd.f32 %v263, %v284
      %v287 = vadd.f32 %v264, %v284
      %v288 = vadd.f32 %v265, %v284
      %v289 = vadd.f32 %v266, %v284
      %v290 = vadd.f32 %v267, %v284
      %v291 = vadd.f32 %v268, %v284
      %v292 = vadd.f32 %v269, %v284
      %v293 = vadd.f32 %v270, %v284
      %v294 = vadd.f32 %v271, %v284
      %v295 = vadd.f32 %v272, %v284
      %v296 = vadd.f32 %v273, %v284
      %v297 = vadd.f32 %v274, %v284
      %v298 = vadd.f32 %v275, %v284
      %v299 = vadd.f32 %v276, %v284
      %v300 = vadd.f32 %v277, %v284
      %v301 = vadd.f32 %v278, %v284
      %v302 = vmax.f32 %v286, 0.0
      %v303 = vmax.f32 %v287, 0.0
      %v304 = vmax.f32 %v288, 0.0
      %v305 = vmax.f32 %v289, 0.0
      %v306 = vmax.f32 %v290, 0.0
      %v307 = vmax.f32 %v291, 0.0
      %v308 = vmax.f32 %v292, 0.0
      %v309 = vmax.f32 %v293, 0.0
      %v310 = vmax.f32 %v294, 0.0
      %v311 = vmax.f32 %v295, 0.0
      %v312 = vmax.f32 %v296, 0.0
      %v313 = vmax.f32 %v297, 0.0
      %v314 = vmax.f32 %v298, 0.0
      %v315 = vmax.f32 %v299, 0.0
      %v316 = vmax.f32 %v300, 0.0
      %v317 = vmax.f32 %v301, 0.0
      %v318 = vpack.c.bf16 %v303, %v302
      %v319 = vpack.c.bf16 %v305, %v304
      %v320 = vpack.c.bf16 %v307, %v306
      %v321 = vpack.c.bf16 %v309, %v308
      %v322 = vpack.c.bf16 %v311, %v310
      %v323 = vpack.c.bf16 %v313, %v312
      %v324 = vpack.c.bf16 %v315, %v314
      %v325 = vpack.c.bf16 %v317, %v316
      %v326 = vld [vmem:[%s3] sm:$0xf]
      %v327 = vld [vmem:[%s3 + $0x4] sm:$0xf]
      %v328 = vld [vmem:[%s3 + $0x8] sm:$0xf]
      %v329 = vld [vmem:[%s3 + $0xc] sm:$0xf]
      %v330 = vld [vmem:[%s3 + $0x10] sm:$0xf]
      %v331 = vld [vmem:[%s3 + $0x14] sm:$0xf]
      %v332 = vld [vmem:[%s3 + $0x18] sm:$0xf]
      %v333 = vld [vmem:[%s3 + $0x1c] sm:$0xf]
      %v334 = vld [vmem:[%s3 + $0x20] sm:$0xf]
      %v335 = vld [vmem:[%s3 + $0x24] sm:$0xf]
      %v336 = vld [vmem:[%s3 + $0x28] sm:$0xf]
      %v337 = vld [vmem:[%s3 + $0x2c] sm:$0xf]
      %v338 = vld [vmem:[%s3 + $0x30] sm:$0xf]
      %v339 = vld [vmem:[%s3 + $0x34] sm:$0xf]
      %v340 = vld [vmem:[%s3 + $0x38] sm:$0xf]
      %v341 = vld [vmem:[%s3 + $0x3c] sm:$0xf]
      %v358 = vunpack.c.l.b16 %v326
      %v359 = vunpack.c.l.b16 %v327
      %v360 = vunpack.c.l.b16 %v328
      %v361 = vunpack.c.l.b16 %v329
      %v362 = vunpack.c.l.b16 %v330
      %v363 = vunpack.c.l.b16 %v331
      %v364 = vunpack.c.l.b16 %v332
      %v365 = vunpack.c.l.b16 %v333
      %v366 = vunpack.c.l.b16 %v334
      %v367 = vunpack.c.l.b16 %v335
      %v368 = vunpack.c.l.b16 %v336
      %v369 = vunpack.c.l.b16 %v337
      %v370 = vunpack.c.l.b16 %v338
      %v371 = vunpack.c.l.b16 %v339
      %v372 = vunpack.c.l.b16 %v340
      %v373 = vunpack.c.l.b16 %v341
      %v374 = vpack.c.b16 %v359, %v358
      %v375 = vpack.c.b16 %v361, %v360
      %v376 = vpack.c.b16 %v363, %v362
      %v377 = vpack.c.b16 %v365, %v364
      %v378 = vpack.c.b16 %v367, %v366
      %v379 = vpack.c.b16 %v369, %v368
      %v380 = vpack.c.b16 %v371, %v370
      %v381 = vpack.c.b16 %v373, %v372
      %390 = vmatprep.subr.bf16.mxu0 0
      %391 = vmatpush1.bf16.msra.mxu0 %v374
      %392 = vmatprep.subr.bf16.mxu0 0
      %393 = vmatpush1.bf16.msra.mxu0 %v375
      %394 = vmatprep.subr.bf16.mxu0 0
      %395 = vmatpush1.bf16.msra.mxu0 %v376
      %396 = vmatprep.subr.bf16.mxu0 0
      %397 = vmatpush1.bf16.msra.mxu0 %v377
      %398 = vmatprep.subr.bf16.mxu0 0
      %399 = vmatpush1.bf16.msra.mxu0 %v378
      %400 = vmatprep.subr.bf16.mxu0 0
      %401 = vmatpush1.bf16.msra.mxu0 %v379
      %402 = vmatprep.subr.bf16.mxu0 0
      %403 = vmatpush1.bf16.msra.mxu0 %v380
      %404 = vmatprep.subr.bf16.mxu0 0
      %405 = vmatpush1.bf16.msra.mxu0 %v381
      %406 = vmatprep.subr.bf16.mxu0 0
      %407 = vmatpush1.bf16.msra.mxu0 0
      %408 = vmatprep.subr.bf16.mxu0 0
      %409 = vmatpush1.bf16.msra.mxu0 0
      %410 = vmatprep.subr.bf16.mxu0 0
      %411 = vmatpush1.bf16.msra.mxu0 0
      %412 = vmatprep.subr.bf16.mxu0 0
      %413 = vmatpush1.bf16.msra.mxu0 0
      %414 = vmatprep.subr.bf16.mxu0 0
      %415 = vmatpush1.bf16.msra.mxu0 0
      %416 = vmatprep.subr.bf16.mxu0 0
      %417 = vmatpush1.bf16.msra.mxu0 0
      %418 = vmatprep.subr.bf16.mxu0 0
      %419 = vmatpush1.bf16.msra.mxu0 0
      %420 = vmatprep.subr.bf16.mxu0 0
      %421 = vmatpush1.bf16.msra.mxu0 0
      %422 = vmatprep.mubr.bf16.mxu0 0
      %423 = vmatmul.mubr.bf16.gmra.mrb[0].mxu0 %v318
      %v424 = vpop.f32.mrb[0].mxu0
      %v425 = vadd.f32 0.0, %v424
      %v426 = vpop.f32.mrb[0].mxu0
      %v427 = vpop.f32.mrb[0].mxu0
      %v428 = vadd.f32 0.0, %v427
      %v429 = vpop.f32.mrb[0].mxu0
      %430 = vmatprep.mubr.bf16.mxu0 0
      %431 = vmatmul.mubr.bf16.gmra.mrb[0].mxu0 %v319
      %v432 = vpop.f32.mrb[0].mxu0
      %v433 = vadd.f32 0.0, %v432
      %v434 = vpop.f32.mrb[0].mxu0
      %v435 = vpop.f32.mrb[0].mxu0
      %v436 = vadd.f32 0.0, %v435
      %v437 = vpop.f32.mrb[0].mxu0
      %438 = vmatprep.mubr.bf16.mxu0 0
      %439 = vmatmul.mubr.bf16.gmra.mrb[0].mxu0 %v320
      %v440 = vpop.f32.mrb[0].mxu0
      %v441 = vadd.f32 0.0, %v440
      %v442 = vpop.f32.mrb[0].mxu0
      %v443 = vpop.f32.mrb[0].mxu0
      %v444 = vadd.f32 0.0, %v443
      %v445 = vpop.f32.mrb[0].mxu0
      %446 = vmatprep.mubr.bf16.mxu0 0
      %447 = vmatmul.mubr.bf16.gmra.mrb[0].mxu0 %v321
      %v448 = vpop.f32.mrb[0].mxu0
      %v449 = vadd.f32 0.0, %v448
      %v450 = vpop.f32.mrb[0].mxu0
      %v451 = vpop.f32.mrb[0].mxu0
      %v452 = vadd.f32 0.0, %v451
      %v453 = vpop.f32.mrb[0].mxu0
      %454 = vmatprep.mubr.bf16.mxu0 0
      %455 = vmatmul.mubr.bf16.gmra.mrb[0].mxu0 %v322
      %v456 = vpop.f32.mrb[0].mxu0
      %v457 = vadd.f32 0.0, %v456
      %v458 = vpop.f32.mrb[0].mxu0
      %v459 = vpop.f32.mrb[0].mxu0
      %v460 = vadd.f32 0.0, %v459
      %v461 = vpop.f32.mrb[0].mxu0
      %462 = vmatprep.mubr.bf16.mxu0 0
      %463 = vmatmul.mubr.bf16.gmra.mrb[0].mxu0 %v323
      %v464 = vpop.f32.mrb[0].mxu0
      %v465 = vadd.f32 0.0, %v464
      %v466 = vpop.f32.mrb[0].mxu0
      %v467 = vpop.f32.mrb[0].mxu0
      %v468 = vadd.f32 0.0, %v467
      %v469 = vpop.f32.mrb[0].mxu0
      %470 = vmatprep.mubr.bf16.mxu0 0
      %471 = vmatmul.mubr.bf16.gmra.mrb[0].mxu0 %v324
      %v472 = vpop.f32.mrb[0].mxu0
      %v473 = vadd.f32 0.0, %v472
      %v474 = vpop.f32.mrb[0].mxu0
      %v475 = vpop.f32.mrb[0].mxu0
      %v476 = vadd.f32 0.0, %v475
      %v477 = vpop.f32.mrb[0].mxu0
      %478 = vmatprep.mubr.bf16.mxu0 0
      %479 = vmatmul.mubr.bf16.gmra.mrb[0].mxu0 %v325
      %v480 = vpop.f32.mrb[0].mxu0
      %v481 = vadd.f32 0.0, %v480
      %v482 = vpop.f32.mrb[0].mxu0
      %v483 = vpop.f32.mrb[0].mxu0
      %v484 = vadd.f32 0.0, %v483
      %v485 = vpop.f32.mrb[0].mxu0
      %486 = vdwg.mxu0
      %487 = vst [vmem:[%s233] sm:$0xff] %v425
      %488 = vst [vmem:[%s233 + $0x8] sm:$0xff] %v428
      %489 = vst [vmem:[%s233 + $0x10] sm:$0xff] %v433
      %490 = vst [vmem:[%s233 + $0x18] sm:$0xff] %v436
      %491 = vst [vmem:[%s233 + $0x20] sm:$0xff] %v441
      %492 = vst [vmem:[%s233 + $0x28] sm:$0xff] %v444
      %493 = vst [vmem:[%s233 + $0x30] sm:$0xff] %v449
      %494 = vst [vmem:[%s233 + $0x38] sm:$0xff] %v452
      %495 = vst [vmem:[%s233 + $0x40] sm:$0xff] %v457
      %496 = vst [vmem:[%s233 + $0x48] sm:$0xff] %v460
      %497 = vst [vmem:[%s233 + $0x50] sm:$0xff] %v465
      %498 = vst [vmem:[%s233 + $0x58] sm:$0xff] %v468
      %499 = vst [vmem:[%s233 + $0x60] sm:$0xff] %v473
      %500 = vst [vmem:[%s233 + $0x68] sm:$0xff] %v476
      %501 = vst [vmem:[%s233 + $0x70] sm:$0xff] %v481
      %502 = vst [vmem:[%s233 + $0x78] sm:$0xff] %v484
      %v503 = vadd.f32 %v425, %v428
      %v504 = vadd.f32 %v503, %v433
      %v505 = vadd.f32 %v504, %v436
      %v506 = vadd.f32 %v505, %v441
      %v507 = vadd.f32 %v506, %v444
      %v508 = vadd.f32 %v507, %v449
      %v509 = vadd.f32 %v508, %v452
      %v510 = vadd.f32 %v509, %v457
      %v511 = vadd.f32 %v510, %v460
      %v512 = vadd.f32 %v511, %v465
      %v513 = vadd.f32 %v512, %v468
      %v514 = vadd.f32 %v513, %v473
      %v515 = vadd.f32 %v514, %v476
      %v516 = vadd.f32 %v515, %v481
      %v517 = vadd.f32 %v516, %v484
      %v518 = vrot.slane %v517, 4
      %v519 = vadd.f32 %v517, %v518
      %v520 = vrot.slane %v519, 2
      %v521 = vadd.f32 %v519, %v520
      %v522 = vrot.slane %v521, 1
      %v523 = vadd.f32 %v521, %v522
      %524 = vst [vmem:[%s238] sm:$0x1] %v523
      %v525 = vmul.f32 %v425, %v425
      %v526 = vmul.f32 %v428, %v428
      %v527 = vmul.f32 %v433, %v433
      %v528 = vmul.f32 %v436, %v436
      %v529 = vmul.f32 %v441, %v441
      %v530 = vmul.f32 %v444, %v444
      %v531 = vmul.f32 %v449, %v449
      %v532 = vmul.f32 %v452, %v452
      %v533 = vmul.f32 %v457, %v457
      %v534 = vmul.f32 %v460, %v460
      %v535 = vmul.f32 %v465, %v465
      %v536 = vmul.f32 %v468, %v468
      %v537 = vmul.f32 %v473, %v473
      %v538 = vmul.f32 %v476, %v476
      %v539 = vmul.f32 %v481, %v481
      %v540 = vmul.f32 %v484, %v484
      %v541 = vadd.f32 %v525, %v526
      %v542 = vadd.f32 %v541, %v527
      %v543 = vadd.f32 %v542, %v528
      %v544 = vadd.f32 %v543, %v529
      %v545 = vadd.f32 %v544, %v530
      %v546 = vadd.f32 %v545, %v531
      %v547 = vadd.f32 %v546, %v532
      %v548 = vadd.f32 %v547, %v533
      %v549 = vadd.f32 %v548, %v534
      %v550 = vadd.f32 %v549, %v535
      %v551 = vadd.f32 %v550, %v536
      %v552 = vadd.f32 %v551, %v537
      %v553 = vadd.f32 %v552, %v538
      %v554 = vadd.f32 %v553, %v539
      %v555 = vadd.f32 %v554, %v540
      %v556 = vrot.slane %v555, 4
      %v557 = vadd.f32 %v555, %v556
      %v558 = vrot.slane %v557, 2
      %v559 = vadd.f32 %v557, %v558
      %v560 = vrot.slane %v559, 1
      %v561 = vadd.f32 %v559, %v560
      %562 = vst [vmem:[%s238 + $0x1] sm:$0x1] %v561
      %s563 = smul.u32 16, %s17
      %p564 = scmp.lt.s32.totalorder %s563, 63
      %s565 = scalar_select %p564, %s563, 63
      %s566 = smul.addr %s565, 8
      %s567 = scalar_lea.vmem %s4, %s566
      %p568 = scmp.lt.s32.totalorder %s17, 3
      %s569 = scalar_select %p568, %s17, 3
      %s570 = smul.addr %s569, 2
      %s571 = scalar_lea.vmem %s5, %s570
      // Predicated region
      $region37: #{bottleneck_pallas.6} parent=35 // pred_check
        %p572 = pneg %p124
      $region38: #{bottleneck_pallas.6} parent=35 // pred_check_branch
        %574 = sbr.rel (%p572) target = $region40
      $region39: #{bottleneck_pallas.6} parent=35 // pred_region
        %s575 = smul.u32 16, %s17
      $region40: #{bottleneck_pallas.6} parent=35 // pred_fallthru
        _
      // Predicated region
      $region41: #{bottleneck_pallas.6} parent=35 // pred_check
        %p576 = pneg %p150
      $region42: #{bottleneck_pallas.6} parent=35 // pred_check_branch
        %578 = sbr.rel (%p576) target = $region44
      $region43: #{bottleneck_pallas.6} parent=35 // pred_region
        _
      $region44: #{bottleneck_pallas.6} parent=35 // pred_fallthru
        _
    $region36: #{bottleneck_pallas.6} parent=5 // pred_fallthru
      _
    %p579 = scmp.le.s32.totalorder 2, %s12
    // Predicated region
    $region45: #{bottleneck_pallas.6} parent=5 // pred_check
      %p580 = pneg %p579
    $region46: #{bottleneck_pallas.6} parent=5 // pred_check_branch
      %582 = sbr.rel (%p580) target = $region48
    $region47: #{bottleneck_pallas.6} parent=5 // pred_region
      %s583 = ssub.s32 %s12, 2
      // Predicated region
      $region49: #{bottleneck_pallas.6} parent=47 // pred_check
        %p584 = pneg %p130
      $region50: #{bottleneck_pallas.6} parent=47 // pred_check_branch
        %586 = sbr.rel (%p584) target = $region52
      $region51: #{bottleneck_pallas.6} parent=47 // pred_region
        %s587 = smul.u32 16, %s18
        %p588 = scmp.lt.s32.totalorder %s587, 63
        %s589 = scalar_select %p588, %s587, 63
        %s590 = smul.addr %s589, 8
        %s591 = scalar_lea.vmem %s4, %s590
      $region52: #{bottleneck_pallas.6} parent=47 // pred_fallthru
        _
      // Predicated region
      $region53: #{bottleneck_pallas.6} parent=47 // pred_check
        %p592 = pneg %p156
      $region54: #{bottleneck_pallas.6} parent=47 // pred_check_branch
        %594 = sbr.rel (%p592) target = $region56
      $region55: #{bottleneck_pallas.6} parent=47 // pred_region
        %p595 = scmp.lt.s32.totalorder %s18, 3
        %s596 = scalar_select %p595, %s18, 3
        %s597 = smul.addr %s596, 2
        %s598 = scalar_lea.vmem %s5, %s597
      $region56: #{bottleneck_pallas.6} parent=47 // pred_fallthru
        _
    $region48: #{bottleneck_pallas.6} parent=5 // pred_fallthru
      _
  $region6: #{bottleneck_pallas.6} parent=0 // loop_footer
    %s16 = sadd.s32 1, %s12
  $region7: #{bottleneck_pallas.6} parent=0 // loop_footer_branch
    %11 = sbr.rel target = $region3
  $region8: #{bottleneck_pallas.6} parent=0 // loop_exit
    _

// kernel: bottleneck_pallas.5
$region0: #{bottleneck_pallas.5}
  #allocation0 [shape = 'u32[]', space=smem, size = 0x4, offset = 0x4, fixed_abs, tag = 'smem constant byte address 0x4 - core index']
  #allocation1 [shape = 'u32[144,128]{1,0:T(1,128)}', space=vmem, size = 0x12000, scoped, tag = 'internal scratch']
  #allocation2 [shape = 'f32[18,18,128]{2,1,0:T(8,128)}', space=vmem, size = 0x36000, scoped, tag = 'scratch operand']
  %s0 = inlined_call_operand.vmem [shape: f32[2,16,16,128], index: 0, kind: input, shape index: {}]
  %s1 = inlined_call_operand.vmem [shape: f32[1,128], index: 1, kind: input, shape index: {}]
  %s2 = inlined_call_operand.vmem [shape: f32[1,128], index: 2, kind: input, shape index: {}]
  %s3 = inlined_call_operand.vmem [shape: bf16[3,384,128], index: 3, kind: input, shape index: {}]
  %s4 = inlined_call_operand.vmem [shape: f32[2,16,16,128], index: 4, kind: output, shape index: {0}]
  %s5 = inlined_call_operand.vmem [shape: f32[2,2,128], index: 5, kind: output, shape index: {1}]
  %6 = xla_tuple %s4, %s5
  %s7 = sld [smem:[#allocation0]]
  $region57: #{bottleneck_pallas.5} parent=0
    _
  %s9 = ssub.s32 1, %s7
  %s10 = scalar_select 0, %s9, %s7
  loop: start=0, step=1, limit=4
  $region2: #{bottleneck_pallas.5} parent=0 // loop_pre_header
    _
  $region3: #{bottleneck_pallas.5} parent=0 // loop_header
    %s12 = sphi 0, %s16
    %p13 = scmp.ge.s32.totalorder %s12, 4
    %s22 = sphi 0, %s24
    %s25 = sphi 0, %s22
    %s26 = sphi 0, %s25
    %s42 = sphi 0, %s26
    %s46 = sphi 0, %s46
    %s48 = sphi 0, %s46
    %s49 = sphi 0, %s48
    %s63 = sphi 0, %s49
    %s67 = sphi 0, %s67
    %s69 = sphi 0, %s67
    %s70 = sphi 0, %s69
    %s84 = sphi 0, %s70
    %s88 = sphi 0, %s88
    %s90 = sphi 0, %s88
    %s91 = sphi 0, %s90
    %s105 = sphi 0, %s91
    %s111 = sphi 0, %s113
    %s114 = sphi 0, %s111
    %s115 = sphi 0, %s114
    %s131 = sphi 0, %s115
    %s137 = sphi 0, %s139
    %s140 = sphi 0, %s137
    %s141 = sphi 0, %s140
    %s157 = sphi 0, %s141
  $region4: #{bottleneck_pallas.5} parent=0 // loop_header_branch
    %15 = sbr.rel (%p13) target = $region8
  $region5: #{bottleneck_pallas.5} parent=0 // loop_body
    %s17 = ssub.s32 %s12, 1
    %s18 = ssub.s32 %s12, 2
    %s19 = sadd.s32 %s12, 1
    %s20 = ssub.s32 %s12, %s19
    %p21 = scmp.eq.s32.totalorder %s20, 0
    %s23 = sadd.s32 %s22, 1
    %s24 = scalar_select %p21, %s22, %s23
    %p27 = pneg %p21
    %p28 = scmp.eq.s32.totalorder %s12, 1
    %p29 = por %p27, %p28
    %p30 = scmp.ne.s32.totalorder %s22, %s25
    %p31 = scmp.eq.s32.totalorder %s12, 0
    %p32 = por %p30, %p31
    %p33 = scmp.ne.s32.totalorder %s22, %s25
    %p34 = scmp.eq.s32.totalorder %s17, 1
    %p35 = por %p33, %p34
    %p36 = scmp.ne.s32.totalorder %s25, %s26
    %p37 = scmp.eq.s32.totalorder %s17, 0
    %p38 = por %p36, %p37
    %p39 = scmp.ne.s32.totalorder %s25, %s26
    %p40 = scmp.eq.s32.totalorder %s18, 1
    %p41 = por %p39, %p40
    %p43 = scmp.ne.s32.totalorder %s26, %s42
    %p44 = scmp.eq.s32.totalorder %s18, 0
    %p45 = por %p43, %p44
    %s47 = sadd.s32 %s46, 1
    %p50 = scmp.eq.s32.totalorder %s12, 1
    %p51 = scmp.ne.s32.totalorder %s46, %s48
    %p52 = scmp.eq.s32.totalorder %s12, 0
    %p53 = por %p51, %p52
    %p54 = scmp.ne.s32.totalorder %s46, %s48
    %p55 = scmp.eq.s32.totalorder %s17, 1
    %p56 = por %p54, %p55
    %p57 = scmp.ne.s32.totalorder %s48, %s49
    %p58 = scmp.eq.s32.totalorder %s17, 0
    %p59 = por %p57, %p58
    %p60 = scmp.ne.s32.totalorder %s48, %s49
    %p61 = scmp.eq.s32.totalorder %s18, 1
    %p62 = por %p60, %p61
    %p64 = scmp.ne.s32.totalorder %s49, %s63
    %p65 = scmp.eq.s32.totalorder %s18, 0
    %p66 = por %p64, %p65
    %s68 = sadd.s32 %s67, 1
    %p71 = scmp.eq.s32.totalorder %s12, 1
    %p72 = scmp.ne.s32.totalorder %s67, %s69
    %p73 = scmp.eq.s32.totalorder %s12, 0
    %p74 = por %p72, %p73
    %p75 = scmp.ne.s32.totalorder %s67, %s69
    %p76 = scmp.eq.s32.totalorder %s17, 1
    %p77 = por %p75, %p76
    %p78 = scmp.ne.s32.totalorder %s69, %s70
    %p79 = scmp.eq.s32.totalorder %s17, 0
    %p80 = por %p78, %p79
    %p81 = scmp.ne.s32.totalorder %s69, %s70
    %p82 = scmp.eq.s32.totalorder %s18, 1
    %p83 = por %p81, %p82
    %p85 = scmp.ne.s32.totalorder %s70, %s84
    %p86 = scmp.eq.s32.totalorder %s18, 0
    %p87 = por %p85, %p86
    %s89 = sadd.s32 %s88, 1
    %p92 = scmp.eq.s32.totalorder %s12, 1
    %p93 = scmp.ne.s32.totalorder %s88, %s90
    %p94 = scmp.eq.s32.totalorder %s12, 0
    %p95 = por %p93, %p94
    %p96 = scmp.ne.s32.totalorder %s88, %s90
    %p97 = scmp.eq.s32.totalorder %s17, 1
    %p98 = por %p96, %p97
    %p99 = scmp.ne.s32.totalorder %s90, %s91
    %p100 = scmp.eq.s32.totalorder %s17, 0
    %p101 = por %p99, %p100
    %p102 = scmp.ne.s32.totalorder %s90, %s91
    %p103 = scmp.eq.s32.totalorder %s18, 1
    %p104 = por %p102, %p103
    %p106 = scmp.ne.s32.totalorder %s91, %s105
    %p107 = scmp.eq.s32.totalorder %s18, 0
    %p108 = por %p106, %p107
    %s109 = ssub.s32 %s12, %s19
    %p110 = scmp.eq.s32.totalorder %s109, 0
    %s112 = sadd.s32 %s111, 1
    %s113 = scalar_select %p110, %s111, %s112
    %p116 = pneg %p110
    %p117 = scmp.eq.s32.totalorder %s12, 1
    %p118 = por %p116, %p117
    %p119 = scmp.ne.s32.totalorder %s111, %s114
    %p120 = scmp.eq.s32.totalorder %s12, 0
    %p121 = por %p119, %p120
    %p122 = scmp.ne.s32.totalorder %s111, %s114
    %p123 = scmp.eq.s32.totalorder %s17, 1
    %p124 = por %p122, %p123
    %p125 = scmp.ne.s32.totalorder %s114, %s115
    %p126 = scmp.eq.s32.totalorder %s17, 0
    %p127 = por %p125, %p126
    %p128 = scmp.ne.s32.totalorder %s114, %s115
    %p129 = scmp.eq.s32.totalorder %s18, 1
    %p130 = por %p128, %p129
    %p132 = scmp.ne.s32.totalorder %s115, %s131
    %p133 = scmp.eq.s32.totalorder %s18, 0
    %p134 = por %p132, %p133
    %s135 = ssub.s32 %s12, %s19
    %p136 = scmp.eq.s32.totalorder %s135, 0
    %s138 = sadd.s32 %s137, 1
    %s139 = scalar_select %p136, %s137, %s138
    %p142 = pneg %p136
    %p143 = scmp.eq.s32.totalorder %s12, 1
    %p144 = por %p142, %p143
    %p145 = scmp.ne.s32.totalorder %s137, %s140
    %p146 = scmp.eq.s32.totalorder %s12, 0
    %p147 = por %p145, %p146
    %p148 = scmp.ne.s32.totalorder %s137, %s140
    %p149 = scmp.eq.s32.totalorder %s17, 1
    %p150 = por %p148, %p149
    %p151 = scmp.ne.s32.totalorder %s140, %s141
    %p152 = scmp.eq.s32.totalorder %s17, 0
    %p153 = por %p151, %p152
    %p154 = scmp.ne.s32.totalorder %s140, %s141
    %p155 = scmp.eq.s32.totalorder %s18, 1
    %p156 = por %p154, %p155
    %p158 = scmp.ne.s32.totalorder %s141, %s157
    %p159 = scmp.eq.s32.totalorder %s18, 0
    %p160 = por %p158, %p159
    %p161 = scmp.le.s32.totalorder 1, %s12
    %p162 = scmp.lt.s32.totalorder %s12, 3
    %p163 = pnand %p161, %p162
    %p164 = pneg %p163
    // Predicated region
    $region9: #{bottleneck_pallas.5} parent=5 // pred_check
      _
    $region10: #{bottleneck_pallas.5} parent=5 // pred_check_branch
      %166 = sbr.rel (%p163) target = $region12
    $region11: #{bottleneck_pallas.5} parent=5 // pred_region
      %s167 = ssub.s32 %s12, 1
      // Predicated region
      $region13: #{bottleneck_pallas.5} parent=11 // pred_check
        %p168 = pneg %p59
      $region14: #{bottleneck_pallas.5} parent=11 // pred_check_branch
        %170 = sbr.rel (%p168) target = $region16
      $region15: #{bottleneck_pallas.5} parent=11 // pred_region
        _
      $region16: #{bottleneck_pallas.5} parent=11 // pred_fallthru
        _
      // Predicated region
      $region17: #{bottleneck_pallas.5} parent=11 // pred_check
        %p171 = pneg %p80
      $region18: #{bottleneck_pallas.5} parent=11 // pred_check_branch
        %173 = sbr.rel (%p171) target = $region20
      $region19: #{bottleneck_pallas.5} parent=11 // pred_region
        _
      $region20: #{bottleneck_pallas.5} parent=11 // pred_fallthru
        _
      // Predicated region
      $region21: #{bottleneck_pallas.5} parent=11 // pred_check
        %p174 = pneg %p101
      $region22: #{bottleneck_pallas.5} parent=11 // pred_check_branch
        %176 = sbr.rel (%p174) target = $region24
      $region23: #{bottleneck_pallas.5} parent=11 // pred_region
        _
      $region24: #{bottleneck_pallas.5} parent=11 // pred_fallthru
        _
    $region12: #{bottleneck_pallas.5} parent=5 // pred_fallthru
      _
    %p177 = scmp.lt.s32.totalorder %s12, 2
    // Predicated region
    $region25: #{bottleneck_pallas.5} parent=5 // pred_check
      %p178 = pneg %p177
    $region26: #{bottleneck_pallas.5} parent=5 // pred_check_branch
      %180 = sbr.rel (%p178) target = $region28
    $region27: #{bottleneck_pallas.5} parent=5 // pred_region
      // Predicated region
      $region29: #{bottleneck_pallas.5} parent=27 // pred_check
        %p181 = pneg %p32
      $region30: #{bottleneck_pallas.5} parent=27 // pred_check_branch
        %183 = sbr.rel (%p181) target = $region32
      $region31: #{bottleneck_pallas.5} parent=27 // pred_region
        %p184 = scmp.lt.s32.totalorder %s12, 1
        %s185 = scalar_select %p184, %s12, 1
        %s186 = smul.addr %s185, 32
        %s187 = smul.addr %s186, 8
        %s188 = scalar_lea.vmem %s0, %s187
      $region32: #{bottleneck_pallas.5} parent=27 // pred_fallthru
        _
    $region28: #{bottleneck_pallas.5} parent=5 // pred_fallthru
      _
    %p189 = scmp.le.s32.totalorder 1, %s12
    %p190 = scmp.lt.s32.totalorder %s12, 3
    %p191 = pnand %p189, %p190
    %p192 = pneg %p191
    // Predicated region
    $region33: #{bottleneck_pallas.5} parent=5 // pred_check
      _
    $region34: #{bottleneck_pallas.5} parent=5 // pred_check_branch
      %194 = sbr.rel (%p191) target = $region36
    $region35: #{bottleneck_pallas.5} parent=5 // pred_region
      %s195 = ssub.s32 %s12, 1
      %p196 = scmp.lt.s32.totalorder %s17, 1
      %s197 = scalar_select %p196, %s17, 1
      %s198 = smul.addr %s197, 32
      %s199 = smul.addr %s198, 8
      %s200 = scalar_lea.vmem %s0, %s199
      %p201 = pneg %p38
      %p202 = pneg %p35
      %p203 = pneg %p59
      %p204 = pneg %p56
      %p205 = pneg %p80
      %p206 = pneg %p77
      %p207 = pneg %p101
      %p208 = pneg %p98
      %p209 = pneg %p127
      %p210 = pneg %p124
      %p211 = scmp.lt.s32.totalorder %s17, 1
      %s212 = scalar_select %p211, %s17, 1
      %s213 = smul.addr %s212, 32
      %s214 = smul.addr %s213, 8
      %s215 = scalar_lea.vmem %s4, %s214
      %p216 = pneg %p153
      %p217 = pneg %p150
      %p218 = scmp.lt.s32.totalorder %s17, 1
      %s219 = scalar_select %p218, %s17, 1
      %s220 = smul.addr %s219, 2
      %s221 = scalar_lea.vmem %s5, %s220
      %p222 = scmp.lt.s32.totalorder %s17, 1
      %s223 = scalar_select %p222, %s17, 1
      %s224 = smul.addr %s223, 32
      %s225 = smul.addr %s224, 8
      %s226 = scalar_lea.vmem %s0, %s225
      %p227 = scmp.lt.s32.totalorder %s17, 1
      %s228 = scalar_select %p227, %s17, 1
      %s229 = smul.addr %s228, 32
      %s230 = smul.addr %s229, 8
      %s231 = scalar_lea.vmem %s4, %s230
      %p232 = scmp.lt.s32.totalorder %s17, 1
      %s233 = scalar_select %p232, %s17, 1
      %s234 = smul.addr %s233, 2
      %s235 = scalar_lea.vmem %s5, %s234
      %v237 = vld [vmem:[%s226] sm:$0xff]
      %v238 = vld [vmem:[%s226 + $0x8] sm:$0xff]
      %v239 = vld [vmem:[%s226 + $0x10] sm:$0xff]
      %v240 = vld [vmem:[%s226 + $0x18] sm:$0xff]
      %v241 = vld [vmem:[%s226 + $0x20] sm:$0xff]
      %v242 = vld [vmem:[%s226 + $0x28] sm:$0xff]
      %v243 = vld [vmem:[%s226 + $0x30] sm:$0xff]
      %v244 = vld [vmem:[%s226 + $0x38] sm:$0xff]
      %v245 = vld [vmem:[%s226 + $0x40] sm:$0xff]
      %v246 = vld [vmem:[%s226 + $0x48] sm:$0xff]
      %v247 = vld [vmem:[%s226 + $0x50] sm:$0xff]
      %v248 = vld [vmem:[%s226 + $0x58] sm:$0xff]
      %v249 = vld [vmem:[%s226 + $0x60] sm:$0xff]
      %v250 = vld [vmem:[%s226 + $0x68] sm:$0xff]
      %v251 = vld [vmem:[%s226 + $0x70] sm:$0xff]
      %v252 = vld [vmem:[%s226 + $0x78] sm:$0xff]
      %v253 = vld [vmem:[%s226 + $0x80] sm:$0xff]
      %v254 = vld [vmem:[%s226 + $0x88] sm:$0xff]
      %v255 = vld [vmem:[%s226 + $0x90] sm:$0xff]
      %v256 = vld [vmem:[%s226 + $0x98] sm:$0xff]
      %v257 = vld [vmem:[%s226 + $0xa0] sm:$0xff]
      %v258 = vld [vmem:[%s226 + $0xa8] sm:$0xff]
      %v259 = vld [vmem:[%s226 + $0xb0] sm:$0xff]
      %v260 = vld [vmem:[%s226 + $0xb8] sm:$0xff]
      %v261 = vld [vmem:[%s226 + $0xc0] sm:$0xff]
      %v262 = vld [vmem:[%s226 + $0xc8] sm:$0xff]
      %v263 = vld [vmem:[%s226 + $0xd0] sm:$0xff]
      %v264 = vld [vmem:[%s226 + $0xd8] sm:$0xff]
      %v265 = vld [vmem:[%s226 + $0xe0] sm:$0xff]
      %v266 = vld [vmem:[%s226 + $0xe8] sm:$0xff]
      %v267 = vld [vmem:[%s226 + $0xf0] sm:$0xff]
      %v268 = vld [vmem:[%s226 + $0xf8] sm:$0xff]
      %v269 = vld [vmem:[%s1] sm:$0x1]
      %v271 = vlaneseq
      %v272 = vshrl.u32 %v271, 7
      %v273 = vsub.s32 0, %v272
      %v274 = vrot.slane %v269, %v273
      %v276 = vmul.f32 %v237, %v274
      %v277 = vmul.f32 %v238, %v274
      %v278 = vmul.f32 %v239, %v274
      %v279 = vmul.f32 %v240, %v274
      %v280 = vmul.f32 %v241, %v274
      %v281 = vmul.f32 %v242, %v274
      %v282 = vmul.f32 %v243, %v274
      %v283 = vmul.f32 %v244, %v274
      %v284 = vmul.f32 %v245, %v274
      %v285 = vmul.f32 %v246, %v274
      %v286 = vmul.f32 %v247, %v274
      %v287 = vmul.f32 %v248, %v274
      %v288 = vmul.f32 %v249, %v274
      %v289 = vmul.f32 %v250, %v274
      %v290 = vmul.f32 %v251, %v274
      %v291 = vmul.f32 %v252, %v274
      %v292 = vmul.f32 %v253, %v274
      %v293 = vmul.f32 %v254, %v274
      %v294 = vmul.f32 %v255, %v274
      %v295 = vmul.f32 %v256, %v274
      %v296 = vmul.f32 %v257, %v274
      %v297 = vmul.f32 %v258, %v274
      %v298 = vmul.f32 %v259, %v274
      %v299 = vmul.f32 %v260, %v274
      %v300 = vmul.f32 %v261, %v274
      %v301 = vmul.f32 %v262, %v274
      %v302 = vmul.f32 %v263, %v274
      %v303 = vmul.f32 %v264, %v274
      %v304 = vmul.f32 %v265, %v274
      %v305 = vmul.f32 %v266, %v274
      %v306 = vmul.f32 %v267, %v274
      %v307 = vmul.f32 %v268, %v274
      %v308 = vld [vmem:[%s2] sm:$0x1]
      %v310 = vlaneseq
      %v311 = vshrl.u32 %v310, 7
      %v312 = vsub.s32 0, %v311
      %v313 = vrot.slane %v308, %v312
      %v315 = vadd.f32 %v276, %v313
      %v316 = vadd.f32 %v277, %v313
      %v317 = vadd.f32 %v278, %v313
      %v318 = vadd.f32 %v279, %v313
      %v319 = vadd.f32 %v280, %v313
      %v320 = vadd.f32 %v281, %v313
      %v321 = vadd.f32 %v282, %v313
      %v322 = vadd.f32 %v283, %v313
      %v323 = vadd.f32 %v284, %v313
      %v324 = vadd.f32 %v285, %v313
      %v325 = vadd.f32 %v286, %v313
      %v326 = vadd.f32 %v287, %v313
      %v327 = vadd.f32 %v288, %v313
      %v328 = vadd.f32 %v289, %v313
      %v329 = vadd.f32 %v290, %v313
      %v330 = vadd.f32 %v291, %v313
      %v331 = vadd.f32 %v292, %v313
      %v332 = vadd.f32 %v293, %v313
      %v333 = vadd.f32 %v294, %v313
      %v334 = vadd.f32 %v295, %v313
      %v335 = vadd.f32 %v296, %v313
      %v336 = vadd.f32 %v297, %v313
      %v337 = vadd.f32 %v298, %v313
      %v338 = vadd.f32 %v299, %v313
      %v339 = vadd.f32 %v300, %v313
      %v340 = vadd.f32 %v301, %v313
      %v341 = vadd.f32 %v302, %v313
      %v342 = vadd.f32 %v303, %v313
      %v343 = vadd.f32 %v304, %v313
      %v344 = vadd.f32 %v305, %v313
      %v345 = vadd.f32 %v306, %v313
      %v346 = vadd.f32 %v307, %v313
      %v347 = vmax.f32 %v315, 0.0
      %v348 = vmax.f32 %v316, 0.0
      %v349 = vmax.f32 %v317, 0.0
      %v350 = vmax.f32 %v318, 0.0
      %v351 = vmax.f32 %v319, 0.0
      %v352 = vmax.f32 %v320, 0.0
      %v353 = vmax.f32 %v321, 0.0
      %v354 = vmax.f32 %v322, 0.0
      %v355 = vmax.f32 %v323, 0.0
      %v356 = vmax.f32 %v324, 0.0
      %v357 = vmax.f32 %v325, 0.0
      %v358 = vmax.f32 %v326, 0.0
      %v359 = vmax.f32 %v327, 0.0
      %v360 = vmax.f32 %v328, 0.0
      %v361 = vmax.f32 %v329, 0.0
      %v362 = vmax.f32 %v330, 0.0
      %v363 = vmax.f32 %v331, 0.0
      %v364 = vmax.f32 %v332, 0.0
      %v365 = vmax.f32 %v333, 0.0
      %v366 = vmax.f32 %v334, 0.0
      %v367 = vmax.f32 %v335, 0.0
      %v368 = vmax.f32 %v336, 0.0
      %v369 = vmax.f32 %v337, 0.0
      %v370 = vmax.f32 %v338, 0.0
      %v371 = vmax.f32 %v339, 0.0
      %v372 = vmax.f32 %v340, 0.0
      %v373 = vmax.f32 %v341, 0.0
      %v374 = vmax.f32 %v342, 0.0
      %v375 = vmax.f32 %v343, 0.0
      %v376 = vmax.f32 %v344, 0.0
      %v377 = vmax.f32 %v345, 0.0
      %v378 = vmax.f32 %v346, 0.0
      %379 = vst [vmem:[#allocation2] sm:$0xff] 0.0
      %380 = vst [vmem:[#allocation2 + $0x8] sm:$0xff] 0.0
      %381 = vst [vmem:[#allocation2 + $0x10] sm:$0x3] 0.0
      %s382 = scalar_lea.vmem [#allocation2], 408
      %383 = vst [vmem:[%s382] sm:$0xff] 0.0
      %384 = vst [vmem:[%s382 + $0x8] sm:$0xff] 0.0
      %385 = vst [vmem:[%s382 + $0x10] sm:$0x3] 0.0
      %386 = vst [vmem:[#allocation2] sm:$0x1] 0.0
      %387 = vst [vmem:[#allocation2 + $0x18] sm:$0x1] 0.0
      %388 = vst [vmem:[#allocation2 + $0x30] sm:$0x1] 0.0
      %389 = vst [vmem:[#allocation2 + $0x48] sm:$0x1] 0.0
      %390 = vst [vmem:[#allocation2 + $0x60] sm:$0x1] 0.0
      %391 = vst [vmem:[#allocation2 + $0x78] sm:$0x1] 0.0
      %392 = vst [vmem:[#allocation2 + $0x90] sm:$0x1] 0.0
      %393 = vst [vmem:[#allocation2 + $0xa8] sm:$0x1] 0.0
      %394 = vst [vmem:[#allocation2 + $0xc0] sm:$0x1] 0.0
      %395 = vst [vmem:[#allocation2 + $0xd8] sm:$0x1] 0.0
      %396 = vst [vmem:[#allocation2 + $0xf0] sm:$0x1] 0.0
      %397 = vst [vmem:[#allocation2 + $0x108] sm:$0x1] 0.0
      %398 = vst [vmem:[#allocation2 + $0x120] sm:$0x1] 0.0
      %399 = vst [vmem:[#allocation2 + $0x138] sm:$0x1] 0.0
      %400 = vst [vmem:[#allocation2 + $0x150] sm:$0x1] 0.0
      %401 = vst [vmem:[#allocation2 + $0x168] sm:$0x1] 0.0
      %402 = vst [vmem:[#allocation2 + $0x180] sm:$0x1] 0.0
      %403 = vst [vmem:[#allocation2 + $0x198] sm:$0x1] 0.0
      %404 = vst [vmem:[#allocation2 + $0x11] sm:$0x1] 0.0
      %405 = vst [vmem:[#allocation2 + $0x29] sm:$0x1] 0.0
      %406 = vst [vmem:[#allocation2 + $0x41] sm:$0x1] 0.0
      %407 = vst [vmem:[#allocation2 + $0x59] sm:$0x1] 0.0
      %408 = vst [vmem:[#allocation2 + $0x71] sm:$0x1] 0.0
      %409 = vst [vmem:[#allocation2 + $0x89] sm:$0x1] 0.0
      %410 = vst [vmem:[#allocation2 + $0xa1] sm:$0x1] 0.0
      %411 = vst [vmem:[#allocation2 + $0xb9] sm:$0x1] 0.0
      %412 = vst [vmem:[#allocation2 + $0xd1] sm:$0x1] 0.0
      %413 = vst [vmem:[#allocation2 + $0xe9] sm:$0x1] 0.0
      %414 = vst [vmem:[#allocation2 + $0x101] sm:$0x1] 0.0
      %415 = vst [vmem:[#allocation2 + $0x119] sm:$0x1] 0.0
      %416 = vst [vmem:[#allocation2 + $0x131] sm:$0x1] 0.0
      %417 = vst [vmem:[#allocation2 + $0x149] sm:$0x1] 0.0
      %418 = vst [vmem:[#allocation2 + $0x161] sm:$0x1] 0.0
      %419 = vst [vmem:[#allocation2 + $0x179] sm:$0x1] 0.0
      %420 = vst [vmem:[#allocation2 + $0x191] sm:$0x1] 0.0
      %421 = vst [vmem:[#allocation2 + $0x1a9] sm:$0x1] 0.0
      %s422 = scalar_lea.vmem [#allocation2], 24
      %423 = vst [vmem:[%s422 + $0x1] sm:$0xff] %v347
      %424 = vst [vmem:[%s422 + $0x9] sm:$0xff] %v348
      %425 = vst [vmem:[%s422 + $0x19] sm:$0xff] %v349
      %426 = vst [vmem:[%s422 + $0x21] sm:$0xff] %v350
      %427 = vst [vmem:[%s422 + $0x31] sm:$0xff] %v351
      %428 = vst [vmem:[%s422 + $0x39] sm:$0xff] %v352
      %429 = vst [vmem:[%s422 + $0x49] sm:$0xff] %v353
      %430 = vst [vmem:[%s422 + $0x51] sm:$0xff] %v354
      %431 = vst [vmem:[%s422 + $0x61] sm:$0xff] %v355
      %432 = vst [vmem:[%s422 + $0x69] sm:$0xff] %v356
      %433 = vst [vmem:[%s422 + $0x79] sm:$0xff] %v357
      %434 = vst [vmem:[%s422 + $0x81] sm:$0xff] %v358
      %435 = vst [vmem:[%s422 + $0x91] sm:$0xff] %v359
      %436 = vst [vmem:[%s422 + $0x99] sm:$0xff] %v360
      %437 = vst [vmem:[%s422 + $0xa9] sm:$0xff] %v361
      %438 = vst [vmem:[%s422 + $0xb1] sm:$0xff] %v362
      %439 = vst [vmem:[%s422 + $0xc1] sm:$0xff] %v363
      %440 = vst [vmem:[%s422 + $0xc9] sm:$0xff] %v364
      %441 = vst [vmem:[%s422 + $0xd9] sm:$0xff] %v365
      %442 = vst [vmem:[%s422 + $0xe1] sm:$0xff] %v366
      %443 = vst [vmem:[%s422 + $0xf1] sm:$0xff] %v367
      %444 = vst [vmem:[%s422 + $0xf9] sm:$0xff] %v368
      %445 = vst [vmem:[%s422 + $0x109] sm:$0xff] %v369
      %446 = vst [vmem:[%s422 + $0x111] sm:$0xff] %v370
      %447 = vst [vmem:[%s422 + $0x121] sm:$0xff] %v371
      %448 = vst [vmem:[%s422 + $0x129] sm:$0xff] %v372
      %449 = vst [vmem:[%s422 + $0x139] sm:$0xff] %v373
      %450 = vst [vmem:[%s422 + $0x141] sm:$0xff] %v374
      %451 = vst [vmem:[%s422 + $0x151] sm:$0xff] %v375
      %452 = vst [vmem:[%s422 + $0x159] sm:$0xff] %v376
      %453 = vst [vmem:[%s422 + $0x169] sm:$0xff] %v377
      %454 = vst [vmem:[%s422 + $0x171] sm:$0xff] %v378
      %v455 = vld [vmem:[#allocation2] sm:$0xff]
      %v456 = vld [vmem:[#allocation2 + $0x8] sm:$0xff]
      %v457 = vld [vmem:[#allocation2 + $0x18] sm:$0xff]
      %v458 = vld [vmem:[#allocation2 + $0x20] sm:$0xff]
      %v459 = vld [vmem:[#allocation2 + $0x30] sm:$0xff]
      %v460 = vld [vmem:[#allocation2 + $0x38] sm:$0xff]
      %v461 = vld [vmem:[#allocation2 + $0x48] sm:$0xff]
      %v462 = vld [vmem:[#allocation2 + $0x50] sm:$0xff]
      %v463 = vld [vmem:[#allocation2 + $0x60] sm:$0xff]
      %v464 = vld [vmem:[#allocation2 + $0x68] sm:$0xff]
      %v465 = vld [vmem:[#allocation2 + $0x78] sm:$0xff]
      %v466 = vld [vmem:[#allocation2 + $0x80] sm:$0xff]
      %v467 = vld [vmem:[#allocation2 + $0x90] sm:$0xff]
      %v468 = vld [vmem:[#allocation2 + $0x98] sm:$0xff]
      %v469 = vld [vmem:[#allocation2 + $0xa8] sm:$0xff]
      %v470 = vld [vmem:[#allocation2 + $0xb0] sm:$0xff]
      %v471 = vld [vmem:[#allocation2 + $0xc0] sm:$0xff]
      %v472 = vld [vmem:[#allocation2 + $0xc8] sm:$0xff]
      %v473 = vld [vmem:[#allocation2 + $0xd8] sm:$0xff]
      %v474 = vld [vmem:[#allocation2 + $0xe0] sm:$0xff]
      %v475 = vld [vmem:[#allocation2 + $0xf0] sm:$0xff]
      %v476 = vld [vmem:[#allocation2 + $0xf8] sm:$0xff]
      %v477 = vld [vmem:[#allocation2 + $0x108] sm:$0xff]
      %v478 = vld [vmem:[#allocation2 + $0x110] sm:$0xff]
      %v479 = vld [vmem:[#allocation2 + $0x120] sm:$0xff]
      %v480 = vld [vmem:[#allocation2 + $0x128] sm:$0xff]
      %v481 = vld [vmem:[#allocation2 + $0x138] sm:$0xff]
      %v482 = vld [vmem:[#allocation2 + $0x140] sm:$0xff]
      %v483 = vld [vmem:[#allocation2 + $0x150] sm:$0xff]
      %v484 = vld [vmem:[#allocation2 + $0x158] sm:$0xff]
      %v485 = vld [vmem:[#allocation2 + $0x168] sm:$0xff]
      %v486 = vld [vmem:[#allocation2 + $0x170] sm:$0xff]
      %v487 = vld [vmem:[#allocation2 + $0x1] sm:$0xff]
      %v488 = vld [vmem:[#allocation2 + $0x9] sm:$0xff]
      %v489 = vld [vmem:[#allocation2 + $0x19] sm:$0xff]
      %v490 = vld [vmem:[#allocation2 + $0x21] sm:$0xff]
      %v491 = vld [vmem:[#allocation2 + $0x31] sm:$0xff]
      %v492 = vld [vmem:[#allocation2 + $0x39] sm:$0xff]
      %v493 = vld [vmem:[#allocation2 + $0x49] sm:$0xff]
      %v494 = vld [vmem:[#allocation2 + $0x51] sm:$0xff]
      %v495 = vld [vmem:[#allocation2 + $0x61] sm:$0xff]
      %v496 = vld [vmem:[#allocation2 + $0x69] sm:$0xff]
      %v497 = vld [vmem:[#allocation2 + $0x79] sm:$0xff]
      %v498 = vld [vmem:[#allocation2 + $0x81] sm:$0xff]
      %v499 = vld [vmem:[#allocation2 + $0x91] sm:$0xff]
      %v500 = vld [vmem:[#allocation2 + $0x99] sm:$0xff]
      %v501 = vld [vmem:[#allocation2 + $0xa9] sm:$0xff]
      %v502 = vld [vmem:[#allocation2 + $0xb1] sm:$0xff]
      %v503 = vld [vmem:[#allocation2 + $0xc1] sm:$0xff]
      %v504 = vld [vmem:[#allocation2 + $0xc9] sm:$0xff]
      %v505 = vld [vmem:[#allocation2 + $0xd9] sm:$0xff]
      %v506 = vld [vmem:[#allocation2 + $0xe1] sm:$0xff]
      %v507 = vld [vmem:[#allocation2 + $0xf1] sm:$0xff]
      %v508 = vld [vmem:[#allocation2 + $0xf9] sm:$0xff]
      %v509 = vld [vmem:[#allocation2 + $0x109] sm:$0xff]
      %v510 = vld [vmem:[#allocation2 + $0x111] sm:$0xff]
      %v511 = vld [vmem:[#allocation2 + $0x121] sm:$0xff]
      %v512 = vld [vmem:[#allocation2 + $0x129] sm:$0xff]
      %v513 = vld [vmem:[#allocation2 + $0x139] sm:$0xff]
      %v514 = vld [vmem:[#allocation2 + $0x141] sm:$0xff]
      %v515 = vld [vmem:[#allocation2 + $0x151] sm:$0xff]
      %v516 = vld [vmem:[#allocation2 + $0x159] sm:$0xff]
      %v517 = vld [vmem:[#allocation2 + $0x169] sm:$0xff]
      %v518 = vld [vmem:[#allocation2 + $0x171] sm:$0xff]
      %v519 = vld [vmem:[#allocation2 + $0x2] sm:$0xff]
      %v520 = vld [vmem:[#allocation2 + $0xa] sm:$0xff]
      %v521 = vld [vmem:[#allocation2 + $0x1a] sm:$0xff]
      %v522 = vld [vmem:[#allocation2 + $0x22] sm:$0xff]
      %v523 = vld [vmem:[#allocation2 + $0x32] sm:$0xff]
      %v524 = vld [vmem:[#allocation2 + $0x3a] sm:$0xff]
      %v525 = vld [vmem:[#allocation2 + $0x4a] sm:$0xff]
      %v526 = vld [vmem:[#allocation2 + $0x52] sm:$0xff]
      %v527 = vld [vmem:[#allocation2 + $0x62] sm:$0xff]
      %v528 = vld [vmem:[#allocation2 + $0x6a] sm:$0xff]
      %v529 = vld [vmem:[#allocation2 + $0x7a] sm:$0xff]
      %v530 = vld [vmem:[#allocation2 + $0x82] sm:$0xff]
      %v531 = vld [vmem:[#allocation2 + $0x92] sm:$0xff]
      %v532 = vld [vmem:[#allocation2 + $0x9a] sm:$0xff]
      %v533 = vld [vmem:[#allocation2 + $0xaa] sm:$0xff]
      %v534 = vld [vmem:[#allocation2 + $0xb2] sm:$0xff]
      %v535 = vld [vmem:[#allocation2 + $0xc2] sm:$0xff]
      %v536 = vld [vmem:[#allocation2 + $0xca] sm:$0xff]
      %v537 = vld [vmem:[#allocation2 + $0xda] sm:$0xff]
      %v538 = vld [vmem:[#allocation2 + $0xe2] sm:$0xff]
      %v539 = vld [vmem:[#allocation2 + $0xf2] sm:$0xff]
      %v540 = vld [vmem:[#allocation2 + $0xfa] sm:$0xff]
      %v541 = vld [vmem:[#allocation2 + $0x10a] sm:$0xff]
      %v542 = vld [vmem:[#allocation2 + $0x112] sm:$0xff]
      %v543 = vld [vmem:[#allocation2 + $0x122] sm:$0xff]
      %v544 = vld [vmem:[#allocation2 + $0x12a] sm:$0xff]
      %v545 = vld [vmem:[#allocation2 + $0x13a] sm:$0xff]
      %v546 = vld [vmem:[#allocation2 + $0x142] sm:$0xff]
      %v547 = vld [vmem:[#allocation2 + $0x152] sm:$0xff]
      %v548 = vld [vmem:[#allocation2 + $0x15a] sm:$0xff]
      %v549 = vld [vmem:[#allocation2 + $0x16a] sm:$0xff]
      %v550 = vld [vmem:[#allocation2 + $0x172] sm:$0xff]
      %v551 = vpack.c.bf16 %v456, %v455
      %v552 = vpack.c.bf16 %v488, %v487
      %v553 = vpack.c.bf16 %v520, %v519
      %v554 = vpack.c.bf16 %v458, %v457
      %v555 = vpack.c.bf16 %v490, %v489
      %v556 = vpack.c.bf16 %v522, %v521
      %v557 = vpack.c.bf16 %v460, %v459
      %v558 = vpack.c.bf16 %v492, %v491
      %v559 = vpack.c.bf16 %v524, %v523
      %v560 = vpack.c.bf16 %v462, %v461
      %v561 = vpack.c.bf16 %v494, %v493
      %v562 = vpack.c.bf16 %v526, %v525
      %v563 = vpack.c.bf16 %v464, %v463
      %v564 = vpack.c.bf16 %v496, %v495
      %v565 = vpack.c.bf16 %v528, %v527
      %v566 = vpack.c.bf16 %v466, %v465
      %v567 = vpack.c.bf16 %v498, %v497
      %v568 = vpack.c.bf16 %v530, %v529
      %v569 = vpack.c.bf16 %v468, %v467
      %v570 = vpack.c.bf16 %v500, %v499
      %v571 = vpack.c.bf16 %v532, %v531
      %v572 = vpack.c.bf16 %v470, %v469
      %v573 = vpack.c.bf16 %v502, %v501
      %v574 = vpack.c.bf16 %v534, %v533
      %v575 = vpack.c.bf16 %v472, %v471
      %v576 = vpack.c.bf16 %v504, %v503
      %v577 = vpack.c.bf16 %v536, %v535
      %v578 = vpack.c.bf16 %v474, %v473
      %v579 = vpack.c.bf16 %v506, %v505
      %v580 = vpack.c.bf16 %v538, %v537
      %v581 = vpack.c.bf16 %v476, %v475
      %v582 = vpack.c.bf16 %v508, %v507
      %v583 = vpack.c.bf16 %v540, %v539
      %v584 = vpack.c.bf16 %v478, %v477
      %v585 = vpack.c.bf16 %v510, %v509
      %v586 = vpack.c.bf16 %v542, %v541
      %v587 = vpack.c.bf16 %v480, %v479
      %v588 = vpack.c.bf16 %v512, %v511
      %v589 = vpack.c.bf16 %v544, %v543
      %v590 = vpack.c.bf16 %v482, %v481
      %v591 = vpack.c.bf16 %v514, %v513
      %v592 = vpack.c.bf16 %v546, %v545
      %v593 = vpack.c.bf16 %v484, %v483
      %v594 = vpack.c.bf16 %v516, %v515
      %v595 = vpack.c.bf16 %v548, %v547
      %v596 = vpack.c.bf16 %v486, %v485
      %v597 = vpack.c.bf16 %v518, %v517
      %v598 = vpack.c.bf16 %v550, %v549
      %v599 = vld [vmem:[%s3] sm:$0xf]
      %v600 = vld [vmem:[%s3 + $0x4] sm:$0xf]
      %v601 = vld [vmem:[%s3 + $0x8] sm:$0xf]
      %v602 = vld [vmem:[%s3 + $0xc] sm:$0xf]
      %v603 = vld [vmem:[%s3 + $0x10] sm:$0xf]
      %v604 = vld [vmem:[%s3 + $0x14] sm:$0xf]
      %v605 = vld [vmem:[%s3 + $0x18] sm:$0xf]
      %v606 = vld [vmem:[%s3 + $0x1c] sm:$0xf]
      %v607 = vld [vmem:[%s3 + $0x20] sm:$0xf]
      %v608 = vld [vmem:[%s3 + $0x24] sm:$0xf]
      %v609 = vld [vmem:[%s3 + $0x28] sm:$0xf]
      %v610 = vld [vmem:[%s3 + $0x2c] sm:$0xf]
      %v611 = vld [vmem:[%s3 + $0x30] sm:$0xf]
      %v612 = vld [vmem:[%s3 + $0x34] sm:$0xf]
      %v613 = vld [vmem:[%s3 + $0x38] sm:$0xf]
      %v614 = vld [vmem:[%s3 + $0x3c] sm:$0xf]
      %v615 = vld [vmem:[%s3 + $0x40] sm:$0xf]
      %v616 = vld [vmem:[%s3 + $0x44] sm:$0xf]
      %v617 = vld [vmem:[%s3 + $0x48] sm:$0xf]
      %v618 = vld [vmem:[%s3 + $0x4c] sm:$0xf]
      %v619 = vld [vmem:[%s3 + $0x50] sm:$0xf]
      %v620 = vld [vmem:[%s3 + $0x54] sm:$0xf]
      %v621 = vld [vmem:[%s3 + $0x58] sm:$0xf]
      %v622 = vld [vmem:[%s3 + $0x5c] sm:$0xf]
      %v623 = vld [vmem:[%s3 + $0x60] sm:$0xf]
      %v624 = vld [vmem:[%s3 + $0x64] sm:$0xf]
      %v625 = vld [vmem:[%s3 + $0x68] sm:$0xf]
      %v626 = vld [vmem:[%s3 + $0x6c] sm:$0xf]
      %v627 = vld [vmem:[%s3 + $0x70] sm:$0xf]
      %v628 = vld [vmem:[%s3 + $0x74] sm:$0xf]
      %v629 = vld [vmem:[%s3 + $0x78] sm:$0xf]
      %v630 = vld [vmem:[%s3 + $0x7c] sm:$0xf]
      %v631 = vld [vmem:[%s3 + $0x80] sm:$0xf]
      %v632 = vld [vmem:[%s3 + $0x84] sm:$0xf]
      %v633 = vld [vmem:[%s3 + $0x88] sm:$0xf]
      %v634 = vld [vmem:[%s3 + $0x8c] sm:$0xf]
      %v635 = vld [vmem:[%s3 + $0x90] sm:$0xf]
      %v636 = vld [vmem:[%s3 + $0x94] sm:$0xf]
      %v637 = vld [vmem:[%s3 + $0x98] sm:$0xf]
      %v638 = vld [vmem:[%s3 + $0x9c] sm:$0xf]
      %v639 = vld [vmem:[%s3 + $0xa0] sm:$0xf]
      %v640 = vld [vmem:[%s3 + $0xa4] sm:$0xf]
      %v641 = vld [vmem:[%s3 + $0xa8] sm:$0xf]
      %v642 = vld [vmem:[%s3 + $0xac] sm:$0xf]
      %v643 = vld [vmem:[%s3 + $0xb0] sm:$0xf]
      %v644 = vld [vmem:[%s3 + $0xb4] sm:$0xf]
      %v645 = vld [vmem:[%s3 + $0xb8] sm:$0xf]
      %v646 = vld [vmem:[%s3 + $0xbc] sm:$0xf]
      %v647 = vld [vmem:[%s422] sm:$0xff]
      %v648 = vld [vmem:[%s422 + $0x8] sm:$0xff]
      %v649 = vld [vmem:[%s422 + $0x18] sm:$0xff]
      %v650 = vld [vmem:[%s422 + $0x20] sm:$0xff]
      %v651 = vld [vmem:[%s422 + $0x30] sm:$0xff]
      %v652 = vld [vmem:[%s422 + $0x38] sm:$0xff]
      %v653 = vld [vmem:[%s422 + $0x48] sm:$0xff]
      %v654 = vld [vmem:[%s422 + $0x50] sm:$0xff]
      %v655 = vld [vmem:[%s422 + $0x60] sm:$0xff]
      %v656 = vld [vmem:[%s422 + $0x68] sm:$0xff]
      %v657 = vld [vmem:[%s422 + $0x78] sm:$0xff]
      %v658 = vld [vmem:[%s422 + $0x80] sm:$0xff]
      %v659 = vld [vmem:[%s422 + $0x90] sm:$0xff]
      %v660 = vld [vmem:[%s422 + $0x98] sm:$0xff]
      %v661 = vld [vmem:[%s422 + $0xa8] sm:$0xff]
      %v662 = vld [vmem:[%s422 + $0xb0] sm:$0xff]
      %v663 = vld [vmem:[%s422 + $0xc0] sm:$0xff]
      %v664 = vld [vmem:[%s422 + $0xc8] sm:$0xff]
      %v665 = vld [vmem:[%s422 + $0xd8] sm:$0xff]
      %v666 = vld [vmem:[%s422 + $0xe0] sm:$0xff]
      %v667 = vld [vmem:[%s422 + $0xf0] sm:$0xff]
      %v668 = vld [vmem:[%s422 + $0xf8] sm:$0xff]
      %v669 = vld [vmem:[%s422 + $0x108] sm:$0xff]
      %v670 = vld [vmem:[%s422 + $0x110] sm:$0xff]
      %v671 = vld [vmem:[%s422 + $0x120] sm:$0xff]
      %v672 = vld [vmem:[%s422 + $0x128] sm:$0xff]
      %v673 = vld [vmem:[%s422 + $0x138] sm:$0xff]
      %v674 = vld [vmem:[%s422 + $0x140] sm:$0xff]
      %v675 = vld [vmem:[%s422 + $0x150] sm:$0xff]
      %v676 = vld [vmem:[%s422 + $0x158] sm:$0xff]
      %v677 = vld [vmem:[%s422 + $0x168] sm:$0xff]
      %v678 = vld [vmem:[%s422 + $0x170] sm:$0xff]
      %v679 = vld [vmem:[%s422 + $0x1] sm:$0xff]
      %v680 = vld [vmem:[%s422 + $0x9] sm:$0xff]
      %v681 = vld [vmem:[%s422 + $0x19] sm:$0xff]
      %v682 = vld [vmem:[%s422 + $0x21] sm:$0xff]
      %v683 = vld [vmem:[%s422 + $0x31] sm:$0xff]
      %v684 = vld [vmem:[%s422 + $0x39] sm:$0xff]
      %v685 = vld [vmem:[%s422 + $0x49] sm:$0xff]
      %v686 = vld [vmem:[%s422 + $0x51] sm:$0xff]
      %v687 = vld [vmem:[%s422 + $0x61] sm:$0xff]
      %v688 = vld [vmem:[%s422 + $0x69] sm:$0xff]
      %v689 = vld [vmem:[%s422 + $0x79] sm:$0xff]
      %v690 = vld [vmem:[%s422 + $0x81] sm:$0xff]
      %v691 = vld [vmem:[%s422 + $0x91] sm:$0xff]
      %v692 = vld [vmem:[%s422 + $0x99] sm:$0xff]
      %v693 = vld [vmem:[%s422 + $0xa9] sm:$0xff]
      %v694 = vld [vmem:[%s422 + $0xb1] sm:$0xff]
      %v695 = vld [vmem:[%s422 + $0xc1] sm:$0xff]
      %v696 = vld [vmem:[%s422 + $0xc9] sm:$0xff]
      %v697 = vld [vmem:[%s422 + $0xd9] sm:$0xff]
      %v698 = vld [vmem:[%s422 + $0xe1] sm:$0xff]
      %v699 = vld [vmem:[%s422 + $0xf1] sm:$0xff]
      %v700 = vld [vmem:[%s422 + $0xf9] sm:$0xff]
      %v701 = vld [vmem:[%s422 + $0x109] sm:$0xff]
      %v702 = vld [vmem:[%s422 + $0x111] sm:$0xff]
      %v703 = vld [vmem:[%s422 + $0x121] sm:$0xff]
      %v704 = vld [vmem:[%s422 + $0x129] sm:$0xff]
      %v705 = vld [vmem:[%s422 + $0x139] sm:$0xff]
      %v706 = vld [vmem:[%s422 + $0x141] sm:$0xff]
      %v707 = vld [vmem:[%s422 + $0x151] sm:$0xff]
      %v708 = vld [vmem:[%s422 + $0x159] sm:$0xff]
      %v709 = vld [vmem:[%s422 + $0x169] sm:$0xff]
      %v710 = vld [vmem:[%s422 + $0x171] sm:$0xff]
      %v711 = vld [vmem:[%s422 + $0x2] sm:$0xff]
      %v712 = vld [vmem:[%s422 + $0xa] sm:$0xff]
      %v713 = vld [vmem:[%s422 + $0x1a] sm:$0xff]
      %v714 = vld [vmem:[%s422 + $0x22] sm:$0xff]
      %v715 = vld [vmem:[%s422 + $0x32] sm:$0xff]
      %v716 = vld [vmem:[%s422 + $0x3a] sm:$0xff]
      %v717 = vld [vmem:[%s422 + $0x4a] sm:$0xff]
      %v718 = vld [vmem:[%s422 + $0x52] sm:$0xff]
      %v719 = vld [vmem:[%s422 + $0x62] sm:$0xff]
      %v720 = vld [vmem:[%s422 + $0x6a] sm:$0xff]
      %v721 = vld [vmem:[%s422 + $0x7a] sm:$0xff]
      %v722 = vld [vmem:[%s422 + $0x82] sm:$0xff]
      %v723 = vld [vmem:[%s422 + $0x92] sm:$0xff]
      %v724 = vld [vmem:[%s422 + $0x9a] sm:$0xff]
      %v725 = vld [vmem:[%s422 + $0xaa] sm:$0xff]
      %v726 = vld [vmem:[%s422 + $0xb2] sm:$0xff]
      %v727 = vld [vmem:[%s422 + $0xc2] sm:$0xff]
      %v728 = vld [vmem:[%s422 + $0xca] sm:$0xff]
      %v729 = vld [vmem:[%s422 + $0xda] sm:$0xff]
      %v730 = vld [vmem:[%s422 + $0xe2] sm:$0xff]
      %v731 = vld [vmem:[%s422 + $0xf2] sm:$0xff]
      %v732 = vld [vmem:[%s422 + $0xfa] sm:$0xff]
      %v733 = vld [vmem:[%s422 + $0x10a] sm:$0xff]
      %v734 = vld [vmem:[%s422 + $0x112] sm:$0xff]
      %v735 = vld [vmem:[%s422 + $0x122] sm:$0xff]
      %v736 = vld [vmem:[%s422 + $0x12a] sm:$0xff]
      %v737 = vld [vmem:[%s422 + $0x13a] sm:$0xff]
      %v738 = vld [vmem:[%s422 + $0x142] sm:$0xff]
      %v739 = vld [vmem:[%s422 + $0x152] sm:$0xff]
      %v740 = vld [vmem:[%s422 + $0x15a] sm:$0xff]
      %v741 = vld [vmem:[%s422 + $0x16a] sm:$0xff]
      %v742 = vld [vmem:[%s422 + $0x172] sm:$0xff]
      %v743 = vpack.c.bf16 %v648, %v647
      %v744 = vpack.c.bf16 %v680, %v679
      %v745 = vpack.c.bf16 %v712, %v711
      %v746 = vpack.c.bf16 %v650, %v649
      %v747 = vpack.c.bf16 %v682, %v681
      %v748 = vpack.c.bf16 %v714, %v713
      %v749 = vpack.c.bf16 %v652, %v651
      %v750 = vpack.c.bf16 %v684, %v683
      %v751 = vpack.c.bf16 %v716, %v715
      %v752 = vpack.c.bf16 %v654, %v653
      %v753 = vpack.c.bf16 %v686, %v685
      %v754 = vpack.c.bf16 %v718, %v717
      %v755 = vpack.c.bf16 %v656, %v655
      %v756 = vpack.c.bf16 %v688, %v687
      %v757 = vpack.c.bf16 %v720, %v719
      %v758 = vpack.c.bf16 %v658, %v657
      %v759 = vpack.c.bf16 %v690, %v689
      %v760 = vpack.c.bf16 %v722, %v721
      %v761 = vpack.c.bf16 %v660, %v659
      %v762 = vpack.c.bf16 %v692, %v691
      %v763 = vpack.c.bf16 %v724, %v723
      %v764 = vpack.c.bf16 %v662, %v661
      %v765 = vpack.c.bf16 %v694, %v693
      %v766 = vpack.c.bf16 %v726, %v725
      %v767 = vpack.c.bf16 %v664, %v663
      %v768 = vpack.c.bf16 %v696, %v695
      %v769 = vpack.c.bf16 %v728, %v727
      %v770 = vpack.c.bf16 %v666, %v665
      %v771 = vpack.c.bf16 %v698, %v697
      %v772 = vpack.c.bf16 %v730, %v729
      %v773 = vpack.c.bf16 %v668, %v667
      %v774 = vpack.c.bf16 %v700, %v699
      %v775 = vpack.c.bf16 %v732, %v731
      %v776 = vpack.c.bf16 %v670, %v669
      %v777 = vpack.c.bf16 %v702, %v701
      %v778 = vpack.c.bf16 %v734, %v733
      %v779 = vpack.c.bf16 %v672, %v671
      %v780 = vpack.c.bf16 %v704, %v703
      %v781 = vpack.c.bf16 %v736, %v735
      %v782 = vpack.c.bf16 %v674, %v673
      %v783 = vpack.c.bf16 %v706, %v705
      %v784 = vpack.c.bf16 %v738, %v737
      %v785 = vpack.c.bf16 %v676, %v675
      %v786 = vpack.c.bf16 %v708, %v707
      %v787 = vpack.c.bf16 %v740, %v739
      %v788 = vpack.c.bf16 %v678, %v677
      %v789 = vpack.c.bf16 %v710, %v709
      %v790 = vpack.c.bf16 %v742, %v741
      %s791 = scalar_lea.vmem %s3, 192
      %v792 = vld [vmem:[%s791] sm:$0xf]
      %v793 = vld [vmem:[%s791 + $0x4] sm:$0xf]
      %v794 = vld [vmem:[%s791 + $0x8] sm:$0xf]
      %v795 = vld [vmem:[%s791 + $0xc] sm:$0xf]
      %v796 = vld [vmem:[%s791 + $0x10] sm:$0xf]
      %v797 = vld [vmem:[%s791 + $0x14] sm:$0xf]
      %v798 = vld [vmem:[%s791 + $0x18] sm:$0xf]
      %v799 = vld [vmem:[%s791 + $0x1c] sm:$0xf]
      %v800 = vld [vmem:[%s791 + $0x20] sm:$0xf]
      %v801 = vld [vmem:[%s791 + $0x24] sm:$0xf]
      %v802 = vld [vmem:[%s791 + $0x28] sm:$0xf]
      %v803 = vld [vmem:[%s791 + $0x2c] sm:$0xf]
      %v804 = vld [vmem:[%s791 + $0x30] sm:$0xf]
      %v805 = vld [vmem:[%s791 + $0x34] sm:$0xf]
      %v806 = vld [vmem:[%s791 + $0x38] sm:$0xf]
      %v807 = vld [vmem:[%s791 + $0x3c] sm:$0xf]
      %v808 = vld [vmem:[%s791 + $0x40] sm:$0xf]
      %v809 = vld [vmem:[%s791 + $0x44] sm:$0xf]
      %v810 = vld [vmem:[%s791 + $0x48] sm:$0xf]
      %v811 = vld [vmem:[%s791 + $0x4c] sm:$0xf]
      %v812 = vld [vmem:[%s791 + $0x50] sm:$0xf]
      %v813 = vld [vmem:[%s791 + $0x54] sm:$0xf]
      %v814 = vld [vmem:[%s791 + $0x58] sm:$0xf]
      %v815 = vld [vmem:[%s791 + $0x5c] sm:$0xf]
      %v816 = vld [vmem:[%s791 + $0x60] sm:$0xf]
      %v817 = vld [vmem:[%s791 + $0x64] sm:$0xf]
      %v818 = vld [vmem:[%s791 + $0x68] sm:$0xf]
      %v819 = vld [vmem:[%s791 + $0x6c] sm:$0xf]
      %v820 = vld [vmem:[%s791 + $0x70] sm:$0xf]
      %v821 = vld [vmem:[%s791 + $0x74] sm:$0xf]
      %v822 = vld [vmem:[%s791 + $0x78] sm:$0xf]
      %v823 = vld [vmem:[%s791 + $0x7c] sm:$0xf]
      %v824 = vld [vmem:[%s791 + $0x80] sm:$0xf]
      %v825 = vld [vmem:[%s791 + $0x84] sm:$0xf]
      %v826 = vld [vmem:[%s791 + $0x88] sm:$0xf]
      %v827 = vld [vmem:[%s791 + $0x8c] sm:$0xf]
      %v828 = vld [vmem:[%s791 + $0x90] sm:$0xf]
      %v829 = vld [vmem:[%s791 + $0x94] sm:$0xf]
      %v830 = vld [vmem:[%s791 + $0x98] sm:$0xf]
      %v831 = vld [vmem:[%s791 + $0x9c] sm:$0xf]
      %v832 = vld [vmem:[%s791 + $0xa0] sm:$0xf]
      %v833 = vld [vmem:[%s791 + $0xa4] sm:$0xf]
      %v834 = vld [vmem:[%s791 + $0xa8] sm:$0xf]
      %v835 = vld [vmem:[%s791 + $0xac] sm:$0xf]
      %v836 = vld [vmem:[%s791 + $0xb0] sm:$0xf]
      %v837 = vld [vmem:[%s791 + $0xb4] sm:$0xf]
      %v838 = vld [vmem:[%s791 + $0xb8] sm:$0xf]
      %v839 = vld [vmem:[%s791 + $0xbc] sm:$0xf]
      %v888 = vunpack.c.l.b16 %v792
      %v889 = vunpack.c.l.b16 %v793
      %v890 = vunpack.c.l.b16 %v794
      %v891 = vunpack.c.l.b16 %v795
      %v892 = vunpack.c.l.b16 %v796
      %v893 = vunpack.c.l.b16 %v797
      %v894 = vunpack.c.l.b16 %v798
      %v895 = vunpack.c.l.b16 %v799
      %v896 = vunpack.c.l.b16 %v800
      %v897 = vunpack.c.l.b16 %v801
      %v898 = vunpack.c.l.b16 %v802
      %v899 = vunpack.c.l.b16 %v803
      %v900 = vunpack.c.l.b16 %v804
      %v901 = vunpack.c.l.b16 %v805
      %v902 = vunpack.c.l.b16 %v806
      %v903 = vunpack.c.l.b16 %v807
      %v904 = vunpack.c.l.b16 %v808
      %v905 = vunpack.c.l.b16 %v809
      %v906 = vunpack.c.l.b16 %v810
      %v907 = vunpack.c.l.b16 %v811
      %v908 = vunpack.c.l.b16 %v812
      %v909 = vunpack.c.l.b16 %v813
      %v910 = vunpack.c.l.b16 %v814
      %v911 = vunpack.c.l.b16 %v815
      %v912 = vunpack.c.l.b16 %v816
      %v913 = vunpack.c.l.b16 %v817
      %v914 = vunpack.c.l.b16 %v818
      %v915 = vunpack.c.l.b16 %v819
      %v916 = vunpack.c.l.b16 %v820
      %v917 = vunpack.c.l.b16 %v821
      %v918 = vunpack.c.l.b16 %v822
      %v919 = vunpack.c.l.b16 %v823
      %v920 = vunpack.c.l.b16 %v824
      %v921 = vunpack.c.l.b16 %v825
      %v922 = vunpack.c.l.b16 %v826
      %v923 = vunpack.c.l.b16 %v827
      %v924 = vunpack.c.l.b16 %v828
      %v925 = vunpack.c.l.b16 %v829
      %v926 = vunpack.c.l.b16 %v830
      %v927 = vunpack.c.l.b16 %v831
      %v928 = vunpack.c.l.b16 %v832
      %v929 = vunpack.c.l.b16 %v833
      %v930 = vunpack.c.l.b16 %v834
      %v931 = vunpack.c.l.b16 %v835
      %v932 = vunpack.c.l.b16 %v836
      %v933 = vunpack.c.l.b16 %v837
      %v934 = vunpack.c.l.b16 %v838
      %v935 = vunpack.c.l.b16 %v839
      %v936 = vpack.c.b16 %v889, %v888
      %v937 = vpack.c.b16 %v891, %v890
      %v938 = vpack.c.b16 %v893, %v892
      %v939 = vpack.c.b16 %v895, %v894
      %v940 = vpack.c.b16 %v897, %v896
      %v941 = vpack.c.b16 %v899, %v898
      %v942 = vpack.c.b16 %v901, %v900
      %v943 = vpack.c.b16 %v903, %v902
      %v944 = vpack.c.b16 %v905, %v904
      %v945 = vpack.c.b16 %v907, %v906
      %v946 = vpack.c.b16 %v909, %v908
      %v947 = vpack.c.b16 %v911, %v910
      %v948 = vpack.c.b16 %v913, %v912
      %v949 = vpack.c.b16 %v915, %v914
      %v950 = vpack.c.b16 %v917, %v916
      %v951 = vpack.c.b16 %v919, %v918
      %v952 = vpack.c.b16 %v921, %v920
      %v953 = vpack.c.b16 %v923, %v922
      %v954 = vpack.c.b16 %v925, %v924
      %v955 = vpack.c.b16 %v927, %v926
      %v956 = vpack.c.b16 %v929, %v928
      %v957 = vpack.c.b16 %v931, %v930
      %v958 = vpack.c.b16 %v933, %v932
      %v959 = vpack.c.b16 %v935, %v934
      %984 = vmatprep.subr.bf16.mxu0 0
      %985 = vmatpush1.bf16.msra.mxu0 %v936
      %986 = vmatprep.subr.bf16.mxu0 0
      %987 = vmatpush1.bf16.msra.mxu0 %v937
      %988 = vmatprep.subr.bf16.mxu0 0
      %989 = vmatpush1.bf16.msra.mxu0 %v938
      %990 = vmatprep.subr.bf16.mxu0 0
      %991 = vmatpush1.bf16.msra.mxu0 %v939
      %992 = vmatprep.subr.bf16.mxu0 0
      %993 = vmatpush1.bf16.msra.mxu0 %v940
      %994 = vmatprep.subr.bf16.mxu0 0
      %995 = vmatpush1.bf16.msra.mxu0 %v941
      %996 = vmatprep.subr.bf16.mxu0 0
      %997 = vmatpush1.bf16.msra.mxu0 %v942
      %998 = vmatprep.subr.bf16.mxu0 0
      %999 = vmatpush1.bf16.msra.mxu0 %v943
      %1000 = vmatprep.subr.bf16.mxu0 0
      %1001 = vmatpush1.bf16.msra.mxu0 %v944
      %1002 = vmatprep.subr.bf16.mxu0 0
      %1003 = vmatpush1.bf16.msra.mxu0 %v945
      %1004 = vmatprep.subr.bf16.mxu0 0
      %1005 = vmatpush1.bf16.msra.mxu0 %v946
      %1006 = vmatprep.subr.bf16.mxu0 0
      %1007 = vmatpush1.bf16.msra.mxu0 %v947
      %1008 = vmatprep.subr.bf16.mxu0 0
      %1009 = vmatpush1.bf16.msra.mxu0 %v948
      %1010 = vmatprep.subr.bf16.mxu0 0
      %1011 = vmatpush1.bf16.msra.mxu0 %v949
      %1012 = vmatprep.subr.bf16.mxu0 0
      %1013 = vmatpush1.bf16.msra.mxu0 %v950
      %1014 = vmatprep.subr.bf16.mxu0 0
      %1015 = vmatpush1.bf16.msra.mxu0 %v951
      %1016 = vmatprep.mubr.bf16.mxu0 %v744
      %1017 = vmatmul.mubr.bf16.gmra.mrb[0].mxu0 %v743
      %v1018 = vpop.f32.mrb[0].mxu0
      %v1019 = vadd.f32 0.0, %v1018
      %v1020 = vpop.f32.mrb[0].mxu0
      %v1021 = vpop.f32.mrb[0].mxu0
      %v1022 = vadd.f32 0.0, %v1021
      %v1023 = vpop.f32.mrb[0].mxu0
      %1024 = vmatprep.mubr.bf16.mxu0 %v747
      %1025 = vmatmul.mubr.bf16.gmra.mrb[0].mxu0 %v746
      %v1026 = vpop.f32.mrb[0].mxu0
      %v1027 = vadd.f32 0.0, %v1026
      %v1028 = vpop.f32.mrb[0].mxu0
      %v1029 = vpop.f32.mrb[0].mxu0
      %v1030 = vadd.f32 0.0, %v1029
      %v1031 = vpop.f32.mrb[0].mxu0
      %1032 = vmatprep.mubr.bf16.mxu0 %v750
      %1033 = vmatmul.mubr.bf16.gmra.mrb[0].mxu0 %v749
      %v1034 = vpop.f32.mrb[0].mxu0
      %v1035 = vadd.f32 0.0, %v1034
      %v1036 = vpop.f32.mrb[0].mxu0
      %v1037 = vpop.f32.mrb[0].mxu0
      %v1038 = vadd.f32 0.0, %v1037
      %v1039 = vpop.f32.mrb[0].mxu0
      %1040 = vmatprep.mubr.bf16.mxu0 %v753
      %1041 = vmatmul.mubr.bf16.gmra.mrb[0].mxu0 %v752
      %v1042 = vpop.f32.mrb[0].mxu0
      %v1043 = vadd.f32 0.0, %v1042
      %v1044 = vpop.f32.mrb[0].mxu0
      %v1045 = vpop.f32.mrb[0].mxu0
      %v1046 = vadd.f32 0.0, %v1045
      %v1047 = vpop.f32.mrb[0].mxu0
      %1048 = vmatprep.mubr.bf16.mxu0 %v756
      %1049 = vmatmul.mubr.bf16.gmra.mrb[0].mxu0 %v755
      %v1050 = vpop.f32.mrb[0].mxu0
      %v1051 = vadd.f32 0.0, %v1050
      %v1052 = vpop.f32.mrb[0].mxu0
      %v1053 = vpop.f32.mrb[0].mxu0
      %v1054 = vadd.f32 0.0, %v1053
      %v1055 = vpop.f32.mrb[0].mxu0
      %1056 = vmatprep.mubr.bf16.mxu0 %v759
      %1057 = vmatmul.mubr.bf16.gmra.mrb[0].mxu0 %v758
      %v1058 = vpop.f32.mrb[0].mxu0
      %v1059 = vadd.f32 0.0, %v1058
      %v1060 = vpop.f32.mrb[0].mxu0
      %v1061 = vpop.f32.mrb[0].mxu0
      %v1062 = vadd.f32 0.0, %v1061
      %v1063 = vpop.f32.mrb[0].mxu0
      %1064 = vmatprep.mubr.bf16.mxu0 %v762
      %1065 = vmatmul.mubr.bf16.gmra.mrb[0].mxu0 %v761
      %v1066 = vpop.f32.mrb[0].mxu0
      %v1067 = vadd.f32 0.0, %v1066
      %v1068 = vpop.f32.mrb[0].mxu0
      %v1069 = vpop.f32.mrb[0].mxu0
      %v1070 = vadd.f32 0.0, %v1069
      %v1071 = vpop.f32.mrb[0].mxu0
      %1072 = vmatprep.mubr.bf16.mxu0 %v765
      %1073 = vmatmul.mubr.bf16.gmra.mrb[0].mxu0 %v764
      %v1074 = vpop.f32.mrb[0].mxu0
      %v1075 = vadd.f32 0.0, %v1074
      %v1076 = vpop.f32.mrb[0].mxu0
      %v1077 = vpop.f32.mrb[0].mxu0
      %v1078 = vadd.f32 0.0, %v1077
      %v1079 = vpop.f32.mrb[0].mxu0
      %1080 = vmatprep.mubr.bf16.mxu0 %v768
      %1081 = vmatmul.mubr.bf16.gmra.mrb[0].mxu0 %v767
      %v1082 = vpop.f32.mrb[0].mxu0
      %v1083 = vadd.f32 0.0, %v1082
      %v1084 = vpop.f32.mrb[0].mxu0
      %v1085 = vpop.f32.mrb[0].mxu0
      %v1086 = vadd.f32 0.0, %v1085
      %v1087 = vpop.f32.mrb[0].mxu0
      %1088 = vmatprep.mubr.bf16.mxu0 %v771
      %1089 = vmatmul.mubr.bf16.gmra.mrb[0].mxu0 %v770
      %v1090 = vpop.f32.mrb[0].mxu0
      %v1091 = vadd.f32 0.0, %v1090
      %v1092 = vpop.f32.mrb[0].mxu0
      %v1093 = vpop.f32.mrb[0].mxu0
      %v1094 = vadd.f32 0.0, %v1093
      %v1095 = vpop.f32.mrb[0].mxu0
      %1096 = vmatprep.mubr.bf16.mxu0 %v774
      %1097 = vmatmul.mubr.bf16.gmra.mrb[0].mxu0 %v773
      %v1098 = vpop.f32.mrb[0].mxu0
      %v1099 = vadd.f32 0.0, %v1098
      %v1100 = vpop.f32.mrb[0].mxu0
      %v1101 = vpop.f32.mrb[0].mxu0
      %v1102 = vadd.f32 0.0, %v1101
      %v1103 = vpop.f32.mrb[0].mxu0
      %1104 = vmatprep.mubr.bf16.mxu0 %v777
      %1105 = vmatmul.mubr.bf16.gmra.mrb[0].mxu0 %v776
      %v1106 = vpop.f32.mrb[0].mxu0
      %v1107 = vadd.f32 0.0, %v1106
      %v1108 = vpop.f32.mrb[0].mxu0
      %v1109 = vpop.f32.mrb[0].mxu0
      %v1110 = vadd.f32 0.0, %v1109
      %v1111 = vpop.f32.mrb[0].mxu0
      %1112 = vmatprep.mubr.bf16.mxu0 %v780
      %1113 = vmatmul.mubr.bf16.gmra.mrb[0].mxu0 %v779
      %v1114 = vpop.f32.mrb[0].mxu0
      %v1115 = vadd.f32 0.0, %v1114
      %v1116 = vpop.f32.mrb[0].mxu0
      %v1117 = vpop.f32.mrb[0].mxu0
      %v1118 = vadd.f32 0.0, %v1117
      %v1119 = vpop.f32.mrb[0].mxu0
      %1120 = vmatprep.mubr.bf16.mxu0 %v783
      %1121 = vmatmul.mubr.bf16.gmra.mrb[0].mxu0 %v782
      %v1122 = vpop.f32.mrb[0].mxu0
      %v1123 = vadd.f32 0.0, %v1122
      %v1124 = vpop.f32.mrb[0].mxu0
      %v1125 = vpop.f32.mrb[0].mxu0
      %v1126 = vadd.f32 0.0, %v1125
      %v1127 = vpop.f32.mrb[0].mxu0
      %1128 = vmatprep.mubr.bf16.mxu0 %v786
      %1129 = vmatmul.mubr.bf16.gmra.mrb[0].mxu0 %v785
      %v1130 = vpop.f32.mrb[0].mxu0
      %v1131 = vadd.f32 0.0, %v1130
      %v1132 = vpop.f32.mrb[0].mxu0
      %v1133 = vpop.f32.mrb[0].mxu0
      %v1134 = vadd.f32 0.0, %v1133
      %v1135 = vpop.f32.mrb[0].mxu0
      %1136 = vmatprep.mubr.bf16.mxu0 %v789
      %1137 = vmatmul.mubr.bf16.gmra.mrb[0].mxu0 %v788
      %v1138 = vpop.f32.mrb[0].mxu0
      %v1139 = vadd.f32 0.0, %v1138
      %v1140 = vpop.f32.mrb[0].mxu0
      %v1141 = vpop.f32.mrb[0].mxu0
      %v1142 = vadd.f32 0.0, %v1141
      %v1143 = vpop.f32.mrb[0].mxu0
      %1144 = vdwg.mxu0
      %1145 = vmatprep.subr.bf16.mxu0 0
      %1146 = vmatpush1.bf16.msra.mxu0 %v952
      %1147 = vmatprep.subr.bf16.mxu0 0
      %1148 = vmatpush1.bf16.msra.mxu0 %v953
      %1149 = vmatprep.subr.bf16.mxu0 0
      %1150 = vmatpush1.bf16.msra.mxu0 %v954
      %1151 = vmatprep.subr.bf16.mxu0 0
      %1152 = vmatpush1.bf16.msra.mxu0 %v955
      %1153 = vmatprep.subr.bf16.mxu0 0
      %1154 = vmatpush1.bf16.msra.mxu0 %v956
      %1155 = vmatprep.subr.bf16.mxu0 0
      %1156 = vmatpush1.bf16.msra.mxu0 %v957
      %1157 = vmatprep.subr.bf16.mxu0 0
      %1158 = vmatpush1.bf16.msra.mxu0 %v958
      %1159 = vmatprep.subr.bf16.mxu0 0
      %1160 = vmatpush1.bf16.msra.mxu0 %v959
      %1161 = vmatprep.subr.bf16.mxu0 0
      %1162 = vmatpush1.bf16.msra.mxu0 0
      %1163 = vmatprep.subr.bf16.mxu0 0
      %1164 = vmatpush1.bf16.msra.mxu0 0
      %1165 = vmatprep.subr.bf16.mxu0 0
      %1166 = vmatpush1.bf16.msra.mxu0 0
      %1167 = vmatprep.subr.bf16.mxu0 0
      %1168 = vmatpush1.bf16.msra.mxu0 0
      %1169 = vmatprep.subr.bf16.mxu0 0
      %1170 = vmatpush1.bf16.msra.mxu0 0
      %1171 = vmatprep.subr.bf16.mxu0 0
      %1172 = vmatpush1.bf16.msra.mxu0 0
      %1173 = vmatprep.subr.bf16.mxu0 0
      %1174 = vmatpush1.bf16.msra.mxu0 0
      %1175 = vmatprep.subr.bf16.mxu0 0
      %1176 = vmatpush1.bf16.msra.mxu0 0
      %1177 = vmatprep.mubr.bf16.mxu0 0
      %1178 = vmatmul.mubr.bf16.gmra.mrb[0].mxu0 %v745
      %v1179 = vpop.f32.mrb[0].mxu0
      %v1180 = vadd.f32 %v1019, %v1179
      %v1181 = vpop.f32.mrb[0].mxu0
      %v1182 = vpop.f32.mrb[0].mxu0
      %v1183 = vadd.f32 %v1022, %v1182
      %v1184 = vpop.f32.mrb[0].mxu0
      %1185 = vmatprep.mubr.bf16.mxu0 0
      %1186 = vmatmul.mubr.bf16.gmra.mrb[0].mxu0 %v748
      %v1187 = vpop.f32.mrb[0].mxu0
      %v1188 = vadd.f32 %v1027, %v1187
      %v1189 = vpop.f32.mrb[0].mxu0
      %v1190 = vpop.f32.mrb[0].mxu0
      %v1191 = vadd.f32 %v1030, %v1190
      %v1192 = vpop.f32.mrb[0].mxu0
      %1193 = vmatprep.mubr.bf16.mxu0 0
      %1194 = vmatmul.mubr.bf16.gmra.mrb[0].mxu0 %v751
      %v1195 = vpop.f32.mrb[0].mxu0
      %v1196 = vadd.f32 %v1035, %v1195
      %v1197 = vpop.f32.mrb[0].mxu0
      %v1198 = vpop.f32.mrb[0].mxu0
      %v1199 = vadd.f32 %v1038, %v1198
      %v1200 = vpop.f32.mrb[0].mxu0
      %1201 = vmatprep.mubr.bf16.mxu0 0
      %1202 = vmatmul.mubr.bf16.gmra.mrb[0].mxu0 %v754
      %v1203 = vpop.f32.mrb[0].mxu0
      %v1204 = vadd.f32 %v1043, %v1203
      %v1205 = vpop.f32.mrb[0].mxu0
      %v1206 = vpop.f32.mrb[0].mxu0
      %v1207 = vadd.f32 %v1046, %v1206
      %v1208 = vpop.f32.mrb[0].mxu0
      %1209 = vmatprep.mubr.bf16.mxu0 0
      %1210 = vmatmul.mubr.bf16.gmra.mrb[0].mxu0 %v757
      %v1211 = vpop.f32.mrb[0].mxu0
      %v1212 = vadd.f32 %v1051, %v1211
      %v1213 = vpop.f32.mrb[0].mxu0
      %v1214 = vpop.f32.mrb[0].mxu0
      %v1215 = vadd.f32 %v1054, %v1214
      %v1216 = vpop.f32.mrb[0].mxu0
      %1217 = vmatprep.mubr.bf16.mxu0 0
      %1218 = vmatmul.mubr.bf16.gmra.mrb[0].mxu0 %v760
      %v1219 = vpop.f32.mrb[0].mxu0
      %v1220 = vadd.f32 %v1059, %v1219
      %v1221 = vpop.f32.mrb[0].mxu0
      %v1222 = vpop.f32.mrb[0].mxu0
      %v1223 = vadd.f32 %v1062, %v1222
      %v1224 = vpop.f32.mrb[0].mxu0
      %1225 = vmatprep.mubr.bf16.mxu0 0
      %1226 = vmatmul.mubr.bf16.gmra.mrb[0].mxu0 %v763
      %v1227 = vpop.f32.mrb[0].mxu0
      %v1228 = vadd.f32 %v1067, %v1227
      %v1229 = vpop.f32.mrb[0].mxu0
      %v1230 = vpop.f32.mrb[0].mxu0
      %v1231 = vadd.f32 %v1070, %v1230
      %v1232 = vpop.f32.mrb[0].mxu0
      %1233 = vmatprep.mubr.bf16.mxu0 0
      %1234 = vmatmul.mubr.bf16.gmra.mrb[0].mxu0 %v766
      %v1235 = vpop.f32.mrb[0].mxu0
      %v1236 = vadd.f32 %v1075, %v1235
      %v1237 = vpop.f32.mrb[0].mxu0
      %v1238 = vpop.f32.mrb[0].mxu0
      %v1239 = vadd.f32 %v1078, %v1238
      %v1240 = vpop.f32.mrb[0].mxu0
      %1241 = vmatprep.mubr.bf16.mxu0 0
      %1242 = vmatmul.mubr.bf16.gmra.mrb[0].mxu0 %v769
      %v1243 = vpop.f32.mrb[0].mxu0
      %v1244 = vadd.f32 %v1083, %v1243
      %v1245 = vpop.f32.mrb[0].mxu0
      %v1246 = vpop.f32.mrb[0].mxu0
      %v1247 = vadd.f32 %v1086, %v1246
      %v1248 = vpop.f32.mrb[0].mxu0
      %1249 = vmatprep.mubr.bf16.mxu0 0
      %1250 = vmatmul.mubr.bf16.gmra.mrb[0].mxu0 %v772
      %v1251 = vpop.f32.mrb[0].mxu0
      %v1252 = vadd.f32 %v1091, %v1251
      %v1253 = vpop.f32.mrb[0].mxu0
      %v1254 = vpop.f32.mrb[0].mxu0
      %v1255 = vadd.f32 %v1094, %v1254
      %v1256 = vpop.f32.mrb[0].mxu0
      %1257 = vmatprep.mubr.bf16.mxu0 0
      %1258 = vmatmul.mubr.bf16.gmra.mrb[0].mxu0 %v775
      %v1259 = vpop.f32.mrb[0].mxu0
      %v1260 = vadd.f32 %v1099, %v1259
      %v1261 = vpop.f32.mrb[0].mxu0
      %v1262 = vpop.f32.mrb[0].mxu0
      %v1263 = vadd.f32 %v1102, %v1262
      %v1264 = vpop.f32.mrb[0].mxu0
      %1265 = vmatprep.mubr.bf16.mxu0 0
      %1266 = vmatmul.mubr.bf16.gmra.mrb[0].mxu0 %v778
      %v1267 = vpop.f32.mrb[0].mxu0
      %v1268 = vadd.f32 %v1107, %v1267
      %v1269 = vpop.f32.mrb[0].mxu0
      %v1270 = vpop.f32.mrb[0].mxu0
      %v1271 = vadd.f32 %v1110, %v1270
      %v1272 = vpop.f32.mrb[0].mxu0
      %1273 = vmatprep.mubr.bf16.mxu0 0
      %1274 = vmatmul.mubr.bf16.gmra.mrb[0].mxu0 %v781
      %v1275 = vpop.f32.mrb[0].mxu0
      %v1276 = vadd.f32 %v1115, %v1275
      %v1277 = vpop.f32.mrb[0].mxu0
      %v1278 = vpop.f32.mrb[0].mxu0
      %v1279 = vadd.f32 %v1118, %v1278
      %v1280 = vpop.f32.mrb[0].mxu0
      %1281 = vmatprep.mubr.bf16.mxu0 0
      %1282 = vmatmul.mubr.bf16.gmra.mrb[0].mxu0 %v784
      %v1283 = vpop.f32.mrb[0].mxu0
      %v1284 = vadd.f32 %v1123, %v1283
      %v1285 = vpop.f32.mrb[0].mxu0
      %v1286 = vpop.f32.mrb[0].mxu0
      %v1287 = vadd.f32 %v1126, %v1286
      %v1288 = vpop.f32.mrb[0].mxu0
      %1289 = vmatprep.mubr.bf16.mxu0 0
      %1290 = vmatmul.mubr.bf16.gmra.mrb[0].mxu0 %v787
      %v1291 = vpop.f32.mrb[0].mxu0
      %v1292 = vadd.f32 %v1131, %v1291
      %v1293 = vpop.f32.mrb[0].mxu0
      %v1294 = vpop.f32.mrb[0].mxu0
      %v1295 = vadd.f32 %v1134, %v1294
      %v1296 = vpop.f32.mrb[0].mxu0
      %1297 = vmatprep.mubr.bf16.mxu0 0
      %1298 = vmatmul.mubr.bf16.gmra.mrb[0].mxu0 %v790
      %v1299 = vpop.f32.mrb[0].mxu0
      %v1300 = vadd.f32 %v1139, %v1299
      %v1301 = vpop.f32.mrb[0].mxu0
      %v1302 = vpop.f32.mrb[0].mxu0
      %v1303 = vadd.f32 %v1142, %v1302
      %v1304 = vpop.f32.mrb[0].mxu0
      %1305 = vdwg.mxu0
      %v1354 = vunpack.c.l.b16 %v599
      %v1355 = vunpack.c.l.b16 %v600
      %v1356 = vunpack.c.l.b16 %v601
      %v1357 = vunpack.c.l.b16 %v602
      %v1358 = vunpack.c.l.b16 %v603
      %v1359 = vunpack.c.l.b16 %v604
      %v1360 = vunpack.c.l.b16 %v605
      %v1361 = vunpack.c.l.b16 %v606
      %v1362 = vunpack.c.l.b16 %v607
      %v1363 = vunpack.c.l.b16 %v608
      %v1364 = vunpack.c.l.b16 %v609
      %v1365 = vunpack.c.l.b16 %v610
      %v1366 = vunpack.c.l.b16 %v611
      %v1367 = vunpack.c.l.b16 %v612
      %v1368 = vunpack.c.l.b16 %v613
      %v1369 = vunpack.c.l.b16 %v614
      %v1370 = vunpack.c.l.b16 %v615
      %v1371 = vunpack.c.l.b16 %v616
      %v1372 = vunpack.c.l.b16 %v617
      %v1373 = vunpack.c.l.b16 %v618
      %v1374 = vunpack.c.l.b16 %v619
      %v1375 = vunpack.c.l.b16 %v620
      %v1376 = vunpack.c.l.b16 %v621
      %v1377 = vunpack.c.l.b16 %v622
      %v1378 = vunpack.c.l.b16 %v623
      %v1379 = vunpack.c.l.b16 %v624
      %v1380 = vunpack.c.l.b16 %v625
      %v1381 = vunpack.c.l.b16 %v626
      %v1382 = vunpack.c.l.b16 %v627
      %v1383 = vunpack.c.l.b16 %v628
      %v1384 = vunpack.c.l.b16 %v629
      %v1385 = vunpack.c.l.b16 %v630
      %v1386 = vunpack.c.l.b16 %v631
      %v1387 = vunpack.c.l.b16 %v632
      %v1388 = vunpack.c.l.b16 %v633
      %v1389 = vunpack.c.l.b16 %v634
      %v1390 = vunpack.c.l.b16 %v635
      %v1391 = vunpack.c.l.b16 %v636
      %v1392 = vunpack.c.l.b16 %v637
      %v1393 = vunpack.c.l.b16 %v638
      %v1394 = vunpack.c.l.b16 %v639
      %v1395 = vunpack.c.l.b16 %v640
      %v1396 = vunpack.c.l.b16 %v641
      %v1397 = vunpack.c.l.b16 %v642
      %v1398 = vunpack.c.l.b16 %v643
      %v1399 = vunpack.c.l.b16 %v644
      %v1400 = vunpack.c.l.b16 %v645
      %v1401 = vunpack.c.l.b16 %v646
      %v1402 = vpack.c.b16 %v1355, %v1354
      %v1403 = vpack.c.b16 %v1357, %v1356
      %v1404 = vpack.c.b16 %v1359, %v1358
      %v1405 = vpack.c.b16 %v1361, %v1360
      %v1406 = vpack.c.b16 %v1363, %v1362
      %v1407 = vpack.c.b16 %v1365, %v1364
      %v1408 = vpack.c.b16 %v1367, %v1366
      %v1409 = vpack.c.b16 %v1369, %v1368
      %v1410 = vpack.c.b16 %v1371, %v1370
      %v1411 = vpack.c.b16 %v1373, %v1372
      %v1412 = vpack.c.b16 %v1375, %v1374
      %v1413 = vpack.c.b16 %v1377, %v1376
      %v1414 = vpack.c.b16 %v1379, %v1378
      %v1415 = vpack.c.b16 %v1381, %v1380
      %v1416 = vpack.c.b16 %v1383, %v1382
      %v1417 = vpack.c.b16 %v1385, %v1384
      %v1418 = vpack.c.b16 %v1387, %v1386
      %v1419 = vpack.c.b16 %v1389, %v1388
      %v1420 = vpack.c.b16 %v1391, %v1390
      %v1421 = vpack.c.b16 %v1393, %v1392
      %v1422 = vpack.c.b16 %v1395, %v1394
      %v1423 = vpack.c.b16 %v1397, %v1396
      %v1424 = vpack.c.b16 %v1399, %v1398
      %v1425 = vpack.c.b16 %v1401, %v1400
      %1450 = vmatprep.subr.bf16.mxu0 0
      %1451 = vmatpush1.bf16.msra.mxu0 %v1402
      %1452 = vmatprep.subr.bf16.mxu0 0
      %1453 = vmatpush1.bf16.msra.mxu0 %v1403
      %1454 = vmatprep.subr.bf16.mxu0 0
      %1455 = vmatpush1.bf16.msra.mxu0 %v1404
      %1456 = vmatprep.subr.bf16.mxu0 0
      %1457 = vmatpush1.bf16.msra.mxu0 %v1405
      %1458 = vmatprep.subr.bf16.mxu0 0
      %1459 = vmatpush1.bf16.msra.mxu0 %v1406
      %1460 = vmatprep.subr.bf16.mxu0 0
      %1461 = vmatpush1.bf16.msra.mxu0 %v1407
      %1462 = vmatprep.subr.bf16.mxu0 0
      %1463 = vmatpush1.bf16.msra.mxu0 %v1408
      %1464 = vmatprep.subr.bf16.mxu0 0
      %1465 = vmatpush1.bf16.msra.mxu0 %v1409
      %1466 = vmatprep.subr.bf16.mxu0 0
      %1467 = vmatpush1.bf16.msra.mxu0 %v1410
      %1468 = vmatprep.subr.bf16.mxu0 0
      %1469 = vmatpush1.bf16.msra.mxu0 %v1411
      %1470 = vmatprep.subr.bf16.mxu0 0
      %1471 = vmatpush1.bf16.msra.mxu0 %v1412
      %1472 = vmatprep.subr.bf16.mxu0 0
      %1473 = vmatpush1.bf16.msra.mxu0 %v1413
      %1474 = vmatprep.subr.bf16.mxu0 0
      %1475 = vmatpush1.bf16.msra.mxu0 %v1414
      %1476 = vmatprep.subr.bf16.mxu0 0
      %1477 = vmatpush1.bf16.msra.mxu0 %v1415
      %1478 = vmatprep.subr.bf16.mxu0 0
      %1479 = vmatpush1.bf16.msra.mxu0 %v1416
      %1480 = vmatprep.subr.bf16.mxu0 0
      %1481 = vmatpush1.bf16.msra.mxu0 %v1417
      %1482 = vmatprep.mubr.bf16.mxu0 %v552
      %1483 = vmatmul.mubr.bf16.gmra.mrb[0].mxu0 %v551
      %v1484 = vpop.f32.mrb[0].mxu0
      %v1485 = vadd.f32 %v1180, %v1484
      %v1486 = vpop.f32.mrb[0].mxu0
      %v1487 = vpop.f32.mrb[0].mxu0
      %v1488 = vadd.f32 %v1183, %v1487
      %v1489 = vpop.f32.mrb[0].mxu0
      %1490 = vmatprep.mubr.bf16.mxu0 %v555
      %1491 = vmatmul.mubr.bf16.gmra.mrb[0].mxu0 %v554
      %v1492 = vpop.f32.mrb[0].mxu0
      %v1493 = vadd.f32 %v1188, %v1492
      %v1494 = vpop.f32.mrb[0].mxu0
      %v1495 = vpop.f32.mrb[0].mxu0
      %v1496 = vadd.f32 %v1191, %v1495
      %v1497 = vpop.f32.mrb[0].mxu0
      %1498 = vmatprep.mubr.bf16.mxu0 %v558
      %1499 = vmatmul.mubr.bf16.gmra.mrb[0].mxu0 %v557
      %v1500 = vpop.f32.mrb[0].mxu0
      %v1501 = vadd.f32 %v1196, %v1500
      %v1502 = vpop.f32.mrb[0].mxu0
      %v1503 = vpop.f32.mrb[0].mxu0
      %v1504 = vadd.f32 %v1199, %v1503
      %v1505 = vpop.f32.mrb[0].mxu0
      %1506 = vmatprep.mubr.bf16.mxu0 %v561
      %1507 = vmatmul.mubr.bf16.gmra.mrb[0].mxu0 %v560
      %v1508 = vpop.f32.mrb[0].mxu0
      %v1509 = vadd.f32 %v1204, %v1508
      %v1510 = vpop.f32.mrb[0].mxu0
      %v1511 = vpop.f32.mrb[0].mxu0
      %v1512 = vadd.f32 %v1207, %v1511
      %v1513 = vpop.f32.mrb[0].mxu0
      %1514 = vmatprep.mubr.bf16.mxu0 %v564
      %1515 = vmatmul.mubr.bf16.gmra.mrb[0].mxu0 %v563
      %v1516 = vpop.f32.mrb[0].mxu0
      %v1517 = vadd.f32 %v1212, %v1516
      %v1518 = vpop.f32.mrb[0].mxu0
      %v1519 = vpop.f32.mrb[0].mxu0
      %v1520 = vadd.f32 %v1215, %v1519
      %v1521 = vpop.f32.mrb[0].mxu0
      %1522 = vmatprep.mubr.bf16.mxu0 %v567
      %1523 = vmatmul.mubr.bf16.gmra.mrb[0].mxu0 %v566
      %v1524 = vpop.f32.mrb[0].mxu0
      %v1525 = vadd.f32 %v1220, %v1524
      %v1526 = vpop.f32.mrb[0].mxu0
      %v1527 = vpop.f32.mrb[0].mxu0
      %v1528 = vadd.f32 %v1223, %v1527
      %v1529 = vpop.f32.mrb[0].mxu0
      %1530 = vmatprep.mubr.bf16.mxu0 %v570
      %1531 = vmatmul.mubr.bf16.gmra.mrb[0].mxu0 %v569
      %v1532 = vpop.f32.mrb[0].mxu0
      %v1533 = vadd.f32 %v1228, %v1532
      %v1534 = vpop.f32.mrb[0].mxu0
      %v1535 = vpop.f32.mrb[0].mxu0
      %v1536 = vadd.f32 %v1231, %v1535
      %v1537 = vpop.f32.mrb[0].mxu0
      %1538 = vmatprep.mubr.bf16.mxu0 %v573
      %1539 = vmatmul.mubr.bf16.gmra.mrb[0].mxu0 %v572
      %v1540 = vpop.f32.mrb[0].mxu0
      %v1541 = vadd.f32 %v1236, %v1540
      %v1542 = vpop.f32.mrb[0].mxu0
      %v1543 = vpop.f32.mrb[0].mxu0
      %v1544 = vadd.f32 %v1239, %v1543
      %v1545 = vpop.f32.mrb[0].mxu0
      %1546 = vmatprep.mubr.bf16.mxu0 %v576
      %1547 = vmatmul.mubr.bf16.gmra.mrb[0].mxu0 %v575
      %v1548 = vpop.f32.mrb[0].mxu0
      %v1549 = vadd.f32 %v1244, %v1548
      %v1550 = vpop.f32.mrb[0].mxu0
      %v1551 = vpop.f32.mrb[0].mxu0
      %v1552 = vadd.f32 %v1247, %v1551
      %v1553 = vpop.f32.mrb[0].mxu0
      %1554 = vmatprep.mubr.bf16.mxu0 %v579
      %1555 = vmatmul.mubr.bf16.gmra.mrb[0].mxu0 %v578
      %v1556 = vpop.f32.mrb[0].mxu0
      %v1557 = vadd.f32 %v1252, %v1556
      %v1558 = vpop.f32.mrb[0].mxu0
      %v1559 = vpop.f32.mrb[0].mxu0
      %v1560 = vadd.f32 %v1255, %v1559
      %v1561 = vpop.f32.mrb[0].mxu0
      %1562 = vmatprep.mubr.bf16.mxu0 %v582
      %1563 = vmatmul.mubr.bf16.gmra.mrb[0].mxu0 %v581
      %v1564 = vpop.f32.mrb[0].mxu0
      %v1565 = vadd.f32 %v1260, %v1564
      %v1566 = vpop.f32.mrb[0].mxu0
      %v1567 = vpop.f32.mrb[0].mxu0
      %v1568 = vadd.f32 %v1263, %v1567
      %v1569 = vpop.f32.mrb[0].mxu0
      %1570 = vmatprep.mubr.bf16.mxu0 %v585
      %1571 = vmatmul.mubr.bf16.gmra.mrb[0].mxu0 %v584
      %v1572 = vpop.f32.mrb[0].mxu0
      %v1573 = vadd.f32 %v1268, %v1572
      %v1574 = vpop.f32.mrb[0].mxu0
      %v1575 = vpop.f32.mrb[0].mxu0
      %v1576 = vadd.f32 %v1271, %v1575
      %v1577 = vpop.f32.mrb[0].mxu0
      %1578 = vmatprep.mubr.bf16.mxu0 %v588
      %1579 = vmatmul.mubr.bf16.gmra.mrb[0].mxu0 %v587
      %v1580 = vpop.f32.mrb[0].mxu0
      %v1581 = vadd.f32 %v1276, %v1580
      %v1582 = vpop.f32.mrb[0].mxu0
      %v1583 = vpop.f32.mrb[0].mxu0
      %v1584 = vadd.f32 %v1279, %v1583
      %v1585 = vpop.f32.mrb[0].mxu0
      %1586 = vmatprep.mubr.bf16.mxu0 %v591
      %1587 = vmatmul.mubr.bf16.gmra.mrb[0].mxu0 %v590
      %v1588 = vpop.f32.mrb[0].mxu0
      %v1589 = vadd.f32 %v1284, %v1588
      %v1590 = vpop.f32.mrb[0].mxu0
      %v1591 = vpop.f32.mrb[0].mxu0
      %v1592 = vadd.f32 %v1287, %v1591
      %v1593 = vpop.f32.mrb[0].mxu0
      %1594 = vmatprep.mubr.bf16.mxu0 %v594
      %1595 = vmatmul.mubr.bf16.gmra.mrb[0].mxu0 %v593
      %v1596 = vpop.f32.mrb[0].mxu0
      %v1597 = vadd.f32 %v1292, %v1596
      %v1598 = vpop.f32.mrb[0].mxu0
      %v1599 = vpop.f32.mrb[0].mxu0
      %v1600 = vadd.f32 %v1295, %v1599
      %v1601 = vpop.f32.mrb[0].mxu0
      %1602 = vmatprep.mubr.bf16.mxu0 %v597
      %1603 = vmatmul.mubr.bf16.gmra.mrb[0].mxu0 %v596
      %v1604 = vpop.f32.mrb[0].mxu0
      %v1605 = vadd.f32 %v1300, %v1604
      %v1606 = vpop.f32.mrb[0].mxu0
      %v1607 = vpop.f32.mrb[0].mxu0
      %v1608 = vadd.f32 %v1303, %v1607
      %v1609 = vpop.f32.mrb[0].mxu0
      %1610 = vdwg.mxu0
      %1611 = vmatprep.subr.bf16.mxu0 0
      %1612 = vmatpush1.bf16.msra.mxu0 %v1418
      %1613 = vmatprep.subr.bf16.mxu0 0
      %1614 = vmatpush1.bf16.msra.mxu0 %v1419
      %1615 = vmatprep.subr.bf16.mxu0 0
      %1616 = vmatpush1.bf16.msra.mxu0 %v1420
      %1617 = vmatprep.subr.bf16.mxu0 0
      %1618 = vmatpush1.bf16.msra.mxu0 %v1421
      %1619 = vmatprep.subr.bf16.mxu0 0
      %1620 = vmatpush1.bf16.msra.mxu0 %v1422
      %1621 = vmatprep.subr.bf16.mxu0 0
      %1622 = vmatpush1.bf16.msra.mxu0 %v1423
      %1623 = vmatprep.subr.bf16.mxu0 0
      %1624 = vmatpush1.bf16.msra.mxu0 %v1424
      %1625 = vmatprep.subr.bf16.mxu0 0
      %1626 = vmatpush1.bf16.msra.mxu0 %v1425
      %1627 = vmatprep.subr.bf16.mxu0 0
      %1628 = vmatpush1.bf16.msra.mxu0 0
      %1629 = vmatprep.subr.bf16.mxu0 0
      %1630 = vmatpush1.bf16.msra.mxu0 0
      %1631 = vmatprep.subr.bf16.mxu0 0
      %1632 = vmatpush1.bf16.msra.mxu0 0
      %1633 = vmatprep.subr.bf16.mxu0 0
      %1634 = vmatpush1.bf16.msra.mxu0 0
      %1635 = vmatprep.subr.bf16.mxu0 0
      %1636 = vmatpush1.bf16.msra.mxu0 0
      %1637 = vmatprep.subr.bf16.mxu0 0
      %1638 = vmatpush1.bf16.msra.mxu0 0
      %1639 = vmatprep.subr.bf16.mxu0 0
      %1640 = vmatpush1.bf16.msra.mxu0 0
      %1641 = vmatprep.subr.bf16.mxu0 0
      %1642 = vmatpush1.bf16.msra.mxu0 0
      %1643 = vmatprep.mubr.bf16.mxu0 0
      %1644 = vmatmul.mubr.bf16.gmra.mrb[0].mxu0 %v553
      %v1645 = vpop.f32.mrb[0].mxu0
      %v1646 = vadd.f32 %v1485, %v1645
      %v1647 = vpop.f32.mrb[0].mxu0
      %v1648 = vpop.f32.mrb[0].mxu0
      %v1649 = vadd.f32 %v1488, %v1648
      %v1650 = vpop.f32.mrb[0].mxu0
      %1651 = vmatprep.mubr.bf16.mxu0 0
      %1652 = vmatmul.mubr.bf16.gmra.mrb[0].mxu0 %v556
      %v1653 = vpop.f32.mrb[0].mxu0
      %v1654 = vadd.f32 %v1493, %v1653
      %v1655 = vpop.f32.mrb[0].mxu0
      %v1656 = vpop.f32.mrb[0].mxu0
      %v1657 = vadd.f32 %v1496, %v1656
      %v1658 = vpop.f32.mrb[0].mxu0
      %1659 = vmatprep.mubr.bf16.mxu0 0
      %1660 = vmatmul.mubr.bf16.gmra.mrb[0].mxu0 %v559
      %v1661 = vpop.f32.mrb[0].mxu0
      %v1662 = vadd.f32 %v1501, %v1661
      %v1663 = vpop.f32.mrb[0].mxu0
      %v1664 = vpop.f32.mrb[0].mxu0
      %v1665 = vadd.f32 %v1504, %v1664
      %v1666 = vpop.f32.mrb[0].mxu0
      %1667 = vmatprep.mubr.bf16.mxu0 0
      %1668 = vmatmul.mubr.bf16.gmra.mrb[0].mxu0 %v562
      %v1669 = vpop.f32.mrb[0].mxu0
      %v1670 = vadd.f32 %v1509, %v1669
      %v1671 = vpop.f32.mrb[0].mxu0
      %v1672 = vpop.f32.mrb[0].mxu0
      %v1673 = vadd.f32 %v1512, %v1672
      %v1674 = vpop.f32.mrb[0].mxu0
      %1675 = vmatprep.mubr.bf16.mxu0 0
      %1676 = vmatmul.mubr.bf16.gmra.mrb[0].mxu0 %v565
      %v1677 = vpop.f32.mrb[0].mxu0
      %v1678 = vadd.f32 %v1517, %v1677
      %v1679 = vpop.f32.mrb[0].mxu0
      %v1680 = vpop.f32.mrb[0].mxu0
      %v1681 = vadd.f32 %v1520, %v1680
      %v1682 = vpop.f32.mrb[0].mxu0
      %1683 = vmatprep.mubr.bf16.mxu0 0
      %1684 = vmatmul.mubr.bf16.gmra.mrb[0].mxu0 %v568
      %v1685 = vpop.f32.mrb[0].mxu0
      %v1686 = vadd.f32 %v1525, %v1685
      %v1687 = vpop.f32.mrb[0].mxu0
      %v1688 = vpop.f32.mrb[0].mxu0
      %v1689 = vadd.f32 %v1528, %v1688
      %v1690 = vpop.f32.mrb[0].mxu0
      %1691 = vmatprep.mubr.bf16.mxu0 0
      %1692 = vmatmul.mubr.bf16.gmra.mrb[0].mxu0 %v571
      %v1693 = vpop.f32.mrb[0].mxu0
      %v1694 = vadd.f32 %v1533, %v1693
      %v1695 = vpop.f32.mrb[0].mxu0
      %v1696 = vpop.f32.mrb[0].mxu0
      %v1697 = vadd.f32 %v1536, %v1696
      %v1698 = vpop.f32.mrb[0].mxu0
      %1699 = vmatprep.mubr.bf16.mxu0 0
      %1700 = vmatmul.mubr.bf16.gmra.mrb[0].mxu0 %v574
      %v1701 = vpop.f32.mrb[0].mxu0
      %v1702 = vadd.f32 %v1541, %v1701
      %v1703 = vpop.f32.mrb[0].mxu0
      %v1704 = vpop.f32.mrb[0].mxu0
      %v1705 = vadd.f32 %v1544, %v1704
      %v1706 = vpop.f32.mrb[0].mxu0
      %1707 = vmatprep.mubr.bf16.mxu0 0
      %1708 = vmatmul.mubr.bf16.gmra.mrb[0].mxu0 %v577
      %v1709 = vpop.f32.mrb[0].mxu0
      %v1710 = vadd.f32 %v1549, %v1709
      %v1711 = vpop.f32.mrb[0].mxu0
      %v1712 = vpop.f32.mrb[0].mxu0
      %v1713 = vadd.f32 %v1552, %v1712
      %v1714 = vpop.f32.mrb[0].mxu0
      %1715 = vmatprep.mubr.bf16.mxu0 0
      %1716 = vmatmul.mubr.bf16.gmra.mrb[0].mxu0 %v580
      %v1717 = vpop.f32.mrb[0].mxu0
      %v1718 = vadd.f32 %v1557, %v1717
      %v1719 = vpop.f32.mrb[0].mxu0
      %v1720 = vpop.f32.mrb[0].mxu0
      %v1721 = vadd.f32 %v1560, %v1720
      %v1722 = vpop.f32.mrb[0].mxu0
      %1723 = vmatprep.mubr.bf16.mxu0 0
      %1724 = vmatmul.mubr.bf16.gmra.mrb[0].mxu0 %v583
      %v1725 = vpop.f32.mrb[0].mxu0
      %v1726 = vadd.f32 %v1565, %v1725
      %v1727 = vpop.f32.mrb[0].mxu0
      %v1728 = vpop.f32.mrb[0].mxu0
      %v1729 = vadd.f32 %v1568, %v1728
      %v1730 = vpop.f32.mrb[0].mxu0
      %1731 = vmatprep.mubr.bf16.mxu0 0
      %1732 = vmatmul.mubr.bf16.gmra.mrb[0].mxu0 %v586
      %v1733 = vpop.f32.mrb[0].mxu0
      %v1734 = vadd.f32 %v1573, %v1733
      %v1735 = vpop.f32.mrb[0].mxu0
      %v1736 = vpop.f32.mrb[0].mxu0
      %v1737 = vadd.f32 %v1576, %v1736
      %v1738 = vpop.f32.mrb[0].mxu0
      %1739 = vmatprep.mubr.bf16.mxu0 0
      %1740 = vmatmul.mubr.bf16.gmra.mrb[0].mxu0 %v589
      %v1741 = vpop.f32.mrb[0].mxu0
      %v1742 = vadd.f32 %v1581, %v1741
      %v1743 = vpop.f32.mrb[0].mxu0
      %v1744 = vpop.f32.mrb[0].mxu0
      %v1745 = vadd.f32 %v1584, %v1744
      %v1746 = vpop.f32.mrb[0].mxu0
      %1747 = vmatprep.mubr.bf16.mxu0 0
      %1748 = vmatmul.mubr.bf16.gmra.mrb[0].mxu0 %v592
      %v1749 = vpop.f32.mrb[0].mxu0
      %v1750 = vadd.f32 %v1589, %v1749
      %v1751 = vpop.f32.mrb[0].mxu0
      %v1752 = vpop.f32.mrb[0].mxu0
      %v1753 = vadd.f32 %v1592, %v1752
      %v1754 = vpop.f32.mrb[0].mxu0
      %1755 = vmatprep.mubr.bf16.mxu0 0
      %1756 = vmatmul.mubr.bf16.gmra.mrb[0].mxu0 %v595
      %v1757 = vpop.f32.mrb[0].mxu0
      %v1758 = vadd.f32 %v1597, %v1757
      %v1759 = vpop.f32.mrb[0].mxu0
      %v1760 = vpop.f32.mrb[0].mxu0
      %v1761 = vadd.f32 %v1600, %v1760
      %v1762 = vpop.f32.mrb[0].mxu0
      %1763 = vmatprep.mubr.bf16.mxu0 0
      %1764 = vmatmul.mubr.bf16.gmra.mrb[0].mxu0 %v598
      %v1765 = vpop.f32.mrb[0].mxu0
      %v1766 = vadd.f32 %v1605, %v1765
      %v1767 = vpop.f32.mrb[0].mxu0
      %v1768 = vpop.f32.mrb[0].mxu0
      %v1769 = vadd.f32 %v1608, %v1768
      %v1770 = vpop.f32.mrb[0].mxu0
      %1771 = vdwg.mxu0
      %s1772 = scalar_lea.vmem [#allocation2], 48
      %v1773 = vld [vmem:[%s1772] sm:$0xff]
      %v1774 = vld [vmem:[%s1772 + $0x8] sm:$0xff]
      %v1775 = vld [vmem:[%s1772 + $0x18] sm:$0xff]
      %v1776 = vld [vmem:[%s1772 + $0x20] sm:$0xff]
      %v1777 = vld [vmem:[%s1772 + $0x30] sm:$0xff]
      %v1778 = vld [vmem:[%s1772 + $0x38] sm:$0xff]
      %v1779 = vld [vmem:[%s1772 + $0x48] sm:$0xff]
      %v1780 = vld [vmem:[%s1772 + $0x50] sm:$0xff]
      %v1781 = vld [vmem:[%s1772 + $0x60] sm:$0xff]
      %v1782 = vld [vmem:[%s1772 + $0x68] sm:$0xff]
      %v1783 = vld [vmem:[%s1772 + $0x78] sm:$0xff]
      %v1784 = vld [vmem:[%s1772 + $0x80] sm:$0xff]
      %v1785 = vld [vmem:[%s1772 + $0x90] sm:$0xff]
      %v1786 = vld [vmem:[%s1772 + $0x98] sm:$0xff]
      %v1787 = vld [vmem:[%s1772 + $0xa8] sm:$0xff]
      %v1788 = vld [vmem:[%s1772 + $0xb0] sm:$0xff]
      %v1789 = vld [vmem:[%s1772 + $0xc0] sm:$0xff]
      %v1790 = vld [vmem:[%s1772 + $0xc8] sm:$0xff]
      %v1791 = vld [vmem:[%s1772 + $0xd8] sm:$0xff]
      %v1792 = vld [vmem:[%s1772 + $0xe0] sm:$0xff]
      %v1793 = vld [vmem:[%s1772 + $0xf0] sm:$0xff]
      %v1794 = vld [vmem:[%s1772 + $0xf8] sm:$0xff]
      %v1795 = vld [vmem:[%s1772 + $0x108] sm:$0xff]
      %v1796 = vld [vmem:[%s1772 + $0x110] sm:$0xff]
      %v1797 = vld [vmem:[%s1772 + $0x120] sm:$0xff]
      %v1798 = vld [vmem:[%s1772 + $0x128] sm:$0xff]
      %v1799 = vld [vmem:[%s1772 + $0x138] sm:$0xff]
      %v1800 = vld [vmem:[%s1772 + $0x140] sm:$0xff]
      %v1801 = vld [vmem:[%s1772 + $0x150] sm:$0xff]
      %v1802 = vld [vmem:[%s1772 + $0x158] sm:$0xff]
      %v1803 = vld [vmem:[%s1772 + $0x168] sm:$0xff]
      %v1804 = vld [vmem:[%s1772 + $0x170] sm:$0xff]
      %v1805 = vld [vmem:[%s1772 + $0x1] sm:$0xff]
      %v1806 = vld [vmem:[%s1772 + $0x9] sm:$0xff]
      %v1807 = vld [vmem:[%s1772 + $0x19] sm:$0xff]
      %v1808 = vld [vmem:[%s1772 + $0x21] sm:$0xff]
      %v1809 = vld [vmem:[%s1772 + $0x31] sm:$0xff]
      %v1810 = vld [vmem:[%s1772 + $0x39] sm:$0xff]
      %v1811 = vld [vmem:[%s1772 + $0x49] sm:$0xff]
      %v1812 = vld [vmem:[%s1772 + $0x51] sm:$0xff]
      %v1813 = vld [vmem:[%s1772 + $0x61] sm:$0xff]
      %v1814 = vld [vmem:[%s1772 + $0x69] sm:$0xff]
      %v1815 = vld [vmem:[%s1772 + $0x79] sm:$0xff]
      %v1816 = vld [vmem:[%s1772 + $0x81] sm:$0xff]
      %v1817 = vld [vmem:[%s1772 + $0x91] sm:$0xff]
      %v1818 = vld [vmem:[%s1772 + $0x99] sm:$0xff]
      %v1819 = vld [vmem:[%s1772 + $0xa9] sm:$0xff]
      %v1820 = vld [vmem:[%s1772 + $0xb1] sm:$0xff]
      %v1821 = vld [vmem:[%s1772 + $0xc1] sm:$0xff]
      %v1822 = vld [vmem:[%s1772 + $0xc9] sm:$0xff]
      %v1823 = vld [vmem:[%s1772 + $0xd9] sm:$0xff]
      %v1824 = vld [vmem:[%s1772 + $0xe1] sm:$0xff]
      %v1825 = vld [vmem:[%s1772 + $0xf1] sm:$0xff]
      %v1826 = vld [vmem:[%s1772 + $0xf9] sm:$0xff]
      %v1827 = vld [vmem:[%s1772 + $0x109] sm:$0xff]
      %v1828 = vld [vmem:[%s1772 + $0x111] sm:$0xff]
      %v1829 = vld [vmem:[%s1772 + $0x121] sm:$0xff]
      %v1830 = vld [vmem:[%s1772 + $0x129] sm:$0xff]
      %v1831 = vld [vmem:[%s1772 + $0x139] sm:$0xff]
      %v1832 = vld [vmem:[%s1772 + $0x141] sm:$0xff]
      %v1833 = vld [vmem:[%s1772 + $0x151] sm:$0xff]
      %v1834 = vld [vmem:[%s1772 + $0x159] sm:$0xff]
      %v1835 = vld [vmem:[%s1772 + $0x169] sm:$0xff]
      %v1836 = vld [vmem:[%s1772 + $0x171] sm:$0xff]
      %v1837 = vld [vmem:[%s1772 + $0x2] sm:$0xff]
      %v1838 = vld [vmem:[%s1772 + $0xa] sm:$0xff]
      %v1839 = vld [vmem:[%s1772 + $0x1a] sm:$0xff]
      %v1840 = vld [vmem:[%s1772 + $0x22] sm:$0xff]
      %v1841 = vld [vmem:[%s1772 + $0x32] sm:$0xff]
      %v1842 = vld [vmem:[%s1772 + $0x3a] sm:$0xff]
      %v1843 = vld [vmem:[%s1772 + $0x4a] sm:$0xff]
      %v1844 = vld [vmem:[%s1772 + $0x52] sm:$0xff]
      %v1845 = vld [vmem:[%s1772 + $0x62] sm:$0xff]
      %v1846 = vld [vmem:[%s1772 + $0x6a] sm:$0xff]
      %v1847 = vld [vmem:[%s1772 + $0x7a] sm:$0xff]
      %v1848 = vld [vmem:[%s1772 + $0x82] sm:$0xff]
      %v1849 = vld [vmem:[%s1772 + $0x92] sm:$0xff]
      %v1850 = vld [vmem:[%s1772 + $0x9a] sm:$0xff]
      %v1851 = vld [vmem:[%s1772 + $0xaa] sm:$0xff]
      %v1852 = vld [vmem:[%s1772 + $0xb2] sm:$0xff]
      %v1853 = vld [vmem:[%s1772 + $0xc2] sm:$0xff]
      %v1854 = vld [vmem:[%s1772 + $0xca] sm:$0xff]
      %v1855 = vld [vmem:[%s1772 + $0xda] sm:$0xff]
      %v1856 = vld [vmem:[%s1772 + $0xe2] sm:$0xff]
      %v1857 = vld [vmem:[%s1772 + $0xf2] sm:$0xff]
      %v1858 = vld [vmem:[%s1772 + $0xfa] sm:$0xff]
      %v1859 = vld [vmem:[%s1772 + $0x10a] sm:$0xff]
      %v1860 = vld [vmem:[%s1772 + $0x112] sm:$0xff]
      %v1861 = vld [vmem:[%s1772 + $0x122] sm:$0xff]
      %v1862 = vld [vmem:[%s1772 + $0x12a] sm:$0xff]
      %v1863 = vld [vmem:[%s1772 + $0x13a] sm:$0xff]
      %v1864 = vld [vmem:[%s1772 + $0x142] sm:$0xff]
      %v1865 = vld [vmem:[%s1772 + $0x152] sm:$0xff]
      %v1866 = vld [vmem:[%s1772 + $0x15a] sm:$0xff]
      %v1867 = vld [vmem:[%s1772 + $0x16a] sm:$0xff]
      %v1868 = vld [vmem:[%s1772 + $0x172] sm:$0xff]
      %v1869 = vpack.c.bf16 %v1774, %v1773
      %v1870 = vpack.c.bf16 %v1806, %v1805
      %v1871 = vpack.c.bf16 %v1838, %v1837
      %v1872 = vpack.c.bf16 %v1776, %v1775
      %v1873 = vpack.c.bf16 %v1808, %v1807
      %v1874 = vpack.c.bf16 %v1840, %v1839
      %v1875 = vpack.c.bf16 %v1778, %v1777
      %v1876 = vpack.c.bf16 %v1810, %v1809
      %v1877 = vpack.c.bf16 %v1842, %v1841
      %v1878 = vpack.c.bf16 %v1780, %v1779
      %v1879 = vpack.c.bf16 %v1812, %v1811
      %v1880 = vpack.c.bf16 %v1844, %v1843
      %v1881 = vpack.c.bf16 %v1782, %v1781
      %v1882 = vpack.c.bf16 %v1814, %v1813
      %v1883 = vpack.c.bf16 %v1846, %v1845
      %v1884 = vpack.c.bf16 %v1784, %v1783
      %v1885 = vpack.c.bf16 %v1816, %v1815
      %v1886 = vpack.c.bf16 %v1848, %v1847
      %v1887 = vpack.c.bf16 %v1786, %v1785
      %v1888 = vpack.c.bf16 %v1818, %v1817
      %v1889 = vpack.c.bf16 %v1850, %v1849
      %v1890 = vpack.c.bf16 %v1788, %v1787
      %v1891 = vpack.c.bf16 %v1820, %v1819
      %v1892 = vpack.c.bf16 %v1852, %v1851
      %v1893 = vpack.c.bf16 %v1790, %v1789
      %v1894 = vpack.c.bf16 %v1822, %v1821
      %v1895 = vpack.c.bf16 %v1854, %v1853
      %v1896 = vpack.c.bf16 %v1792, %v1791
      %v1897 = vpack.c.bf16 %v1824, %v1823
      %v1898 = vpack.c.bf16 %v1856, %v1855
      %v1899 = vpack.c.bf16 %v1794, %v1793
      %v1900 = vpack.c.bf16 %v1826, %v1825
      %v1901 = vpack.c.bf16 %v1858, %v1857
      %v1902 = vpack.c.bf16 %v1796, %v1795
      %v1903 = vpack.c.bf16 %v1828, %v1827
      %v1904 = vpack.c.bf16 %v1860, %v1859
      %v1905 = vpack.c.bf16 %v1798, %v1797
      %v1906 = vpack.c.bf16 %v1830, %v1829
      %v1907 = vpack.c.bf16 %v1862, %v1861
      %v1908 = vpack.c.bf16 %v1800, %v1799
      %v1909 = vpack.c.bf16 %v1832, %v1831
      %v1910 = vpack.c.bf16 %v1864, %v1863
      %v1911 = vpack.c.bf16 %v1802, %v1801
      %v1912 = vpack.c.bf16 %v1834, %v1833
      %v1913 = vpack.c.bf16 %v1866, %v1865
      %v1914 = vpack.c.bf16 %v1804, %v1803
      %v1915 = vpack.c.bf16 %v1836, %v1835
      %v1916 = vpack.c.bf16 %v1868, %v1867
      %s1917 = scalar_lea.vmem %s3, 384
      %v1918 = vld [vmem:[%s1917] sm:$0xf]
      %v1919 = vld [vmem:[%s1917 + $0x4] sm:$0xf]
      %v1920 = vld [vmem:[%s1917 + $0x8] sm:$0xf]
      %v1921 = vld [vmem:[%s1917 + $0xc] sm:$0xf]
      %v1922 = vld [vmem:[%s1917 + $0x10] sm:$0xf]
      %v1923 = vld [vmem:[%s1917 + $0x14] sm:$0xf]
      %v1924 = vld [vmem:[%s1917 + $0x18] sm:$0xf]
      %v1925 = vld [vmem:[%s1917 + $0x1c] sm:$0xf]
      %v1926 = vld [vmem:[%s1917 + $0x20] sm:$0xf]
      %v1927 = vld [vmem:[%s1917 + $0x24] sm:$0xf]
      %v1928 = vld [vmem:[%s1917 + $0x28] sm:$0xf]
      %v1929 = vld [vmem:[%s1917 + $0x2c] sm:$0xf]
      %v1930 = vld [vmem:[%s1917 + $0x30] sm:$0xf]
      %v1931 = vld [vmem:[%s1917 + $0x34] sm:$0xf]
      %v1932 = vld [vmem:[%s1917 + $0x38] sm:$0xf]
      %v1933 = vld [vmem:[%s1917 + $0x3c] sm:$0xf]
      %v1934 = vld [vmem:[%s1917 + $0x40] sm:$0xf]
      %v1935 = vld [vmem:[%s1917 + $0x44] sm:$0xf]
      %v1936 = vld [vmem:[%s1917 + $0x48] sm:$0xf]
      %v1937 = vld [vmem:[%s1917 + $0x4c] sm:$0xf]
      %v1938 = vld [vmem:[%s1917 + $0x50] sm:$0xf]
      %v1939 = vld [vmem:[%s1917 + $0x54] sm:$0xf]
      %v1940 = vld [vmem:[%s1917 + $0x58] sm:$0xf]
      %v1941 = vld [vmem:[%s1917 + $0x5c] sm:$0xf]
      %v1942 = vld [vmem:[%s1917 + $0x60] sm:$0xf]
      %v1943 = vld [vmem:[%s1917 + $0x64] sm:$0xf]
      %v1944 = vld [vmem:[%s1917 + $0x68] sm:$0xf]
      %v1945 = vld [vmem:[%s1917 + $0x6c] sm:$0xf]
      %v1946 = vld [vmem:[%s1917 + $0x70] sm:$0xf]
      %v1947 = vld [vmem:[%s1917 + $0x74] sm:$0xf]
      %v1948 = vld [vmem:[%s1917 + $0x78] sm:$0xf]
      %v1949 = vld [vmem:[%s1917 + $0x7c] sm:$0xf]
      %v1950 = vld [vmem:[%s1917 + $0x80] sm:$0xf]
      %v1951 = vld [vmem:[%s1917 + $0x84] sm:$0xf]
      %v1952 = vld [vmem:[%s1917 + $0x88] sm:$0xf]
      %v1953 = vld [vmem:[%s1917 + $0x8c] sm:$0xf]
      %v1954 = vld [vmem:[%s1917 + $0x90] sm:$0xf]
      %v1955 = vld [vmem:[%s1917 + $0x94] sm:$0xf]
      %v1956 = vld [vmem:[%s1917 + $0x98] sm:$0xf]
      %v1957 = vld [vmem:[%s1917 + $0x9c] sm:$0xf]
      %v1958 = vld [vmem:[%s1917 + $0xa0] sm:$0xf]
      %v1959 = vld [vmem:[%s1917 + $0xa4] sm:$0xf]
      %v1960 = vld [vmem:[%s1917 + $0xa8] sm:$0xf]
      %v1961 = vld [vmem:[%s1917 + $0xac] sm:$0xf]
      %v1962 = vld [vmem:[%s1917 + $0xb0] sm:$0xf]
      %v1963 = vld [vmem:[%s1917 + $0xb4] sm:$0xf]
      %v1964 = vld [vmem:[%s1917 + $0xb8] sm:$0xf]
      %v1965 = vld [vmem:[%s1917 + $0xbc] sm:$0xf]
      %v2014 = vunpack.c.l.b16 %v1918
      %v2015 = vunpack.c.l.b16 %v1919
      %v2016 = vunpack.c.l.b16 %v1920
      %v2017 = vunpack.c.l.b16 %v1921
      %v2018 = vunpack.c.l.b16 %v1922
      %v2019 = vunpack.c.l.b16 %v1923
      %v2020 = vunpack.c.l.b16 %v1924
      %v2021 = vunpack.c.l.b16 %v1925
      %v2022 = vunpack.c.l.b16 %v1926
      %v2023 = vunpack.c.l.b16 %v1927
      %v2024 = vunpack.c.l.b16 %v1928
      %v2025 = vunpack.c.l.b16 %v1929
      %v2026 = vunpack.c.l.b16 %v1930
      %v2027 = vunpack.c.l.b16 %v1931
      %v2028 = vunpack.c.l.b16 %v1932
      %v2029 = vunpack.c.l.b16 %v1933
      %v2030 = vunpack.c.l.b16 %v1934
      %v2031 = vunpack.c.l.b16 %v1935
      %v2032 = vunpack.c.l.b16 %v1936
      %v2033 = vunpack.c.l.b16 %v1937
      %v2034 = vunpack.c.l.b16 %v1938
      %v2035 = vunpack.c.l.b16 %v1939
      %v2036 = vunpack.c.l.b16 %v1940
      %v2037 = vunpack.c.l.b16 %v1941
      %v2038 = vunpack.c.l.b16 %v1942
      %v2039 = vunpack.c.l.b16 %v1943
      %v2040 = vunpack.c.l.b16 %v1944
      %v2041 = vunpack.c.l.b16 %v1945
      %v2042 = vunpack.c.l.b16 %v1946
      %v2043 = vunpack.c.l.b16 %v1947
      %v2044 = vunpack.c.l.b16 %v1948
      %v2045 = vunpack.c.l.b16 %v1949
      %v2046 = vunpack.c.l.b16 %v1950
      %v2047 = vunpack.c.l.b16 %v1951
      %v2048 = vunpack.c.l.b16 %v1952
      %v2049 = vunpack.c.l.b16 %v1953
      %v2050 = vunpack.c.l.b16 %v1954
      %v2051 = vunpack.c.l.b16 %v1955
      %v2052 = vunpack.c.l.b16 %v1956
      %v2053 = vunpack.c.l.b16 %v1957
      %v2054 = vunpack.c.l.b16 %v1958
      %v2055 = vunpack.c.l.b16 %v1959
      %v2056 = vunpack.c.l.b16 %v1960
      %v2057 = vunpack.c.l.b16 %v1961
      %v2058 = vunpack.c.l.b16 %v1962
      %v2059 = vunpack.c.l.b16 %v1963
      %v2060 = vunpack.c.l.b16 %v1964
      %v2061 = vunpack.c.l.b16 %v1965
      %v2062 = vpack.c.b16 %v2015, %v2014
      %v2063 = vpack.c.b16 %v2017, %v2016
      %v2064 = vpack.c.b16 %v2019, %v2018
      %v2065 = vpack.c.b16 %v2021, %v2020
      %v2066 = vpack.c.b16 %v2023, %v2022
      %v2067 = vpack.c.b16 %v2025, %v2024
      %v2068 = vpack.c.b16 %v2027, %v2026
      %v2069 = vpack.c.b16 %v2029, %v2028
      %v2070 = vpack.c.b16 %v2031, %v2030
      %v2071 = vpack.c.b16 %v2033, %v2032
      %v2072 = vpack.c.b16 %v2035, %v2034
      %v2073 = vpack.c.b16 %v2037, %v2036
      %v2074 = vpack.c.b16 %v2039, %v2038
      %v2075 = vpack.c.b16 %v2041, %v2040
      %v2076 = vpack.c.b16 %v2043, %v2042
      %v2077 = vpack.c.b16 %v2045, %v2044
      %v2078 = vpack.c.b16 %v2047, %v2046
      %v2079 = vpack.c.b16 %v2049, %v2048
      %v2080 = vpack.c.b16 %v2051, %v2050
      %v2081 = vpack.c.b16 %v2053, %v2052
      %v2082 = vpack.c.b16 %v2055, %v2054
      %v2083 = vpack.c.b16 %v2057, %v2056
      %v2084 = vpack.c.b16 %v2059, %v2058
      %v2085 = vpack.c.b16 %v2061, %v2060
      %2110 = vmatprep.subr.bf16.mxu0 0
      %2111 = vmatpush1.bf16.msra.mxu0 %v2062
      %2112 = vmatprep.subr.bf16.mxu0 0
      %2113 = vmatpush1.bf16.msra.mxu0 %v2063
      %2114 = vmatprep.subr.bf16.mxu0 0
      %2115 = vmatpush1.bf16.msra.mxu0 %v2064
      %2116 = vmatprep.subr.bf16.mxu0 0
      %2117 = vmatpush1.bf16.msra.mxu0 %v2065
      %2118 = vmatprep.subr.bf16.mxu0 0
      %2119 = vmatpush1.bf16.msra.mxu0 %v2066
      %2120 = vmatprep.subr.bf16.mxu0 0
      %2121 = vmatpush1.bf16.msra.mxu0 %v2067
      %2122 = vmatprep.subr.bf16.mxu0 0
      %2123 = vmatpush1.bf16.msra.mxu0 %v2068
      %2124 = vmatprep.subr.bf16.mxu0 0
      %2125 = vmatpush1.bf16.msra.mxu0 %v2069
      %2126 = vmatprep.subr.bf16.mxu0 0
      %2127 = vmatpush1.bf16.msra.mxu0 %v2070
      %2128 = vmatprep.subr.bf16.mxu0 0
      %2129 = vmatpush1.bf16.msra.mxu0 %v2071
      %2130 = vmatprep.subr.bf16.mxu0 0
      %2131 = vmatpush1.bf16.msra.mxu0 %v2072
      %2132 = vmatprep.subr.bf16.mxu0 0
      %2133 = vmatpush1.bf16.msra.mxu0 %v2073
      %2134 = vmatprep.subr.bf16.mxu0 0
      %2135 = vmatpush1.bf16.msra.mxu0 %v2074
      %2136 = vmatprep.subr.bf16.mxu0 0
      %2137 = vmatpush1.bf16.msra.mxu0 %v2075
      %2138 = vmatprep.subr.bf16.mxu0 0
      %2139 = vmatpush1.bf16.msra.mxu0 %v2076
      %2140 = vmatprep.subr.bf16.mxu0 0
      %2141 = vmatpush1.bf16.msra.mxu0 %v2077
      %2142 = vmatprep.mubr.bf16.mxu0 %v1870
      %2143 = vmatmul.mubr.bf16.gmra.mrb[0].mxu0 %v1869
      %v2144 = vpop.f32.mrb[0].mxu0
      %v2145 = vadd.f32 0.0, %v2144
      %v2146 = vpop.f32.mrb[0].mxu0
      %v2147 = vpop.f32.mrb[0].mxu0
      %v2148 = vadd.f32 0.0, %v2147
      %v2149 = vpop.f32.mrb[0].mxu0
      %2150 = vmatprep.mubr.bf16.mxu0 %v1873
      %2151 = vmatmul.mubr.bf16.gmra.mrb[0].mxu0 %v1872
      %v2152 = vpop.f32.mrb[0].mxu0
      %v2153 = vadd.f32 0.0, %v2152
      %v2154 = vpop.f32.mrb[0].mxu0
      %v2155 = vpop.f32.mrb[0].mxu0
      %v2156 = vadd.f32 0.0, %v2155
      %v2157 = vpop.f32.mrb[0].mxu0
      %2158 = vmatprep.mubr.bf16.mxu0 %v1876
      %2159 = vmatmul.mubr.bf16.gmra.mrb[0].mxu0 %v1875
      %v2160 = vpop.f32.mrb[0].mxu0
      %v2161 = vadd.f32 0.0, %v2160
      %v2162 = vpop.f32.mrb[0].mxu0
      %v2163 = vpop.f32.mrb[0].mxu0
      %v2164 = vadd.f32 0.0, %v2163
      %v2165 = vpop.f32.mrb[0].mxu0
      %2166 = vmatprep.mubr.bf16.mxu0 %v1879
      %2167 = vmatmul.mubr.bf16.gmra.mrb[0].mxu0 %v1878
      %v2168 = vpop.f32.mrb[0].mxu0
      %v2169 = vadd.f32 0.0, %v2168
      %v2170 = vpop.f32.mrb[0].mxu0
      %v2171 = vpop.f32.mrb[0].mxu0
      %v2172 = vadd.f32 0.0, %v2171
      %v2173 = vpop.f32.mrb[0].mxu0
      %2174 = vmatprep.mubr.bf16.mxu0 %v1882
      %2175 = vmatmul.mubr.bf16.gmra.mrb[0].mxu0 %v1881
      %v2176 = vpop.f32.mrb[0].mxu0
      %v2177 = vadd.f32 0.0, %v2176
      %v2178 = vpop.f32.mrb[0].mxu0
      %v2179 = vpop.f32.mrb[0].mxu0
      %v2180 = vadd.f32 0.0, %v2179
      %v2181 = vpop.f32.mrb[0].mxu0
      %2182 = vmatprep.mubr.bf16.mxu0 %v1885
      %2183 = vmatmul.mubr.bf16.gmra.mrb[0].mxu0 %v1884
      %v2184 = vpop.f32.mrb[0].mxu0
      %v2185 = vadd.f32 0.0, %v2184
      %v2186 = vpop.f32.mrb[0].mxu0
      %v2187 = vpop.f32.mrb[0].mxu0
      %v2188 = vadd.f32 0.0, %v2187
      %v2189 = vpop.f32.mrb[0].mxu0
      %2190 = vmatprep.mubr.bf16.mxu0 %v1888
      %2191 = vmatmul.mubr.bf16.gmra.mrb[0].mxu0 %v1887
      %v2192 = vpop.f32.mrb[0].mxu0
      %v2193 = vadd.f32 0.0, %v2192
      %v2194 = vpop.f32.mrb[0].mxu0
      %v2195 = vpop.f32.mrb[0].mxu0
      %v2196 = vadd.f32 0.0, %v2195
      %v2197 = vpop.f32.mrb[0].mxu0
      %2198 = vmatprep.mubr.bf16.mxu0 %v1891
      %2199 = vmatmul.mubr.bf16.gmra.mrb[0].mxu0 %v1890
      %v2200 = vpop.f32.mrb[0].mxu0
      %v2201 = vadd.f32 0.0, %v2200
      %v2202 = vpop.f32.mrb[0].mxu0
      %v2203 = vpop.f32.mrb[0].mxu0
      %v2204 = vadd.f32 0.0, %v2203
      %v2205 = vpop.f32.mrb[0].mxu0
      %2206 = vmatprep.mubr.bf16.mxu0 %v1894
      %2207 = vmatmul.mubr.bf16.gmra.mrb[0].mxu0 %v1893
      %v2208 = vpop.f32.mrb[0].mxu0
      %v2209 = vadd.f32 0.0, %v2208
      %v2210 = vpop.f32.mrb[0].mxu0
      %v2211 = vpop.f32.mrb[0].mxu0
      %v2212 = vadd.f32 0.0, %v2211
      %v2213 = vpop.f32.mrb[0].mxu0
      %2214 = vmatprep.mubr.bf16.mxu0 %v1897
      %2215 = vmatmul.mubr.bf16.gmra.mrb[0].mxu0 %v1896
      %v2216 = vpop.f32.mrb[0].mxu0
      %v2217 = vadd.f32 0.0, %v2216
      %v2218 = vpop.f32.mrb[0].mxu0
      %v2219 = vpop.f32.mrb[0].mxu0
      %v2220 = vadd.f32 0.0, %v2219
      %v2221 = vpop.f32.mrb[0].mxu0
      %2222 = vmatprep.mubr.bf16.mxu0 %v1900
      %2223 = vmatmul.mubr.bf16.gmra.mrb[0].mxu0 %v1899
      %v2224 = vpop.f32.mrb[0].mxu0
      %v2225 = vadd.f32 0.0, %v2224
      %v2226 = vpop.f32.mrb[0].mxu0
      %v2227 = vpop.f32.mrb[0].mxu0
      %v2228 = vadd.f32 0.0, %v2227
      %v2229 = vpop.f32.mrb[0].mxu0
      %2230 = vmatprep.mubr.bf16.mxu0 %v1903
      %2231 = vmatmul.mubr.bf16.gmra.mrb[0].mxu0 %v1902
      %v2232 = vpop.f32.mrb[0].mxu0
      %v2233 = vadd.f32 0.0, %v2232
      %v2234 = vpop.f32.mrb[0].mxu0
      %v2235 = vpop.f32.mrb[0].mxu0
      %v2236 = vadd.f32 0.0, %v2235
      %v2237 = vpop.f32.mrb[0].mxu0
      %2238 = vmatprep.mubr.bf16.mxu0 %v1906
      %2239 = vmatmul.mubr.bf16.gmra.mrb[0].mxu0 %v1905
      %v2240 = vpop.f32.mrb[0].mxu0
      %v2241 = vadd.f32 0.0, %v2240
      %v2242 = vpop.f32.mrb[0].mxu0
      %v2243 = vpop.f32.mrb[0].mxu0
      %v2244 = vadd.f32 0.0, %v2243
      %v2245 = vpop.f32.mrb[0].mxu0
      %2246 = vmatprep.mubr.bf16.mxu0 %v1909
      %2247 = vmatmul.mubr.bf16.gmra.mrb[0].mxu0 %v1908
      %v2248 = vpop.f32.mrb[0].mxu0
      %v2249 = vadd.f32 0.0, %v2248
      %v2250 = vpop.f32.mrb[0].mxu0
      %v2251 = vpop.f32.mrb[0].mxu0
      %v2252 = vadd.f32 0.0, %v2251
      %v2253 = vpop.f32.mrb[0].mxu0
      %2254 = vmatprep.mubr.bf16.mxu0 %v1912
      %2255 = vmatmul.mubr.bf16.gmra.mrb[0].mxu0 %v1911
      %v2256 = vpop.f32.mrb[0].mxu0
      %v2257 = vadd.f32 0.0, %v2256
      %v2258 = vpop.f32.mrb[0].mxu0
      %v2259 = vpop.f32.mrb[0].mxu0
      %v2260 = vadd.f32 0.0, %v2259
      %v2261 = vpop.f32.mrb[0].mxu0
      %2262 = vmatprep.mubr.bf16.mxu0 %v1915
      %2263 = vmatmul.mubr.bf16.gmra.mrb[0].mxu0 %v1914
      %v2264 = vpop.f32.mrb[0].mxu0
      %v2265 = vadd.f32 0.0, %v2264
      %v2266 = vpop.f32.mrb[0].mxu0
      %v2267 = vpop.f32.mrb[0].mxu0
      %v2268 = vadd.f32 0.0, %v2267
      %v2269 = vpop.f32.mrb[0].mxu0
      %2270 = vdwg.mxu0
      %2271 = vmatprep.subr.bf16.mxu0 0
      %2272 = vmatpush1.bf16.msra.mxu0 %v2078
      %2273 = vmatprep.subr.bf16.mxu0 0
      %2274 = vmatpush1.bf16.msra.mxu0 %v2079
      %2275 = vmatprep.subr.bf16.mxu0 0
      %2276 = vmatpush1.bf16.msra.mxu0 %v2080
      %2277 = vmatprep.subr.bf16.mxu0 0
      %2278 = vmatpush1.bf16.msra.mxu0 %v2081
      %2279 = vmatprep.subr.bf16.mxu0 0
      %2280 = vmatpush1.bf16.msra.mxu0 %v2082
      %2281 = vmatprep.subr.bf16.mxu0 0
      %2282 = vmatpush1.bf16.msra.mxu0 %v2083
      %2283 = vmatprep.subr.bf16.mxu0 0
      %2284 = vmatpush1.bf16.msra.mxu0 %v2084
      %2285 = vmatprep.subr.bf16.mxu0 0
      %2286 = vmatpush1.bf16.msra.mxu0 %v2085
      %2287 = vmatprep.subr.bf16.mxu0 0
      %2288 = vmatpush1.bf16.msra.mxu0 0
      %2289 = vmatprep.subr.bf16.mxu0 0
      %2290 = vmatpush1.bf16.msra.mxu0 0
      %2291 = vmatprep.subr.bf16.mxu0 0
      %2292 = vmatpush1.bf16.msra.mxu0 0
      %2293 = vmatprep.subr.bf16.mxu0 0
      %2294 = vmatpush1.bf16.msra.mxu0 0
      %2295 = vmatprep.subr.bf16.mxu0 0
      %2296 = vmatpush1.bf16.msra.mxu0 0
      %2297 = vmatprep.subr.bf16.mxu0 0
      %2298 = vmatpush1.bf16.msra.mxu0 0
      %2299 = vmatprep.subr.bf16.mxu0 0
      %2300 = vmatpush1.bf16.msra.mxu0 0
      %2301 = vmatprep.subr.bf16.mxu0 0
      %2302 = vmatpush1.bf16.msra.mxu0 0
      %2303 = vmatprep.mubr.bf16.mxu0 0
      %2304 = vmatmul.mubr.bf16.gmra.mrb[0].mxu0 %v1871
      %v2305 = vpop.f32.mrb[0].mxu0
      %v2306 = vadd.f32 %v2145, %v2305
      %v2307 = vpop.f32.mrb[0].mxu0
      %v2308 = vpop.f32.mrb[0].mxu0
      %v2309 = vadd.f32 %v2148, %v2308
      %v2310 = vpop.f32.mrb[0].mxu0
      %2311 = vmatprep.mubr.bf16.mxu0 0
      %2312 = vmatmul.mubr.bf16.gmra.mrb[0].mxu0 %v1874
      %v2313 = vpop.f32.mrb[0].mxu0
      %v2314 = vadd.f32 %v2153, %v2313
      %v2315 = vpop.f32.mrb[0].mxu0
      %v2316 = vpop.f32.mrb[0].mxu0
      %v2317 = vadd.f32 %v2156, %v2316
      %v2318 = vpop.f32.mrb[0].mxu0
      %2319 = vmatprep.mubr.bf16.mxu0 0
      %2320 = vmatmul.mubr.bf16.gmra.mrb[0].mxu0 %v1877
      %v2321 = vpop.f32.mrb[0].mxu0
      %v2322 = vadd.f32 %v2161, %v2321
      %v2323 = vpop.f32.mrb[0].mxu0
      %v2324 = vpop.f32.mrb[0].mxu0
      %v2325 = vadd.f32 %v2164, %v2324
      %v2326 = vpop.f32.mrb[0].mxu0
      %2327 = vmatprep.mubr.bf16.mxu0 0
      %2328 = vmatmul.mubr.bf16.gmra.mrb[0].mxu0 %v1880
      %v2329 = vpop.f32.mrb[0].mxu0
      %v2330 = vadd.f32 %v2169, %v2329
      %v2331 = vpop.f32.mrb[0].mxu0
      %v2332 = vpop.f32.mrb[0].mxu0
      %v2333 = vadd.f32 %v2172, %v2332
      %v2334 = vpop.f32.mrb[0].mxu0
      %2335 = vmatprep.mubr.bf16.mxu0 0
      %2336 = vmatmul.mubr.bf16.gmra.mrb[0].mxu0 %v1883
      %v2337 = vpop.f32.mrb[0].mxu0
      %v2338 = vadd.f32 %v2177, %v2337
      %v2339 = vpop.f32.mrb[0].mxu0
      %v2340 = vpop.f32.mrb[0].mxu0
      %v2341 = vadd.f32 %v2180, %v2340
      %v2342 = vpop.f32.mrb[0].mxu0
      %2343 = vmatprep.mubr.bf16.mxu0 0
      %2344 = vmatmul.mubr.bf16.gmra.mrb[0].mxu0 %v1886
      %v2345 = vpop.f32.mrb[0].mxu0
      %v2346 = vadd.f32 %v2185, %v2345
      %v2347 = vpop.f32.mrb[0].mxu0
      %v2348 = vpop.f32.mrb[0].mxu0
      %v2349 = vadd.f32 %v2188, %v2348
      %v2350 = vpop.f32.mrb[0].mxu0
      %2351 = vmatprep.mubr.bf16.mxu0 0
      %2352 = vmatmul.mubr.bf16.gmra.mrb[0].mxu0 %v1889
      %v2353 = vpop.f32.mrb[0].mxu0
      %v2354 = vadd.f32 %v2193, %v2353
      %v2355 = vpop.f32.mrb[0].mxu0
      %v2356 = vpop.f32.mrb[0].mxu0
      %v2357 = vadd.f32 %v2196, %v2356
      %v2358 = vpop.f32.mrb[0].mxu0
      %2359 = vmatprep.mubr.bf16.mxu0 0
      %2360 = vmatmul.mubr.bf16.gmra.mrb[0].mxu0 %v1892
      %v2361 = vpop.f32.mrb[0].mxu0
      %v2362 = vadd.f32 %v2201, %v2361
      %v2363 = vpop.f32.mrb[0].mxu0
      %v2364 = vpop.f32.mrb[0].mxu0
      %v2365 = vadd.f32 %v2204, %v2364
      %v2366 = vpop.f32.mrb[0].mxu0
      %2367 = vmatprep.mubr.bf16.mxu0 0
      %2368 = vmatmul.mubr.bf16.gmra.mrb[0].mxu0 %v1895
      %v2369 = vpop.f32.mrb[0].mxu0
      %v2370 = vadd.f32 %v2209, %v2369
      %v2371 = vpop.f32.mrb[0].mxu0
      %v2372 = vpop.f32.mrb[0].mxu0
      %v2373 = vadd.f32 %v2212, %v2372
      %v2374 = vpop.f32.mrb[0].mxu0
      %2375 = vmatprep.mubr.bf16.mxu0 0
      %2376 = vmatmul.mubr.bf16.gmra.mrb[0].mxu0 %v1898
      %v2377 = vpop.f32.mrb[0].mxu0
      %v2378 = vadd.f32 %v2217, %v2377
      %v2379 = vpop.f32.mrb[0].mxu0
      %v2380 = vpop.f32.mrb[0].mxu0
      %v2381 = vadd.f32 %v2220, %v2380
      %v2382 = vpop.f32.mrb[0].mxu0
      %2383 = vmatprep.mubr.bf16.mxu0 0
      %2384 = vmatmul.mubr.bf16.gmra.mrb[0].mxu0 %v1901
      %v2385 = vpop.f32.mrb[0].mxu0
      %v2386 = vadd.f32 %v2225, %v2385
      %v2387 = vpop.f32.mrb[0].mxu0
      %v2388 = vpop.f32.mrb[0].mxu0
      %v2389 = vadd.f32 %v2228, %v2388
      %v2390 = vpop.f32.mrb[0].mxu0
      %2391 = vmatprep.mubr.bf16.mxu0 0
      %2392 = vmatmul.mubr.bf16.gmra.mrb[0].mxu0 %v1904
      %v2393 = vpop.f32.mrb[0].mxu0
      %v2394 = vadd.f32 %v2233, %v2393
      %v2395 = vpop.f32.mrb[0].mxu0
      %v2396 = vpop.f32.mrb[0].mxu0
      %v2397 = vadd.f32 %v2236, %v2396
      %v2398 = vpop.f32.mrb[0].mxu0
      %2399 = vmatprep.mubr.bf16.mxu0 0
      %2400 = vmatmul.mubr.bf16.gmra.mrb[0].mxu0 %v1907
      %v2401 = vpop.f32.mrb[0].mxu0
      %v2402 = vadd.f32 %v2241, %v2401
      %v2403 = vpop.f32.mrb[0].mxu0
      %v2404 = vpop.f32.mrb[0].mxu0
      %v2405 = vadd.f32 %v2244, %v2404
      %v2406 = vpop.f32.mrb[0].mxu0
      %2407 = vmatprep.mubr.bf16.mxu0 0
      %2408 = vmatmul.mubr.bf16.gmra.mrb[0].mxu0 %v1910
      %v2409 = vpop.f32.mrb[0].mxu0
      %v2410 = vadd.f32 %v2249, %v2409
      %v2411 = vpop.f32.mrb[0].mxu0
      %v2412 = vpop.f32.mrb[0].mxu0
      %v2413 = vadd.f32 %v2252, %v2412
      %v2414 = vpop.f32.mrb[0].mxu0
      %2415 = vmatprep.mubr.bf16.mxu0 0
      %2416 = vmatmul.mubr.bf16.gmra.mrb[0].mxu0 %v1913
      %v2417 = vpop.f32.mrb[0].mxu0
      %v2418 = vadd.f32 %v2257, %v2417
      %v2419 = vpop.f32.mrb[0].mxu0
      %v2420 = vpop.f32.mrb[0].mxu0
      %v2421 = vadd.f32 %v2260, %v2420
      %v2422 = vpop.f32.mrb[0].mxu0
      %2423 = vmatprep.mubr.bf16.mxu0 0
      %2424 = vmatmul.mubr.bf16.gmra.mrb[0].mxu0 %v1916
      %v2425 = vpop.f32.mrb[0].mxu0
      %v2426 = vadd.f32 %v2265, %v2425
      %v2427 = vpop.f32.mrb[0].mxu0
      %v2428 = vpop.f32.mrb[0].mxu0
      %v2429 = vadd.f32 %v2268, %v2428
      %v2430 = vpop.f32.mrb[0].mxu0
      %2431 = vdwg.mxu0
      %v2432 = vadd.f32 %v1646, %v2306
      %v2433 = vadd.f32 %v1649, %v2309
      %v2434 = vadd.f32 %v1654, %v2314
      %v2435 = vadd.f32 %v1657, %v2317
      %v2436 = vadd.f32 %v1662, %v2322
      %v2437 = vadd.f32 %v1665, %v2325
      %v2438 = vadd.f32 %v1670, %v2330
      %v2439 = vadd.f32 %v1673, %v2333
      %v2440 = vadd.f32 %v1678, %v2338
      %v2441 = vadd.f32 %v1681, %v2341
      %v2442 = vadd.f32 %v1686, %v2346
      %v2443 = vadd.f32 %v1689, %v2349
      %v2444 = vadd.f32 %v1694, %v2354
      %v2445 = vadd.f32 %v1697, %v2357
      %v2446 = vadd.f32 %v1702, %v2362
      %v2447 = vadd.f32 %v1705, %v2365
      %v2448 = vadd.f32 %v1710, %v2370
      %v2449 = vadd.f32 %v1713, %v2373
      %v2450 = vadd.f32 %v1718, %v2378
      %v2451 = vadd.f32 %v1721, %v2381
      %v2452 = vadd.f32 %v1726, %v2386
      %v2453 = vadd.f32 %v1729, %v2389
      %v2454 = vadd.f32 %v1734, %v2394
      %v2455 = vadd.f32 %v1737, %v2397
      %v2456 = vadd.f32 %v1742, %v2402
      %v2457 = vadd.f32 %v1745, %v2405
      %v2458 = vadd.f32 %v1750, %v2410
      %v2459 = vadd.f32 %v1753, %v2413
      %v2460 = vadd.f32 %v1758, %v2418
      %v2461 = vadd.f32 %v1761, %v2421
      %v2462 = vadd.f32 %v1766, %v2426
      %v2463 = vadd.f32 %v1769, %v2429
      %2464 = vst [vmem:[%s231] sm:$0xff] %v2432
      %2465 = vst [vmem:[%s231 + $0x8] sm:$0xff] %v2433
      %2466 = vst [vmem:[%s231 + $0x10] sm:$0xff] %v2434
      %2467 = vst [vmem:[%s231 + $0x18] sm:$0xff] %v2435
      %2468 = vst [vmem:[%s231 + $0x20] sm:$0xff] %v2436
      %2469 = vst [vmem:[%s231 + $0x28] sm:$0xff] %v2437
      %2470 = vst [vmem:[%s231 + $0x30] sm:$0xff] %v2438
      %2471 = vst [vmem:[%s231 + $0x38] sm:$0xff] %v2439
      %2472 = vst [vmem:[%s231 + $0x40] sm:$0xff] %v2440
      %2473 = vst [vmem:[%s231 + $0x48] sm:$0xff] %v2441
      %2474 = vst [vmem:[%s231 + $0x50] sm:$0xff] %v2442
      %2475 = vst [vmem:[%s231 + $0x58] sm:$0xff] %v2443
      %2476 = vst [vmem:[%s231 + $0x60] sm:$0xff] %v2444
      %2477 = vst [vmem:[%s231 + $0x68] sm:$0xff] %v2445
      %2478 = vst [vmem:[%s231 + $0x70] sm:$0xff] %v2446
      %2479 = vst [vmem:[%s231 + $0x78] sm:$0xff] %v2447
      %2480 = vst [vmem:[%s231 + $0x80] sm:$0xff] %v2448
      %2481 = vst [vmem:[%s231 + $0x88] sm:$0xff] %v2449
      %2482 = vst [vmem:[%s231 + $0x90] sm:$0xff] %v2450
      %2483 = vst [vmem:[%s231 + $0x98] sm:$0xff] %v2451
      %2484 = vst [vmem:[%s231 + $0xa0] sm:$0xff] %v2452
      %2485 = vst [vmem:[%s231 + $0xa8] sm:$0xff] %v2453
      %2486 = vst [vmem:[%s231 + $0xb0] sm:$0xff] %v2454
      %2487 = vst [vmem:[%s231 + $0xb8] sm:$0xff] %v2455
      %2488 = vst [vmem:[%s231 + $0xc0] sm:$0xff] %v2456
      %2489 = vst [vmem:[%s231 + $0xc8] sm:$0xff] %v2457
      %2490 = vst [vmem:[%s231 + $0xd0] sm:$0xff] %v2458
      %2491 = vst [vmem:[%s231 + $0xd8] sm:$0xff] %v2459
      %2492 = vst [vmem:[%s231 + $0xe0] sm:$0xff] %v2460
      %2493 = vst [vmem:[%s231 + $0xe8] sm:$0xff] %v2461
      %2494 = vst [vmem:[%s231 + $0xf0] sm:$0xff] %v2462
      %2495 = vst [vmem:[%s231 + $0xf8] sm:$0xff] %v2463
      %v2496 = vadd.f32 %v2432, %v2433
      %v2497 = vadd.f32 %v2496, %v2434
      %v2498 = vadd.f32 %v2497, %v2435
      %v2499 = vadd.f32 %v2498, %v2436
      %v2500 = vadd.f32 %v2499, %v2437
      %v2501 = vadd.f32 %v2500, %v2438
      %v2502 = vadd.f32 %v2501, %v2439
      %v2503 = vadd.f32 %v2502, %v2440
      %v2504 = vadd.f32 %v2503, %v2441
      %v2505 = vadd.f32 %v2504, %v2442
      %v2506 = vadd.f32 %v2505, %v2443
      %v2507 = vadd.f32 %v2506, %v2444
      %v2508 = vadd.f32 %v2507, %v2445
      %v2509 = vadd.f32 %v2508, %v2446
      %v2510 = vadd.f32 %v2509, %v2447
      %v2511 = vadd.f32 %v2510, %v2448
      %v2512 = vadd.f32 %v2511, %v2449
      %v2513 = vadd.f32 %v2512, %v2450
      %v2514 = vadd.f32 %v2513, %v2451
      %v2515 = vadd.f32 %v2514, %v2452
      %v2516 = vadd.f32 %v2515, %v2453
      %v2517 = vadd.f32 %v2516, %v2454
      %v2518 = vadd.f32 %v2517, %v2455
      %v2519 = vadd.f32 %v2518, %v2456
      %v2520 = vadd.f32 %v2519, %v2457
      %v2521 = vadd.f32 %v2520, %v2458
      %v2522 = vadd.f32 %v2521, %v2459
      %v2523 = vadd.f32 %v2522, %v2460
      %v2524 = vadd.f32 %v2523, %v2461
      %v2525 = vadd.f32 %v2524, %v2462
      %v2526 = vadd.f32 %v2525, %v2463
      %v2527 = vrot.slane %v2526, 4
      %v2528 = vadd.f32 %v2526, %v2527
      %v2529 = vrot.slane %v2528, 2
      %v2530 = vadd.f32 %v2528, %v2529
      %v2531 = vrot.slane %v2530, 1
      %v2532 = vadd.f32 %v2530, %v2531
      %2533 = vst [vmem:[%s235] sm:$0x1] %v2532
      %v2534 = vmul.f32 %v2432, %v2432
      %v2535 = vmul.f32 %v2433, %v2433
      %v2536 = vmul.f32 %v2434, %v2434
      %v2537 = vmul.f32 %v2435, %v2435
      %v2538 = vmul.f32 %v2436, %v2436
      %v2539 = vmul.f32 %v2437, %v2437
      %v2540 = vmul.f32 %v2438, %v2438
      %v2541 = vmul.f32 %v2439, %v2439
      %v2542 = vmul.f32 %v2440, %v2440
      %v2543 = vmul.f32 %v2441, %v2441
      %v2544 = vmul.f32 %v2442, %v2442
      %v2545 = vmul.f32 %v2443, %v2443
      %v2546 = vmul.f32 %v2444, %v2444
      %v2547 = vmul.f32 %v2445, %v2445
      %v2548 = vmul.f32 %v2446, %v2446
      %v2549 = vmul.f32 %v2447, %v2447
      %v2550 = vmul.f32 %v2448, %v2448
      %v2551 = vmul.f32 %v2449, %v2449
      %v2552 = vmul.f32 %v2450, %v2450
      %v2553 = vmul.f32 %v2451, %v2451
      %v2554 = vmul.f32 %v2452, %v2452
      %v2555 = vmul.f32 %v2453, %v2453
      %v2556 = vmul.f32 %v2454, %v2454
      %v2557 = vmul.f32 %v2455, %v2455
      %v2558 = vmul.f32 %v2456, %v2456
      %v2559 = vmul.f32 %v2457, %v2457
      %v2560 = vmul.f32 %v2458, %v2458
      %v2561 = vmul.f32 %v2459, %v2459
      %v2562 = vmul.f32 %v2460, %v2460
      %v2563 = vmul.f32 %v2461, %v2461
      %v2564 = vmul.f32 %v2462, %v2462
      %v2565 = vmul.f32 %v2463, %v2463
      %v2566 = vadd.f32 %v2534, %v2535
      %v2567 = vadd.f32 %v2566, %v2536
      %v2568 = vadd.f32 %v2567, %v2537
      %v2569 = vadd.f32 %v2568, %v2538
      %v2570 = vadd.f32 %v2569, %v2539
      %v2571 = vadd.f32 %v2570, %v2540
      %v2572 = vadd.f32 %v2571, %v2541
      %v2573 = vadd.f32 %v2572, %v2542
      %v2574 = vadd.f32 %v2573, %v2543
      %v2575 = vadd.f32 %v2574, %v2544
      %v2576 = vadd.f32 %v2575, %v2545
      %v2577 = vadd.f32 %v2576, %v2546
      %v2578 = vadd.f32 %v2577, %v2547
      %v2579 = vadd.f32 %v2578, %v2548
      %v2580 = vadd.f32 %v2579, %v2549
      %v2581 = vadd.f32 %v2580, %v2550
      %v2582 = vadd.f32 %v2581, %v2551
      %v2583 = vadd.f32 %v2582, %v2552
      %v2584 = vadd.f32 %v2583, %v2553
      %v2585 = vadd.f32 %v2584, %v2554
      %v2586 = vadd.f32 %v2585, %v2555
      %v2587 = vadd.f32 %v2586, %v2556
      %v2588 = vadd.f32 %v2587, %v2557
      %v2589 = vadd.f32 %v2588, %v2558
      %v2590 = vadd.f32 %v2589, %v2559
      %v2591 = vadd.f32 %v2590, %v2560
      %v2592 = vadd.f32 %v2591, %v2561
      %v2593 = vadd.f32 %v2592, %v2562
      %v2594 = vadd.f32 %v2593, %v2563
      %v2595 = vadd.f32 %v2594, %v2564
      %v2596 = vadd.f32 %v2595, %v2565
      %v2597 = vrot.slane %v2596, 4
      %v2598 = vadd.f32 %v2596, %v2597
      %v2599 = vrot.slane %v2598, 2
      %v2600 = vadd.f32 %v2598, %v2599
      %v2601 = vrot.slane %v2600, 1
      %v2602 = vadd.f32 %v2600, %v2601
      %2603 = vst [vmem:[%s235 + $0x1] sm:$0x1] %v2602
      %p2604 = scmp.lt.s32.totalorder %s17, 1
      %s2605 = scalar_select %p2604, %s17, 1
      %s2606 = smul.addr %s2605, 32
      %s2607 = smul.addr %s2606, 8
      %s2608 = scalar_lea.vmem %s4, %s2607
      %p2609 = scmp.lt.s32.totalorder %s17, 1
      %s2610 = scalar_select %p2609, %s17, 1
      %s2611 = smul.addr %s2610, 2
      %s2612 = scalar_lea.vmem %s5, %s2611
      // Predicated region
      $region37: #{bottleneck_pallas.5} parent=35 // pred_check
        %p2613 = pneg %p124
      $region38: #{bottleneck_pallas.5} parent=35 // pred_check_branch
        %2615 = sbr.rel (%p2613) target = $region40
      $region39: #{bottleneck_pallas.5} parent=35 // pred_region
        _
      $region40: #{bottleneck_pallas.5} parent=35 // pred_fallthru
        _
      // Predicated region
      $region41: #{bottleneck_pallas.5} parent=35 // pred_check
        %p2616 = pneg %p150
      $region42: #{bottleneck_pallas.5} parent=35 // pred_check_branch
        %2618 = sbr.rel (%p2616) target = $region44
      $region43: #{bottleneck_pallas.5} parent=35 // pred_region
        _
      $region44: #{bottleneck_pallas.5} parent=35 // pred_fallthru
        _
    $region36: #{bottleneck_pallas.5} parent=5 // pred_fallthru
      _
    %p2619 = scmp.le.s32.totalorder 2, %s12
    // Predicated region
    $region45: #{bottleneck_pallas.5} parent=5 // pred_check
      %p2620 = pneg %p2619
    $region46: #{bottleneck_pallas.5} parent=5 // pred_check_branch
      %2622 = sbr.rel (%p2620) target = $region48
    $region47: #{bottleneck_pallas.5} parent=5 // pred_region
      %s2623 = ssub.s32 %s12, 2
      // Predicated region
      $region49: #{bottleneck_pallas.5} parent=47 // pred_check
        %p2624 = pneg %p130
      $region50: #{bottleneck_pallas.5} parent=47 // pred_check_branch
        %2626 = sbr.rel (%p2624) target = $region52
      $region51: #{bottleneck_pallas.5} parent=47 // pred_region
        %p2627 = scmp.lt.s32.totalorder %s18, 1
        %s2628 = scalar_select %p2627, %s18, 1
        %s2629 = smul.addr %s2628, 32
        %s2630 = smul.addr %s2629, 8
        %s2631 = scalar_lea.vmem %s4, %s2630
      $region52: #{bottleneck_pallas.5} parent=47 // pred_fallthru
        _
      // Predicated region
      $region53: #{bottleneck_pallas.5} parent=47 // pred_check
        %p2632 = pneg %p156
      $region54: #{bottleneck_pallas.5} parent=47 // pred_check_branch
        %2634 = sbr.rel (%p2632) target = $region56
      $region55: #{bottleneck_pallas.5} parent=47 // pred_region
        %p2635 = scmp.lt.s32.totalorder %s18, 1
        %s2636 = scalar_select %p2635, %s18, 1
        %s2637 = smul.addr %s2636, 2
        %s2638 = scalar_lea.vmem %s5, %s2637
      $region56: #{bottleneck_pallas.5} parent=47 // pred_fallthru
        _
    $region48: #{bottleneck_pallas.5} parent=5 // pred_fallthru
      _
  $region6: #{bottleneck_pallas.5} parent=0 // loop_footer
    %s16 = sadd.s32 1, %s12
  $region7: #{bottleneck_pallas.5} parent=0 // loop_footer_branch
    %11 = sbr.rel target = $region3
  $region8: #{bottleneck_pallas.5} parent=0 // loop_exit
    _

</llo_original>
